<compile_context>
chip_gen: v6e
topology: v6e:2x2x1
jax: 0.10.0
libtpu: 0.0.40
codegen_flags: <defaults>
</compile_context>

<pallas_src>
import jax
import jax.numpy as jnp
from jax.experimental import pallas as pl
from jax.experimental.pallas import tpu as pltpu

ODOM_DIM = 6
LASER_DIM = 25
INPUT_DIM = ODOM_DIM + LASER_DIM      # 31 == nn.LSTM(input_size=31)
INPUT_PAD = 32                        # zero-padded feature count
HIDDEN = 128                          # lstm_hidden_size
CONTROL_DIM = 2                       # control_dim


def pose_to_control_kernel(x_ref,
                           w0_ref, b0_ref,
                           w1_ref, b1_ref,
                           wf1_ref, bf1_ref,
                           wf2_ref, bf2_ref,
                           wf3_ref, bf3_ref,
                           wf4_ref, bf4_ref,
                           out_ref):
    f32 = jnp.float32
    bf16 = jnp.bfloat16
    H = HIDDEN

    def mm(w_ref, a_bf16, b_ref):
        # bf16 x bf16 on the MXU, f32 accumulation, f32 bias (lane broadcast).
        return jnp.dot(w_ref[...], a_bf16, preferred_element_type=f32) + b_ref[...]

    def gates_to_h(g):
        # Gate rows are i|g|o (f-gate rows dropped: c0 == 0 so f*c0 == 0).
        i = jax.nn.sigmoid(g[0 * H:1 * H, :])
        c = jnp.tanh(g[1 * H:2 * H, :])
        o = jax.nn.sigmoid(g[2 * H:3 * H, :])
        return o * jnp.tanh(i * c)

    x = x_ref[...]                                            # (32, tb) bf16
    h = gates_to_h(mm(w0_ref, x, b0_ref)).astype(bf16)        # LSTM layer 0
    h = gates_to_h(mm(w1_ref, h, b1_ref)).astype(bf16)        # LSTM layer 1
    a = jnp.maximum(mm(wf1_ref, h, bf1_ref), 0.0).astype(bf16)   # 128 -> 256
    a = jnp.maximum(mm(wf2_ref, a, bf2_ref), 0.0).astype(bf16)   # 256 -> 256
    a = jnp.maximum(mm(wf3_ref, a, bf3_ref), 0.0).astype(bf16)   # 256 -> 128
    out_ref[...] = mm(wf4_ref, a, bf4_ref)                    # (2, tb) f32


def init_params(key, weight_dtype=jnp.bfloat16):
    """PyTorch-style U(-1/sqrt(fan), 1/sqrt(fan)) init.

    LSTM weights keep only the i|g|o gate rows ([3H, in]); layer 0's input dim
    is zero-padded 31 -> 32; biases are b_ih + b_hh.  Weights stored bf16
    (PyTorch (out, in) orientation, feature-major kernel); biases f32.
    """
    ks = jax.random.split(key, 16)

    def u(k, shape, bound):
        return jax.random.uniform(k, shape, jnp.float32, -bound, bound)

    kH = 1.0 / float(HIDDEN) ** 0.5
    H3 = 3 * HIDDEN
    p = {}
    # LSTM layer 0: weight_ih_l0 (4H,31) -> i|g|o rows, padded input column 31 zeroed.
    w0 = u(ks[0], (H3, INPUT_PAD), kH)
    w0 = w0.at[:, INPUT_DIM:].set(0.0)
    p["w0"] = w0.astype(weight_dtype)
    p["b0"] = u(ks[1], (H3, 1), kH) + u(ks[2], (H3, 1), kH)
    # LSTM layer 1: weight_ih_l1 (4H,H) -> i|g|o rows.
    p["w1"] = u(ks[3], (H3, HIDDEN), kH).astype(weight_dtype)
    p["b1"] = u(ks[4], (H3, 1), kH) + u(ks[5], (H3, 1), kH)
    # fc head, weights in (out, in) orientation.
    idx = 6
    for name, fan_in, fan_out in (("1", HIDDEN, 256), ("2", 256, 256),
                                  ("3", 256, 128), ("4", 128, CONTROL_DIM)):
        bnd = 1.0 / float(fan_in) ** 0.5
        p["wf" + name] = u(ks[idx], (fan_out, fan_in), bnd).astype(weight_dtype)
        p["bf" + name] = u(ks[idx + 1], (fan_out, 1), bnd)
        idx += 2
    return p


def pose_to_control(odom_input, laser_scan, params, *, batch_tile=1024,
                    core_parallel=False, vmem_limit_bytes=32 * 1024 * 1024):
    B = odom_input.shape[0]
    # The kernel elides W_hh@h0 and f*c0, valid only for a single time step
    # with zero initial state -> only 2-D (batch, features) inputs are allowed.
    assert odom_input.ndim == 2 and laser_scan.ndim == 2
    assert odom_input.shape == (B, ODOM_DIM) and laser_scan.shape == (B, LASER_DIM)

    # Merge odom+laser, zero-pad 31 -> 32 features, feature-major layout
    # (batch on the 128-lane axis -> lane-dense input/output tiles), bf16 operands.
    x = jnp.concatenate(
        [odom_input.astype(jnp.float32), laser_scan.astype(jnp.float32),
         jnp.zeros((B, 1), jnp.float32)], axis=1)
    x = x.T.astype(jnp.bfloat16)                              # (32, B)

    if B > batch_tile:
        tb = batch_tile
        Bp = int(pl.cdiv(B, tb)) * tb
        if Bp != B:
            x = jnp.pad(x, ((0, 0), (0, Bp - B)))             # zero pad lanes
    else:
        tb, Bp = B, B
    grid = (Bp // tb,)

    weights = (params["w0"], params["b0"], params["w1"], params["b1"],
               params["wf1"], params["bf1"], params["wf2"], params["bf2"],
               params["wf3"], params["bf3"], params["wf4"], params["bf4"])

    def resident(arr):
        # Constant block index -> stays VMEM-resident across grid steps.
        # (pipeline_mode=pl.Buffered(1) would also drop the double buffer, but
        #  the ~0.4 MB saved is not worth the extra lowering risk here.)
        return pl.BlockSpec(arr.shape, lambda i: (0, 0))

    in_specs = ([pl.BlockSpec((INPUT_PAD, tb), lambda i: (0, i))]
                + [resident(w) for w in weights])
    out_spec = pl.BlockSpec((CONTROL_DIM, tb), lambda i: (0, i))

    flops_per_row = 2 * (INPUT_PAD * 3 * HIDDEN + HIDDEN * 3 * HIDDEN
                         + HIDDEN * 256 + 256 * 256 + 256 * 128
                         + 128 * CONTROL_DIM)
    weight_bytes = sum(int(w.size) * w.dtype.itemsize for w in weights)
    cost = pl.CostEstimate(
        flops=flops_per_row * Bp,
        transcendentals=8 * HIDDEN * Bp,   # 2 layers x (2 sigmoid + 2 tanh) x H
        bytes_accessed=weight_bytes + Bp * (INPUT_PAD * 2 + CONTROL_DIM * 4))

    # On v7x, CORE_PARALLEL shards the batch grid axis across both TensorCores;
    # the plain "parallel" string is the safe default on 1-TC v5e/v6e.
    sem = (pltpu.CORE_PARALLEL,) if core_parallel else ("parallel",)

    out_t = pl.pallas_call(
        pose_to_control_kernel,
        out_shape=jax.ShapeDtypeStruct((CONTROL_DIM, Bp), jnp.float32),
        grid=grid,
        in_specs=in_specs,
        out_specs=out_spec,
        compiler_params=pltpu.CompilerParams(
            dimension_semantics=sem,
            vmem_limit_bytes=vmem_limit_bytes),
        cost_estimate=cost,
    )(x, *weights)

    return out_t[:, :B].T                                     # (B, control_dim)


def pose_to_control_ref(odom_input, laser_scan, params):
    """Pure-JAX reference mirroring the kernel's precision (bf16 matmul operands)."""
    f32, bf16 = jnp.float32, jnp.bfloat16
    H = HIDDEN
    B = odom_input.shape[0]
    x = jnp.concatenate([odom_input.astype(f32), laser_scan.astype(f32),
                         jnp.zeros((B, 1), f32)], axis=1)
    a = x.T.astype(bf16)

    def mm(w, act, b):
        return jnp.dot(w.astype(f32), act.astype(bf16).astype(f32),
                       preferred_element_type=f32) + b

    def gates_to_h(g):
        i = jax.nn.sigmoid(g[:H, :])
        c = jnp.tanh(g[H:2 * H, :])
        o = jax.nn.sigmoid(g[2 * H:, :])
        return o * jnp.tanh(i * c)

    h = gates_to_h(mm(params["w0"], a, params["b0"]))
    h = gates_to_h(mm(params["w1"], h, params["b1"]))
    a = jax.nn.relu(mm(params["wf1"], h, params["bf1"]))
    a = jax.nn.relu(mm(params["wf2"], a, params["bf2"]))
    a = jax.nn.relu(mm(params["wf3"], a, params["bf3"]))
    return mm(params["wf4"], a, params["bf4"]).T


if __name__ == "__main__":
    key = jax.random.PRNGKey(0)
    k_odom, k_laser, k_params = jax.random.split(key, 3)
    params = init_params(k_params)

    # Small demo batch matching the module's (batch, features) inputs.
    B = 2
    odom = jax.random.normal(k_odom, (B, ODOM_DIM), jnp.float32)
    laser = jax.random.normal(k_laser, (B, LASER_DIM), jnp.float32)
    out = jax.block_until_ready(pose_to_control(odom, laser, params))
    assert out.shape == (B, CONTROL_DIM)
    ref = jax.block_until_ready(pose_to_control_ref(odom, laser, params))
    assert jnp.allclose(out, ref, atol=2e-3, rtol=2e-2), (out, ref)

    # Exercise the multi-step batch grid + pad-to-tile path
    # (1536 > batch_tile=1024 and not a multiple -> padded to 2048, 2 steps).
    B2 = 1536
    odom2 = jax.random.normal(k_odom, (B2, ODOM_DIM), jnp.float32)
    laser2 = jax.random.normal(k_laser, (B2, LASER_DIM), jnp.float32)
    out2 = jax.block_until_ready(pose_to_control(odom2, laser2, params))
    ref2 = jax.block_until_ready(pose_to_control_ref(odom2, laser2, params))
    assert out2.shape == (B2, CONTROL_DIM)
    assert jnp.allclose(out2, ref2, atol=2e-3, rtol=2e-2)

    print("KERNEL_OK")
</pallas_src>

<mosaic_0001>
module attributes {stable_mosaic.version = 11 : i64} {
  func.func @pose_to_control_kernel(%arg0: i32, %arg1: memref<32x2xbf16, #tpu.memory_space<vmem>>, %arg2: memref<384x32xbf16, #tpu.memory_space<vmem>>, %arg3: memref<384x1xf32, #tpu.memory_space<vmem>>, %arg4: memref<384x128xbf16, #tpu.memory_space<vmem>>, %arg5: memref<384x1xf32, #tpu.memory_space<vmem>>, %arg6: memref<256x128xbf16, #tpu.memory_space<vmem>>, %arg7: memref<256x1xf32, #tpu.memory_space<vmem>>, %arg8: memref<256x256xbf16, #tpu.memory_space<vmem>>, %arg9: memref<256x1xf32, #tpu.memory_space<vmem>>, %arg10: memref<128x256xbf16, #tpu.memory_space<vmem>>, %arg11: memref<128x1xf32, #tpu.memory_space<vmem>>, %arg12: memref<2x128xbf16, #tpu.memory_space<vmem>>, %arg13: memref<2x1xf32, #tpu.memory_space<vmem>>, %arg14: memref<2x2xf32, #tpu.memory_space<vmem>>) attributes {dimension_semantics = [#tpu.dimension_semantics<parallel>], iteration_bounds = array<i64: 1>, scalar_prefetch = 0 : i64, scratch_operands = 0 : i64, tpu.core_type = #tpu.core_type<tc>, window_params = [{transform_indices = @transform_0, window_bounds = array<i64: 32, 2>}, {pipeline_mode = #tpu.pipeline_mode<synchronous>, transform_indices = @transform_1, window_bounds = array<i64: 384, 32>}, {pipeline_mode = #tpu.pipeline_mode<synchronous>, transform_indices = @transform_2, window_bounds = array<i64: 384, 1>}, {pipeline_mode = #tpu.pipeline_mode<synchronous>, transform_indices = @transform_3, window_bounds = array<i64: 384, 128>}, {pipeline_mode = #tpu.pipeline_mode<synchronous>, transform_indices = @transform_4, window_bounds = array<i64: 384, 1>}, {pipeline_mode = #tpu.pipeline_mode<synchronous>, transform_indices = @transform_5, window_bounds = array<i64: 256, 128>}, {pipeline_mode = #tpu.pipeline_mode<synchronous>, transform_indices = @transform_6, window_bounds = array<i64: 256, 1>}, {pipeline_mode = #tpu.pipeline_mode<synchronous>, transform_indices = @transform_7, window_bounds = array<i64: 256, 256>}, {pipeline_mode = #tpu.pipeline_mode<synchronous>, transform_indices = @transform_8, window_bounds = array<i64: 256, 1>}, {pipeline_mode = #tpu.pipeline_mode<synchronous>, transform_indices = @transform_9, window_bounds = array<i64: 128, 256>}, {pipeline_mode = #tpu.pipeline_mode<synchronous>, transform_indices = @transform_10, window_bounds = array<i64: 128, 1>}, {pipeline_mode = #tpu.pipeline_mode<synchronous>, transform_indices = @transform_11, window_bounds = array<i64: 2, 128>}, {pipeline_mode = #tpu.pipeline_mode<synchronous>, transform_indices = @transform_12, window_bounds = array<i64: 2, 1>}, {transform_indices = @transform_13, window_bounds = array<i64: 2, 2>}]} {
    %c0 = arith.constant 0 : index
    %c0_0 = arith.constant 0 : index
    %0 = vector.load %arg1[%c0, %c0_0] : memref<32x2xbf16, #tpu.memory_space<vmem>>, vector<32x2xbf16>
    %c0_1 = arith.constant 0 : index
    %c0_2 = arith.constant 0 : index
    %1 = vector.load %arg2[%c0_1, %c0_2] : memref<384x32xbf16, #tpu.memory_space<vmem>>, vector<384x32xbf16>
    %cst = arith.constant dense<0.000000e+00> : vector<384x2xf32>
    %2 = tpu.matmul %1, %0, %cst {dimension_numbers = #tpu.dot_dimension_numbers<[1], [0], [0], [1], [0, 0, 1, 1], [], []>} : vector<384x32xbf16>, vector<32x2xbf16>, vector<384x2xf32> -> vector<384x2xf32>
    %c0_3 = arith.constant 0 : index
    %c0_4 = arith.constant 0 : index
    %3 = vector.load %arg3[%c0_3, %c0_4] : memref<384x1xf32, #tpu.memory_space<vmem>>, vector<384x1xf32>
    %4 = vector.broadcast %3 : vector<384x1xf32> to vector<384x2xf32>
    %5 = arith.addf %2, %4 : vector<384x2xf32>
    %6 = vector.extract_strided_slice %5 {offsets = [0, 0], sizes = [128, 2], strides = [1, 1]} : vector<384x2xf32> to vector<128x2xf32>
    %7 = arith.negf %6 : vector<128x2xf32>
    %8 = math.exp %7 : vector<128x2xf32>
    %cst_5 = arith.constant 1.000000e+00 : f32
    %9 = vector.broadcast %cst_5 : f32 to vector<128x2xf32>
    %10 = arith.addf %9, %8 : vector<128x2xf32>
    %11 = arith.divf %9, %10 : vector<128x2xf32>
    %12 = vector.extract_strided_slice %5 {offsets = [128, 0], sizes = [128, 2], strides = [1, 1]} : vector<384x2xf32> to vector<128x2xf32>
    %13 = math.tanh %12 : vector<128x2xf32>
    %14 = vector.extract_strided_slice %5 {offsets = [256, 0], sizes = [128, 2], strides = [1, 1]} : vector<384x2xf32> to vector<128x2xf32>
    %15 = arith.negf %14 : vector<128x2xf32>
    %16 = math.exp %15 : vector<128x2xf32>
    %cst_6 = arith.constant 1.000000e+00 : f32
    %17 = vector.broadcast %cst_6 : f32 to vector<128x2xf32>
    %18 = arith.addf %17, %16 : vector<128x2xf32>
    %19 = arith.divf %17, %18 : vector<128x2xf32>
    %20 = arith.mulf %11, %13 : vector<128x2xf32>
    %21 = math.tanh %20 : vector<128x2xf32>
    %22 = arith.mulf %19, %21 : vector<128x2xf32>
    %23 = arith.truncf %22 : vector<128x2xf32> to vector<128x2xbf16>
    %c0_7 = arith.constant 0 : index
    %c0_8 = arith.constant 0 : index
    %24 = vector.load %arg4[%c0_7, %c0_8] : memref<384x128xbf16, #tpu.memory_space<vmem>>, vector<384x128xbf16>
    %cst_9 = arith.constant dense<0.000000e+00> : vector<384x2xf32>
    %25 = tpu.matmul %24, %23, %cst_9 {dimension_numbers = #tpu.dot_dimension_numbers<[1], [0], [0], [1], [0, 0, 1, 1], [], []>} : vector<384x128xbf16>, vector<128x2xbf16>, vector<384x2xf32> -> vector<384x2xf32>
    %c0_10 = arith.constant 0 : index
    %c0_11 = arith.constant 0 : index
    %26 = vector.load %arg5[%c0_10, %c0_11] : memref<384x1xf32, #tpu.memory_space<vmem>>, vector<384x1xf32>
    %27 = vector.broadcast %26 : vector<384x1xf32> to vector<384x2xf32>
    %28 = arith.addf %25, %27 : vector<384x2xf32>
    %29 = vector.extract_strided_slice %28 {offsets = [0, 0], sizes = [128, 2], strides = [1, 1]} : vector<384x2xf32> to vector<128x2xf32>
    %30 = arith.negf %29 : vector<128x2xf32>
    %31 = math.exp %30 : vector<128x2xf32>
    %cst_12 = arith.constant 1.000000e+00 : f32
    %32 = vector.broadcast %cst_12 : f32 to vector<128x2xf32>
    %33 = arith.addf %32, %31 : vector<128x2xf32>
    %34 = arith.divf %32, %33 : vector<128x2xf32>
    %35 = vector.extract_strided_slice %28 {offsets = [128, 0], sizes = [128, 2], strides = [1, 1]} : vector<384x2xf32> to vector<128x2xf32>
    %36 = math.tanh %35 : vector<128x2xf32>
    %37 = vector.extract_strided_slice %28 {offsets = [256, 0], sizes = [128, 2], strides = [1, 1]} : vector<384x2xf32> to vector<128x2xf32>
    %38 = arith.negf %37 : vector<128x2xf32>
    %39 = math.exp %38 : vector<128x2xf32>
    %cst_13 = arith.constant 1.000000e+00 : f32
    %40 = vector.broadcast %cst_13 : f32 to vector<128x2xf32>
    %41 = arith.addf %40, %39 : vector<128x2xf32>
    %42 = arith.divf %40, %41 : vector<128x2xf32>
    %43 = arith.mulf %34, %36 : vector<128x2xf32>
    %44 = math.tanh %43 : vector<128x2xf32>
    %45 = arith.mulf %42, %44 : vector<128x2xf32>
    %46 = arith.truncf %45 : vector<128x2xf32> to vector<128x2xbf16>
    %c0_14 = arith.constant 0 : index
    %c0_15 = arith.constant 0 : index
    %47 = vector.load %arg6[%c0_14, %c0_15] : memref<256x128xbf16, #tpu.memory_space<vmem>>, vector<256x128xbf16>
    %cst_16 = arith.constant dense<0.000000e+00> : vector<256x2xf32>
    %48 = tpu.matmul %47, %46, %cst_16 {dimension_numbers = #tpu.dot_dimension_numbers<[1], [0], [0], [1], [0, 0, 1, 1], [], []>} : vector<256x128xbf16>, vector<128x2xbf16>, vector<256x2xf32> -> vector<256x2xf32>
    %c0_17 = arith.constant 0 : index
    %c0_18 = arith.constant 0 : index
    %49 = vector.load %arg7[%c0_17, %c0_18] : memref<256x1xf32, #tpu.memory_space<vmem>>, vector<256x1xf32>
    %50 = vector.broadcast %49 : vector<256x1xf32> to vector<256x2xf32>
    %51 = arith.addf %48, %50 : vector<256x2xf32>
    %cst_19 = arith.constant 0.000000e+00 : f32
    %52 = vector.broadcast %cst_19 : f32 to vector<256x2xf32>
    %53 = arith.maximumf %51, %52 : vector<256x2xf32>
    %54 = arith.truncf %53 : vector<256x2xf32> to vector<256x2xbf16>
    %c0_20 = arith.constant 0 : index
    %c0_21 = arith.constant 0 : index
    %55 = vector.load %arg8[%c0_20, %c0_21] : memref<256x256xbf16, #tpu.memory_space<vmem>>, vector<256x256xbf16>
    %cst_22 = arith.constant dense<0.000000e+00> : vector<256x2xf32>
    %56 = tpu.matmul %55, %54, %cst_22 {dimension_numbers = #tpu.dot_dimension_numbers<[1], [0], [0], [1], [0, 0, 1, 1], [], []>} : vector<256x256xbf16>, vector<256x2xbf16>, vector<256x2xf32> -> vector<256x2xf32>
    %c0_23 = arith.constant 0 : index
    %c0_24 = arith.constant 0 : index
    %57 = vector.load %arg9[%c0_23, %c0_24] : memref<256x1xf32, #tpu.memory_space<vmem>>, vector<256x1xf32>
    %58 = vector.broadcast %57 : vector<256x1xf32> to vector<256x2xf32>
    %59 = arith.addf %56, %58 : vector<256x2xf32>
    %cst_25 = arith.constant 0.000000e+00 : f32
    %60 = vector.broadcast %cst_25 : f32 to vector<256x2xf32>
    %61 = arith.maximumf %59, %60 : vector<256x2xf32>
    %62 = arith.truncf %61 : vector<256x2xf32> to vector<256x2xbf16>
    %c0_26 = arith.constant 0 : index
    %c0_27 = arith.constant 0 : index
    %63 = vector.load %arg10[%c0_26, %c0_27] : memref<128x256xbf16, #tpu.memory_space<vmem>>, vector<128x256xbf16>
    %cst_28 = arith.constant dense<0.000000e+00> : vector<128x2xf32>
    %64 = tpu.matmul %63, %62, %cst_28 {dimension_numbers = #tpu.dot_dimension_numbers<[1], [0], [0], [1], [0, 0, 1, 1], [], []>} : vector<128x256xbf16>, vector<256x2xbf16>, vector<128x2xf32> -> vector<128x2xf32>
    %c0_29 = arith.constant 0 : index
    %c0_30 = arith.constant 0 : index
    %65 = vector.load %arg11[%c0_29, %c0_30] : memref<128x1xf32, #tpu.memory_space<vmem>>, vector<128x1xf32>
    %66 = vector.broadcast %65 : vector<128x1xf32> to vector<128x2xf32>
    %67 = arith.addf %64, %66 : vector<128x2xf32>
    %cst_31 = arith.constant 0.000000e+00 : f32
    %68 = vector.broadcast %cst_31 : f32 to vector<128x2xf32>
    %69 = arith.maximumf %67, %68 : vector<128x2xf32>
    %70 = arith.truncf %69 : vector<128x2xf32> to vector<128x2xbf16>
    %c0_32 = arith.constant 0 : index
    %c0_33 = arith.constant 0 : index
    %71 = vector.load %arg12[%c0_32, %c0_33] : memref<2x128xbf16, #tpu.memory_space<vmem>>, vector<2x128xbf16>
    %cst_34 = arith.constant dense<0.000000e+00> : vector<2x2xf32>
    %72 = tpu.matmul %71, %70, %cst_34 {dimension_numbers = #tpu.dot_dimension_numbers<[1], [0], [0], [1], [0, 0, 1, 1], [], []>} : vector<2x128xbf16>, vector<128x2xbf16>, vector<2x2xf32> -> vector<2x2xf32>
    %c0_35 = arith.constant 0 : index
    %c0_36 = arith.constant 0 : index
    %73 = vector.load %arg13[%c0_35, %c0_36] : memref<2x1xf32, #tpu.memory_space<vmem>>, vector<2x1xf32>
    %74 = vector.broadcast %73 : vector<2x1xf32> to vector<2x2xf32>
    %75 = arith.addf %72, %74 : vector<2x2xf32>
    %c0_37 = arith.constant 0 : index
    %c0_38 = arith.constant 0 : index
    %76 = vector.load %arg14[%c0_37, %c0_38] : memref<2x2xf32, #tpu.memory_space<vmem>>, vector<2x2xf32>
    tpu.vector_store %arg14[%c0_37, %c0_38], %75 {strides = array<i32>} : memref<2x2xf32, #tpu.memory_space<vmem>>, vector<2x2xf32>,
    return
  }
  func.func @transform_0(%arg0: i32) -> (i32, i32) {
    %c0_i32 = arith.constant 0 : i32
    %c0_i32_0 = arith.constant 0 : i32
    return %c0_i32, %arg0 : i32, i32
  }
  func.func @transform_1(%arg0: i32) -> (i32, i32) {
    %c0_i32 = arith.constant 0 : i32
    %c0_i32_0 = arith.constant 0 : i32
    %c0_i32_1 = arith.constant 0 : i32
    return %c0_i32, %c0_i32_0 : i32, i32
  }
  func.func @transform_2(%arg0: i32) -> (i32, i32) {
    %c0_i32 = arith.constant 0 : i32
    %c0_i32_0 = arith.constant 0 : i32
    %c0_i32_1 = arith.constant 0 : i32
    return %c0_i32, %c0_i32_0 : i32, i32
  }
  func.func @transform_3(%arg0: i32) -> (i32, i32) {
    %c0_i32 = arith.constant 0 : i32
    %c0_i32_0 = arith.constant 0 : i32
    %c0_i32_1 = arith.constant 0 : i32
    return %c0_i32, %c0_i32_0 : i32, i32
  }
  func.func @transform_4(%arg0: i32) -> (i32, i32) {
    %c0_i32 = arith.constant 0 : i32
    %c0_i32_0 = arith.constant 0 : i32
    %c0_i32_1 = arith.constant 0 : i32
    return %c0_i32, %c0_i32_0 : i32, i32
  }
  func.func @transform_5(%arg0: i32) -> (i32, i32) {
    %c0_i32 = arith.constant 0 : i32
    %c0_i32_0 = arith.constant 0 : i32
    %c0_i32_1 = arith.constant 0 : i32
    return %c0_i32, %c0_i32_0 : i32, i32
  }
  func.func @transform_6(%arg0: i32) -> (i32, i32) {
    %c0_i32 = arith.constant 0 : i32
    %c0_i32_0 = arith.constant 0 : i32
    %c0_i32_1 = arith.constant 0 : i32
    return %c0_i32, %c0_i32_0 : i32, i32
  }
  func.func @transform_7(%arg0: i32) -> (i32, i32) {
    %c0_i32 = arith.constant 0 : i32
    %c0_i32_0 = arith.constant 0 : i32
    %c0_i32_1 = arith.constant 0 : i32
    return %c0_i32, %c0_i32_0 : i32, i32
  }
  func.func @transform_8(%arg0: i32) -> (i32, i32) {
    %c0_i32 = arith.constant 0 : i32
    %c0_i32_0 = arith.constant 0 : i32
    %c0_i32_1 = arith.constant 0 : i32
    return %c0_i32, %c0_i32_0 : i32, i32
  }
  func.func @transform_9(%arg0: i32) -> (i32, i32) {
    %c0_i32 = arith.constant 0 : i32
    %c0_i32_0 = arith.constant 0 : i32
    %c0_i32_1 = arith.constant 0 : i32
    return %c0_i32, %c0_i32_0 : i32, i32
  }
  func.func @transform_10(%arg0: i32) -> (i32, i32) {
    %c0_i32 = arith.constant 0 : i32
    %c0_i32_0 = arith.constant 0 : i32
    %c0_i32_1 = arith.constant 0 : i32
    return %c0_i32, %c0_i32_0 : i32, i32
  }
  func.func @transform_11(%arg0: i32) -> (i32, i32) {
    %c0_i32 = arith.constant 0 : i32
    %c0_i32_0 = arith.constant 0 : i32
    %c0_i32_1 = arith.constant 0 : i32
    return %c0_i32, %c0_i32_0 : i32, i32
  }
  func.func @transform_12(%arg0: i32) -> (i32, i32) {
    %c0_i32 = arith.constant 0 : i32
    %c0_i32_0 = arith.constant 0 : i32
    %c0_i32_1 = arith.constant 0 : i32
    return %c0_i32, %c0_i32_0 : i32, i32
  }
  func.func @transform_13(%arg0: i32) -> (i32, i32) {
    %c0_i32 = arith.constant 0 : i32
    %c0_i32_0 = arith.constant 0 : i32
    return %c0_i32, %arg0 : i32, i32
  }
}

</mosaic_0001>

<llo_original>
// kernel: tpu_custom_call.1
$region0: #{tpu_custom_call.1}
  #allocation0 [shape = 'u32[]', space=smem, size = 0x4, offset = 0x4, fixed_abs, tag = 'smem constant byte address 0x4 - core index']
  #allocation1 [shape = 'u32[144,128]{1,0:T(1,128)}', space=vmem, size = 0x12000, scoped, tag = 'internal scratch']
  %s0 = inlined_call_operand.vmem [shape: bf16[32,2], index: 0, kind: input, shape index: {}]
  %s1 = inlined_call_operand.vmem [shape: bf16[384,32], index: 1, kind: input, shape index: {}]
  %s2 = inlined_call_operand.vmem [shape: f32[384,1], index: 2, kind: input, shape index: {}]
  %s3 = inlined_call_operand.vmem [shape: bf16[384,128], index: 3, kind: input, shape index: {}]
  %s4 = inlined_call_operand.vmem [shape: f32[384,1], index: 4, kind: input, shape index: {}]
  %s5 = inlined_call_operand.vmem [shape: bf16[256,128], index: 5, kind: input, shape index: {}]
  %s6 = inlined_call_operand.vmem [shape: f32[256,1], index: 6, kind: input, shape index: {}]
  %s7 = inlined_call_operand.vmem [shape: bf16[256,256], index: 7, kind: input, shape index: {}]
  %s8 = inlined_call_operand.vmem [shape: f32[256,1], index: 8, kind: input, shape index: {}]
  %s9 = inlined_call_operand.vmem [shape: bf16[128,256], index: 9, kind: input, shape index: {}]
  %s10 = inlined_call_operand.vmem [shape: f32[128,1], index: 10, kind: input, shape index: {}]
  %s11 = inlined_call_operand.vmem [shape: bf16[2,128], index: 11, kind: input, shape index: {}]
  %s12 = inlined_call_operand.vmem [shape: f32[2,1], index: 12, kind: input, shape index: {}]
  %s13 = inlined_call_operand.hbm [shape: f32[2,2], index: 13, kind: output, shape index: {}]
  %s14 = sld [smem:[#allocation0]]
  $region62: #{tpu_custom_call.1} parent=0
    _
  %s16 = ssub.s32 1, %s14
  %s17 = scalar_select 0, %s16, %s14
  $region1: #{tpu_custom_call.1} parent=0
    #allocation2 [shape = 'u8[1024]{0}', space=vmem, size = 0x400, scoped, tag = 'output window, operand 0, single buffered']
    #allocation3 [shape = 's32[1]{0}', space=sflag, size = 0x4, scoped, tag = 'scoped memory for tpu_custom_call.1']
    %18 = vsyncpa [#allocation3], 0
    // Predicated region
    $region2: #{tpu_custom_call.1} parent=1 // pred_check
      _
    $region3: #{tpu_custom_call.1} parent=1 // pred_check_branch
      %20 = sbr.rel (0) target = $region5
    $region4: #{tpu_custom_call.1} parent=1 // pred_region
      _
    $region5: #{tpu_custom_call.1} parent=1 // pred_fallthru
      _
    // Predicated region
    $region6: #{tpu_custom_call.1} parent=1 // pred_check
      _
    $region7: #{tpu_custom_call.1} parent=1 // pred_check_branch
      %22 = sbr.rel (0) target = $region9
    $region8: #{tpu_custom_call.1} parent=1 // pred_region
      _
    $region9: #{tpu_custom_call.1} parent=1 // pred_fallthru
      _
    // Predicated region
    $region10: #{tpu_custom_call.1} parent=1 // pred_check
      _
    $region11: #{tpu_custom_call.1} parent=1 // pred_check_branch
      %24 = sbr.rel (0) target = $region13
    $region12: #{tpu_custom_call.1} parent=1 // pred_region
      _
    $region13: #{tpu_custom_call.1} parent=1 // pred_fallthru
      _
    // Predicated region
    $region14: #{tpu_custom_call.1} parent=1 // pred_check
      _
    $region15: #{tpu_custom_call.1} parent=1 // pred_check_branch
      %26 = sbr.rel (0) target = $region17
    $region16: #{tpu_custom_call.1} parent=1 // pred_region
      _
    $region17: #{tpu_custom_call.1} parent=1 // pred_fallthru
      _
    // Predicated region
    $region18: #{tpu_custom_call.1} parent=1 // pred_check
      _
    $region19: #{tpu_custom_call.1} parent=1 // pred_check_branch
      %28 = sbr.rel (0) target = $region21
    $region20: #{tpu_custom_call.1} parent=1 // pred_region
      _
    $region21: #{tpu_custom_call.1} parent=1 // pred_fallthru
      _
    // Predicated region
    $region22: #{tpu_custom_call.1} parent=1 // pred_check
      _
    $region23: #{tpu_custom_call.1} parent=1 // pred_check_branch
      %30 = sbr.rel (0) target = $region25
    $region24: #{tpu_custom_call.1} parent=1 // pred_region
      _
    $region25: #{tpu_custom_call.1} parent=1 // pred_fallthru
      _
    // Predicated region
    $region26: #{tpu_custom_call.1} parent=1 // pred_check
      _
    $region27: #{tpu_custom_call.1} parent=1 // pred_check_branch
      %32 = sbr.rel (0) target = $region29
    $region28: #{tpu_custom_call.1} parent=1 // pred_region
      _
    $region29: #{tpu_custom_call.1} parent=1 // pred_fallthru
      _
    // Predicated region
    $region30: #{tpu_custom_call.1} parent=1 // pred_check
      _
    $region31: #{tpu_custom_call.1} parent=1 // pred_check_branch
      %34 = sbr.rel (0) target = $region33
    $region32: #{tpu_custom_call.1} parent=1 // pred_region
      _
    $region33: #{tpu_custom_call.1} parent=1 // pred_fallthru
      _
    // Predicated region
    $region34: #{tpu_custom_call.1} parent=1 // pred_check
      _
    $region35: #{tpu_custom_call.1} parent=1 // pred_check_branch
      %36 = sbr.rel (0) target = $region37
    $region36: #{tpu_custom_call.1} parent=1 // pred_region
      _
    $region37: #{tpu_custom_call.1} parent=1 // pred_fallthru
      _
    // Predicated region
    $region38: #{tpu_custom_call.1} parent=1 // pred_check
      _
    $region39: #{tpu_custom_call.1} parent=1 // pred_check_branch
      %38 = sbr.rel (0) target = $region41
    $region40: #{tpu_custom_call.1} parent=1 // pred_region
      _
    $region41: #{tpu_custom_call.1} parent=1 // pred_fallthru
      _
    // Predicated region
    $region42: #{tpu_custom_call.1} parent=1 // pred_check
      _
    $region43: #{tpu_custom_call.1} parent=1 // pred_check_branch
      %40 = sbr.rel (0) target = $region45
    $region44: #{tpu_custom_call.1} parent=1 // pred_region
      _
    $region45: #{tpu_custom_call.1} parent=1 // pred_fallthru
      _
    // Predicated region
    $region46: #{tpu_custom_call.1} parent=1 // pred_check
      _
    $region47: #{tpu_custom_call.1} parent=1 // pred_check_branch
      %42 = sbr.rel (0) target = $region49
    $region48: #{tpu_custom_call.1} parent=1 // pred_region
      _
    $region49: #{tpu_custom_call.1} parent=1 // pred_fallthru
      _
    // Predicated region
    $region50: #{tpu_custom_call.1} parent=1 // pred_check
      _
    $region51: #{tpu_custom_call.1} parent=1 // pred_check_branch
      %44 = sbr.rel (0) target = $region53
    $region52: #{tpu_custom_call.1} parent=1 // pred_region
      _
    $region53: #{tpu_custom_call.1} parent=1 // pred_fallthru
      _
    %v46 = vld [vmem:[%s0] sm:$0xf]
    %v47 = vld [vmem:[%s0 + $0x4] sm:$0xf]
    %v48 = vld [vmem:[%s0 + $0x8] sm:$0xf]
    %v49 = vld [vmem:[%s0 + $0xc] sm:$0xf]
    %v50 = vld [vmem:[%s1] sm:$0xf]
    %v51 = vld [vmem:[%s1 + $0x4] sm:$0xf]
    %v52 = vld [vmem:[%s1 + $0x8] sm:$0xf]
    %v53 = vld [vmem:[%s1 + $0xc] sm:$0xf]
    %v54 = vld [vmem:[%s1 + $0x10] sm:$0xf]
    %v55 = vld [vmem:[%s1 + $0x14] sm:$0xf]
    %v56 = vld [vmem:[%s1 + $0x18] sm:$0xf]
    %v57 = vld [vmem:[%s1 + $0x1c] sm:$0xf]
    %v58 = vld [vmem:[%s1 + $0x20] sm:$0xf]
    %v59 = vld [vmem:[%s1 + $0x24] sm:$0xf]
    %v60 = vld [vmem:[%s1 + $0x28] sm:$0xf]
    %v61 = vld [vmem:[%s1 + $0x2c] sm:$0xf]
    %v62 = vld [vmem:[%s1 + $0x30] sm:$0xf]
    %v63 = vld [vmem:[%s1 + $0x34] sm:$0xf]
    %v64 = vld [vmem:[%s1 + $0x38] sm:$0xf]
    %v65 = vld [vmem:[%s1 + $0x3c] sm:$0xf]
    %v66 = vld [vmem:[%s1 + $0x40] sm:$0xf]
    %v67 = vld [vmem:[%s1 + $0x44] sm:$0xf]
    %v68 = vld [vmem:[%s1 + $0x48] sm:$0xf]
    %v69 = vld [vmem:[%s1 + $0x4c] sm:$0xf]
    %v70 = vld [vmem:[%s1 + $0x50] sm:$0xf]
    %v71 = vld [vmem:[%s1 + $0x54] sm:$0xf]
    %v72 = vld [vmem:[%s1 + $0x58] sm:$0xf]
    %v73 = vld [vmem:[%s1 + $0x5c] sm:$0xf]
    %v74 = vld [vmem:[%s1 + $0x60] sm:$0xf]
    %v75 = vld [vmem:[%s1 + $0x64] sm:$0xf]
    %v76 = vld [vmem:[%s1 + $0x68] sm:$0xf]
    %v77 = vld [vmem:[%s1 + $0x6c] sm:$0xf]
    %v78 = vld [vmem:[%s1 + $0x70] sm:$0xf]
    %v79 = vld [vmem:[%s1 + $0x74] sm:$0xf]
    %v80 = vld [vmem:[%s1 + $0x78] sm:$0xf]
    %v81 = vld [vmem:[%s1 + $0x7c] sm:$0xf]
    %v82 = vld [vmem:[%s1 + $0x80] sm:$0xf]
    %v83 = vld [vmem:[%s1 + $0x84] sm:$0xf]
    %v84 = vld [vmem:[%s1 + $0x88] sm:$0xf]
    %v85 = vld [vmem:[%s1 + $0x8c] sm:$0xf]
    %v86 = vld [vmem:[%s1 + $0x90] sm:$0xf]
    %v87 = vld [vmem:[%s1 + $0x94] sm:$0xf]
    %v88 = vld [vmem:[%s1 + $0x98] sm:$0xf]
    %v89 = vld [vmem:[%s1 + $0x9c] sm:$0xf]
    %v90 = vld [vmem:[%s1 + $0xa0] sm:$0xf]
    %v91 = vld [vmem:[%s1 + $0xa4] sm:$0xf]
    %v92 = vld [vmem:[%s1 + $0xa8] sm:$0xf]
    %v93 = vld [vmem:[%s1 + $0xac] sm:$0xf]
    %v94 = vld [vmem:[%s1 + $0xb0] sm:$0xf]
    %v95 = vld [vmem:[%s1 + $0xb4] sm:$0xf]
    %v96 = vld [vmem:[%s1 + $0xb8] sm:$0xf]
    %v97 = vld [vmem:[%s1 + $0xbc] sm:$0xf]
    %v98 = vld [vmem:[%s2] sm:$0xff]
    %v99 = vld [vmem:[%s2 + $0x8] sm:$0xff]
    %v100 = vld [vmem:[%s2 + $0x10] sm:$0xff]
    %v101 = vld [vmem:[%s2 + $0x18] sm:$0xff]
    %v102 = vld [vmem:[%s2 + $0x20] sm:$0xff]
    %v103 = vld [vmem:[%s2 + $0x28] sm:$0xff]
    %v104 = vld [vmem:[%s2 + $0x30] sm:$0xff]
    %v105 = vld [vmem:[%s2 + $0x38] sm:$0xff]
    %v106 = vld [vmem:[%s2 + $0x40] sm:$0xff]
    %v107 = vld [vmem:[%s2 + $0x48] sm:$0xff]
    %v108 = vld [vmem:[%s2 + $0x50] sm:$0xff]
    %v109 = vld [vmem:[%s2 + $0x58] sm:$0xff]
    %v110 = vld [vmem:[%s2 + $0x60] sm:$0xff]
    %v111 = vld [vmem:[%s2 + $0x68] sm:$0xff]
    %v112 = vld [vmem:[%s2 + $0x70] sm:$0xff]
    %v113 = vld [vmem:[%s2 + $0x78] sm:$0xff]
    %v114 = vld [vmem:[%s2 + $0x80] sm:$0xff]
    %v115 = vld [vmem:[%s2 + $0x88] sm:$0xff]
    %v116 = vld [vmem:[%s2 + $0x90] sm:$0xff]
    %v117 = vld [vmem:[%s2 + $0x98] sm:$0xff]
    %v118 = vld [vmem:[%s2 + $0xa0] sm:$0xff]
    %v119 = vld [vmem:[%s2 + $0xa8] sm:$0xff]
    %v120 = vld [vmem:[%s2 + $0xb0] sm:$0xff]
    %v121 = vld [vmem:[%s2 + $0xb8] sm:$0xff]
    %v122 = vld [vmem:[%s2 + $0xc0] sm:$0xff]
    %v123 = vld [vmem:[%s2 + $0xc8] sm:$0xff]
    %v124 = vld [vmem:[%s2 + $0xd0] sm:$0xff]
    %v125 = vld [vmem:[%s2 + $0xd8] sm:$0xff]
    %v126 = vld [vmem:[%s2 + $0xe0] sm:$0xff]
    %v127 = vld [vmem:[%s2 + $0xe8] sm:$0xff]
    %v128 = vld [vmem:[%s2 + $0xf0] sm:$0xff]
    %v129 = vld [vmem:[%s2 + $0xf8] sm:$0xff]
    %v130 = vld [vmem:[%s2 + $0x100] sm:$0xff]
    %v131 = vld [vmem:[%s2 + $0x108] sm:$0xff]
    %v132 = vld [vmem:[%s2 + $0x110] sm:$0xff]
    %v133 = vld [vmem:[%s2 + $0x118] sm:$0xff]
    %v134 = vld [vmem:[%s2 + $0x120] sm:$0xff]
    %v135 = vld [vmem:[%s2 + $0x128] sm:$0xff]
    %v136 = vld [vmem:[%s2 + $0x130] sm:$0xff]
    %v137 = vld [vmem:[%s2 + $0x138] sm:$0xff]
    %v138 = vld [vmem:[%s2 + $0x140] sm:$0xff]
    %v139 = vld [vmem:[%s2 + $0x148] sm:$0xff]
    %v140 = vld [vmem:[%s2 + $0x150] sm:$0xff]
    %v141 = vld [vmem:[%s2 + $0x158] sm:$0xff]
    %v142 = vld [vmem:[%s2 + $0x160] sm:$0xff]
    %v143 = vld [vmem:[%s2 + $0x168] sm:$0xff]
    %v144 = vld [vmem:[%s2 + $0x170] sm:$0xff]
    %v145 = vld [vmem:[%s2 + $0x178] sm:$0xff]
    %147 = vset.pattern.permute.xlu0 0
    %148 = vperm.xlu0 %147, %v98
    %v149 = vpop.permute.xlu0 %148
    %152 = vset.pattern.permute.xlu0 0
    %153 = vperm.xlu0 %152, %v99
    %v154 = vpop.permute.xlu0 %153
    %157 = vset.pattern.permute.xlu0 0
    %158 = vperm.xlu0 %157, %v100
    %v159 = vpop.permute.xlu0 %158
    %162 = vset.pattern.permute.xlu0 0
    %163 = vperm.xlu0 %162, %v101
    %v164 = vpop.permute.xlu0 %163
    %167 = vset.pattern.permute.xlu0 0
    %168 = vperm.xlu0 %167, %v102
    %v169 = vpop.permute.xlu0 %168
    %172 = vset.pattern.permute.xlu0 0
    %173 = vperm.xlu0 %172, %v103
    %v174 = vpop.permute.xlu0 %173
    %177 = vset.pattern.permute.xlu0 0
    %178 = vperm.xlu0 %177, %v104
    %v179 = vpop.permute.xlu0 %178
    %182 = vset.pattern.permute.xlu0 0
    %183 = vperm.xlu0 %182, %v105
    %v184 = vpop.permute.xlu0 %183
    %187 = vset.pattern.permute.xlu0 0
    %188 = vperm.xlu0 %187, %v106
    %v189 = vpop.permute.xlu0 %188
    %192 = vset.pattern.permute.xlu0 0
    %193 = vperm.xlu0 %192, %v107
    %v194 = vpop.permute.xlu0 %193
    %197 = vset.pattern.permute.xlu0 0
    %198 = vperm.xlu0 %197, %v108
    %v199 = vpop.permute.xlu0 %198
    %202 = vset.pattern.permute.xlu0 0
    %203 = vperm.xlu0 %202, %v109
    %v204 = vpop.permute.xlu0 %203
    %207 = vset.pattern.permute.xlu0 0
    %208 = vperm.xlu0 %207, %v110
    %v209 = vpop.permute.xlu0 %208
    %212 = vset.pattern.permute.xlu0 0
    %213 = vperm.xlu0 %212, %v111
    %v214 = vpop.permute.xlu0 %213
    %217 = vset.pattern.permute.xlu0 0
    %218 = vperm.xlu0 %217, %v112
    %v219 = vpop.permute.xlu0 %218
    %222 = vset.pattern.permute.xlu0 0
    %223 = vperm.xlu0 %222, %v113
    %v224 = vpop.permute.xlu0 %223
    %227 = vset.pattern.permute.xlu0 0
    %228 = vperm.xlu0 %227, %v114
    %v229 = vpop.permute.xlu0 %228
    %232 = vset.pattern.permute.xlu0 0
    %233 = vperm.xlu0 %232, %v115
    %v234 = vpop.permute.xlu0 %233
    %237 = vset.pattern.permute.xlu0 0
    %238 = vperm.xlu0 %237, %v116
    %v239 = vpop.permute.xlu0 %238
    %242 = vset.pattern.permute.xlu0 0
    %243 = vperm.xlu0 %242, %v117
    %v244 = vpop.permute.xlu0 %243
    %247 = vset.pattern.permute.xlu0 0
    %248 = vperm.xlu0 %247, %v118
    %v249 = vpop.permute.xlu0 %248
    %252 = vset.pattern.permute.xlu0 0
    %253 = vperm.xlu0 %252, %v119
    %v254 = vpop.permute.xlu0 %253
    %257 = vset.pattern.permute.xlu0 0
    %258 = vperm.xlu0 %257, %v120
    %v259 = vpop.permute.xlu0 %258
    %262 = vset.pattern.permute.xlu0 0
    %263 = vperm.xlu0 %262, %v121
    %v264 = vpop.permute.xlu0 %263
    %267 = vset.pattern.permute.xlu0 0
    %268 = vperm.xlu0 %267, %v122
    %v269 = vpop.permute.xlu0 %268
    %272 = vset.pattern.permute.xlu0 0
    %273 = vperm.xlu0 %272, %v123
    %v274 = vpop.permute.xlu0 %273
    %277 = vset.pattern.permute.xlu0 0
    %278 = vperm.xlu0 %277, %v124
    %v279 = vpop.permute.xlu0 %278
    %282 = vset.pattern.permute.xlu0 0
    %283 = vperm.xlu0 %282, %v125
    %v284 = vpop.permute.xlu0 %283
    %287 = vset.pattern.permute.xlu0 0
    %288 = vperm.xlu0 %287, %v126
    %v289 = vpop.permute.xlu0 %288
    %292 = vset.pattern.permute.xlu0 0
    %293 = vperm.xlu0 %292, %v127
    %v294 = vpop.permute.xlu0 %293
    %297 = vset.pattern.permute.xlu0 0
    %298 = vperm.xlu0 %297, %v128
    %v299 = vpop.permute.xlu0 %298
    %302 = vset.pattern.permute.xlu0 0
    %303 = vperm.xlu0 %302, %v129
    %v304 = vpop.permute.xlu0 %303
    %307 = vset.pattern.permute.xlu0 0
    %308 = vperm.xlu0 %307, %v130
    %v309 = vpop.permute.xlu0 %308
    %312 = vset.pattern.permute.xlu0 0
    %313 = vperm.xlu0 %312, %v131
    %v314 = vpop.permute.xlu0 %313
    %317 = vset.pattern.permute.xlu0 0
    %318 = vperm.xlu0 %317, %v132
    %v319 = vpop.permute.xlu0 %318
    %322 = vset.pattern.permute.xlu0 0
    %323 = vperm.xlu0 %322, %v133
    %v324 = vpop.permute.xlu0 %323
    %327 = vset.pattern.permute.xlu0 0
    %328 = vperm.xlu0 %327, %v134
    %v329 = vpop.permute.xlu0 %328
    %332 = vset.pattern.permute.xlu0 0
    %333 = vperm.xlu0 %332, %v135
    %v334 = vpop.permute.xlu0 %333
    %337 = vset.pattern.permute.xlu0 0
    %338 = vperm.xlu0 %337, %v136
    %v339 = vpop.permute.xlu0 %338
    %342 = vset.pattern.permute.xlu0 0
    %343 = vperm.xlu0 %342, %v137
    %v344 = vpop.permute.xlu0 %343
    %347 = vset.pattern.permute.xlu0 0
    %348 = vperm.xlu0 %347, %v138
    %v349 = vpop.permute.xlu0 %348
    %352 = vset.pattern.permute.xlu0 0
    %353 = vperm.xlu0 %352, %v139
    %v354 = vpop.permute.xlu0 %353
    %357 = vset.pattern.permute.xlu0 0
    %358 = vperm.xlu0 %357, %v140
    %v359 = vpop.permute.xlu0 %358
    %362 = vset.pattern.permute.xlu0 0
    %363 = vperm.xlu0 %362, %v141
    %v364 = vpop.permute.xlu0 %363
    %367 = vset.pattern.permute.xlu0 0
    %368 = vperm.xlu0 %367, %v142
    %v369 = vpop.permute.xlu0 %368
    %372 = vset.pattern.permute.xlu0 0
    %373 = vperm.xlu0 %372, %v143
    %v374 = vpop.permute.xlu0 %373
    %377 = vset.pattern.permute.xlu0 0
    %378 = vperm.xlu0 %377, %v144
    %v379 = vpop.permute.xlu0 %378
    %382 = vset.pattern.permute.xlu0 0
    %383 = vperm.xlu0 %382, %v145
    %v384 = vpop.permute.xlu0 %383
    %v434 = vunpack.c.l.b16 %v50
    %v435 = vunpack.c.l.b16 %v51
    %v436 = vunpack.c.l.b16 %v52
    %v437 = vunpack.c.l.b16 %v53
    %v438 = vunpack.c.l.b16 %v54
    %v439 = vunpack.c.l.b16 %v55
    %v440 = vunpack.c.l.b16 %v56
    %v441 = vunpack.c.l.b16 %v57
    %v442 = vunpack.c.l.b16 %v58
    %v443 = vunpack.c.l.b16 %v59
    %v444 = vunpack.c.l.b16 %v60
    %v445 = vunpack.c.l.b16 %v61
    %v446 = vunpack.c.l.b16 %v62
    %v447 = vunpack.c.l.b16 %v63
    %v448 = vunpack.c.l.b16 %v64
    %v449 = vunpack.c.l.b16 %v65
    %v450 = vunpack.c.l.b16 %v66
    %v451 = vunpack.c.l.b16 %v67
    %v452 = vunpack.c.l.b16 %v68
    %v453 = vunpack.c.l.b16 %v69
    %v454 = vunpack.c.l.b16 %v70
    %v455 = vunpack.c.l.b16 %v71
    %v456 = vunpack.c.l.b16 %v72
    %v457 = vunpack.c.l.b16 %v73
    %v458 = vunpack.c.l.b16 %v74
    %v459 = vunpack.c.l.b16 %v75
    %v460 = vunpack.c.l.b16 %v76
    %v461 = vunpack.c.l.b16 %v77
    %v462 = vunpack.c.l.b16 %v78
    %v463 = vunpack.c.l.b16 %v79
    %v464 = vunpack.c.l.b16 %v80
    %v465 = vunpack.c.l.b16 %v81
    %v466 = vunpack.c.l.b16 %v82
    %v467 = vunpack.c.l.b16 %v83
    %v468 = vunpack.c.l.b16 %v84
    %v469 = vunpack.c.l.b16 %v85
    %v470 = vunpack.c.l.b16 %v86
    %v471 = vunpack.c.l.b16 %v87
    %v472 = vunpack.c.l.b16 %v88
    %v473 = vunpack.c.l.b16 %v89
    %v474 = vunpack.c.l.b16 %v90
    %v475 = vunpack.c.l.b16 %v91
    %v476 = vunpack.c.l.b16 %v92
    %v477 = vunpack.c.l.b16 %v93
    %v478 = vunpack.c.l.b16 %v94
    %v479 = vunpack.c.l.b16 %v95
    %v480 = vunpack.c.l.b16 %v96
    %v481 = vunpack.c.l.b16 %v97
    %v482 = vpack.c.b16 %v435, %v434
    %v483 = vpack.c.b16 %v437, %v436
    %v484 = vpack.c.b16 %v439, %v438
    %v485 = vpack.c.b16 %v441, %v440
    %v486 = vpack.c.b16 %v443, %v442
    %v487 = vpack.c.b16 %v445, %v444
    %v488 = vpack.c.b16 %v447, %v446
    %v489 = vpack.c.b16 %v449, %v448
    %v490 = vpack.c.b16 %v451, %v450
    %v491 = vpack.c.b16 %v453, %v452
    %v492 = vpack.c.b16 %v455, %v454
    %v493 = vpack.c.b16 %v457, %v456
    %v494 = vpack.c.b16 %v459, %v458
    %v495 = vpack.c.b16 %v461, %v460
    %v496 = vpack.c.b16 %v463, %v462
    %v497 = vpack.c.b16 %v465, %v464
    %v498 = vpack.c.b16 %v467, %v466
    %v499 = vpack.c.b16 %v469, %v468
    %v500 = vpack.c.b16 %v471, %v470
    %v501 = vpack.c.b16 %v473, %v472
    %v502 = vpack.c.b16 %v475, %v474
    %v503 = vpack.c.b16 %v477, %v476
    %v504 = vpack.c.b16 %v479, %v478
    %v505 = vpack.c.b16 %v481, %v480
    %v510 = vunpack.c.l.b16 %v46
    %v511 = vunpack.c.l.b16 %v47
    %v512 = vunpack.c.l.b16 %v48
    %v513 = vunpack.c.l.b16 %v49
    %v514 = vpack.c.b16 %v511, %v510
    %v515 = vpack.c.b16 %v513, %v512
    %vm518 = vcmask 261120
    %v520 = vsel %vm518, %v482, 0
    %v523 = vsel %vm518, %v483, 0
    %v526 = vsel %vm518, %v484, 0
    %v529 = vsel %vm518, %v485, 0
    %v532 = vsel %vm518, %v486, 0
    %v535 = vsel %vm518, %v487, 0
    %v538 = vsel %vm518, %v488, 0
    %v541 = vsel %vm518, %v489, 0
    %v544 = vsel %vm518, %v490, 0
    %v547 = vsel %vm518, %v491, 0
    %v550 = vsel %vm518, %v492, 0
    %v553 = vsel %vm518, %v493, 0
    %v556 = vsel %vm518, %v494, 0
    %v559 = vsel %vm518, %v495, 0
    %v562 = vsel %vm518, %v496, 0
    %v565 = vsel %vm518, %v497, 0
    %v568 = vsel %vm518, %v498, 0
    %v571 = vsel %vm518, %v499, 0
    %v574 = vsel %vm518, %v500, 0
    %v577 = vsel %vm518, %v501, 0
    %v580 = vsel %vm518, %v502, 0
    %v583 = vsel %vm518, %v503, 0
    %v586 = vsel %vm518, %v504, 0
    %v589 = vsel %vm518, %v505, 0
    %591 = vmatprep.subr.bf16.mxu0 0
    %592 = vmatpush1.bf16.msra.mxu0 0
    %593 = vmatprep.subr.bf16.mxu0 0
    %594 = vmatpush1.bf16.msra.mxu0 0
    %595 = vmatprep.subr.bf16.mxu0 0
    %596 = vmatpush1.bf16.msra.mxu0 0
    %597 = vmatprep.subr.bf16.mxu0 0
    %598 = vmatpush1.bf16.msra.mxu0 0
    %599 = vmatprep.subr.bf16.mxu0 0
    %600 = vmatpush1.bf16.msra.mxu0 0
    %601 = vmatprep.subr.bf16.mxu0 0
    %602 = vmatpush1.bf16.msra.mxu0 0
    %603 = vmatprep.subr.bf16.mxu0 0
    %604 = vmatpush1.bf16.msra.mxu0 %v515
    %605 = vmatprep.subr.bf16.mxu0 0
    %606 = vmatpush1.bf16.msra.mxu0 %v514
    %607 = vmatprep.subr.bf16.mxu0 0
    %608 = vmatpush2.bf16.msra.mxu0 0
    %609 = vmatprep.subr.bf16.mxu0 0
    %610 = vmatpush2.bf16.msra.mxu0 0
    %611 = vmatprep.subr.bf16.mxu0 0
    %612 = vmatpush2.bf16.msra.mxu0 0
    %613 = vmatprep.subr.bf16.mxu0 0
    %614 = vmatpush2.bf16.msra.mxu0 0
    %615 = vmatprep.subr.bf16.mxu0 0
    %616 = vmatpush2.bf16.msra.mxu0 0
    %617 = vmatprep.subr.bf16.mxu0 0
    %618 = vmatpush2.bf16.msra.mxu0 0
    %619 = vmatprep.subr.bf16.mxu0 0
    %620 = vmatpush2.bf16.msra.mxu0 0
    %621 = vmatprep.subr.bf16.mxu0 0
    %622 = vmatpush2.bf16.msra.mxu0 0
    %623 = vmatprep.mubr.bf16.mxu0 0
    %624 = vmatmul.mubr.bf16.gmra.mxu0 %v520
    %v625 = vpop.f32.mrf.mxu0
    %v626 = vadd.f32 %v149, %v625
    %v627 = vpop.f32.mrf.mxu0
    %v628 = vpop.f32.mrf.mxu0
    %v629 = vadd.f32 %v154, %v628
    %v630 = vpop.f32.mrf.mxu0
    %631 = vmatprep.mubr.bf16.mxu0 0
    %632 = vmatmul.mubr.bf16.gmra.mxu0 %v523
    %v633 = vpop.f32.mrf.mxu0
    %v634 = vadd.f32 %v159, %v633
    %v635 = vpop.f32.mrf.mxu0
    %v636 = vpop.f32.mrf.mxu0
    %v637 = vadd.f32 %v164, %v636
    %v638 = vpop.f32.mrf.mxu0
    %639 = vmatprep.mubr.bf16.mxu0 0
    %640 = vmatmul.mubr.bf16.gmra.mxu0 %v526
    %v641 = vpop.f32.mrf.mxu0
    %v642 = vadd.f32 %v169, %v641
    %v643 = vpop.f32.mrf.mxu0
    %v644 = vpop.f32.mrf.mxu0
    %v645 = vadd.f32 %v174, %v644
    %v646 = vpop.f32.mrf.mxu0
    %647 = vmatprep.mubr.bf16.mxu0 0
    %648 = vmatmul.mubr.bf16.gmra.mxu0 %v529
    %v649 = vpop.f32.mrf.mxu0
    %v650 = vadd.f32 %v179, %v649
    %v651 = vpop.f32.mrf.mxu0
    %v652 = vpop.f32.mrf.mxu0
    %v653 = vadd.f32 %v184, %v652
    %v654 = vpop.f32.mrf.mxu0
    %655 = vmatprep.mubr.bf16.mxu0 0
    %656 = vmatmul.mubr.bf16.gmra.mxu0 %v532
    %v657 = vpop.f32.mrf.mxu0
    %v658 = vadd.f32 %v189, %v657
    %v659 = vpop.f32.mrf.mxu0
    %v660 = vpop.f32.mrf.mxu0
    %v661 = vadd.f32 %v194, %v660
    %v662 = vpop.f32.mrf.mxu0
    %663 = vmatprep.mubr.bf16.mxu0 0
    %664 = vmatmul.mubr.bf16.gmra.mxu0 %v535
    %v665 = vpop.f32.mrf.mxu0
    %v666 = vadd.f32 %v199, %v665
    %v667 = vpop.f32.mrf.mxu0
    %v668 = vpop.f32.mrf.mxu0
    %v669 = vadd.f32 %v204, %v668
    %v670 = vpop.f32.mrf.mxu0
    %671 = vmatprep.mubr.bf16.mxu0 0
    %672 = vmatmul.mubr.bf16.gmra.mxu0 %v538
    %v673 = vpop.f32.mrf.mxu0
    %v674 = vadd.f32 %v209, %v673
    %v675 = vpop.f32.mrf.mxu0
    %v676 = vpop.f32.mrf.mxu0
    %v677 = vadd.f32 %v214, %v676
    %v678 = vpop.f32.mrf.mxu0
    %679 = vmatprep.mubr.bf16.mxu0 0
    %680 = vmatmul.mubr.bf16.gmra.mxu0 %v541
    %v681 = vpop.f32.mrf.mxu0
    %v682 = vadd.f32 %v219, %v681
    %v683 = vpop.f32.mrf.mxu0
    %v684 = vpop.f32.mrf.mxu0
    %v685 = vadd.f32 %v224, %v684
    %v686 = vpop.f32.mrf.mxu0
    %687 = vmatprep.mubr.bf16.mxu0 0
    %688 = vmatmul.mubr.bf16.gmra.mxu0 %v544
    %v689 = vpop.f32.mrf.mxu0
    %v690 = vadd.f32 %v229, %v689
    %v691 = vpop.f32.mrf.mxu0
    %v692 = vpop.f32.mrf.mxu0
    %v693 = vadd.f32 %v234, %v692
    %v694 = vpop.f32.mrf.mxu0
    %695 = vmatprep.mubr.bf16.mxu0 0
    %696 = vmatmul.mubr.bf16.gmra.mxu0 %v547
    %v697 = vpop.f32.mrf.mxu0
    %v698 = vadd.f32 %v239, %v697
    %v699 = vpop.f32.mrf.mxu0
    %v700 = vpop.f32.mrf.mxu0
    %v701 = vadd.f32 %v244, %v700
    %v702 = vpop.f32.mrf.mxu0
    %703 = vmatprep.mubr.bf16.mxu0 0
    %704 = vmatmul.mubr.bf16.gmra.mxu0 %v550
    %v705 = vpop.f32.mrf.mxu0
    %v706 = vadd.f32 %v249, %v705
    %v707 = vpop.f32.mrf.mxu0
    %v708 = vpop.f32.mrf.mxu0
    %v709 = vadd.f32 %v254, %v708
    %v710 = vpop.f32.mrf.mxu0
    %711 = vmatprep.mubr.bf16.mxu0 0
    %712 = vmatmul.mubr.bf16.gmra.mxu0 %v553
    %v713 = vpop.f32.mrf.mxu0
    %v714 = vadd.f32 %v259, %v713
    %v715 = vpop.f32.mrf.mxu0
    %v716 = vpop.f32.mrf.mxu0
    %v717 = vadd.f32 %v264, %v716
    %v718 = vpop.f32.mrf.mxu0
    %719 = vmatprep.mubr.bf16.mxu0 0
    %720 = vmatmul.mubr.bf16.gmra.mxu0 %v556
    %v721 = vpop.f32.mrf.mxu0
    %v722 = vadd.f32 %v269, %v721
    %v723 = vpop.f32.mrf.mxu0
    %v724 = vpop.f32.mrf.mxu0
    %v725 = vadd.f32 %v274, %v724
    %v726 = vpop.f32.mrf.mxu0
    %727 = vmatprep.mubr.bf16.mxu0 0
    %728 = vmatmul.mubr.bf16.gmra.mxu0 %v559
    %v729 = vpop.f32.mrf.mxu0
    %v730 = vadd.f32 %v279, %v729
    %v731 = vpop.f32.mrf.mxu0
    %v732 = vpop.f32.mrf.mxu0
    %v733 = vadd.f32 %v284, %v732
    %v734 = vpop.f32.mrf.mxu0
    %735 = vmatprep.mubr.bf16.mxu0 0
    %736 = vmatmul.mubr.bf16.gmra.mxu0 %v562
    %v737 = vpop.f32.mrf.mxu0
    %v738 = vadd.f32 %v289, %v737
    %v739 = vpop.f32.mrf.mxu0
    %v740 = vpop.f32.mrf.mxu0
    %v741 = vadd.f32 %v294, %v740
    %v742 = vpop.f32.mrf.mxu0
    %743 = vmatprep.mubr.bf16.mxu0 0
    %744 = vmatmul.mubr.bf16.gmra.mxu0 %v565
    %v745 = vpop.f32.mrf.mxu0
    %v746 = vadd.f32 %v299, %v745
    %v747 = vpop.f32.mrf.mxu0
    %v748 = vpop.f32.mrf.mxu0
    %v749 = vadd.f32 %v304, %v748
    %v750 = vpop.f32.mrf.mxu0
    %751 = vmatprep.mubr.bf16.mxu0 0
    %752 = vmatmul.mubr.bf16.gmra.mxu0 %v568
    %v753 = vpop.f32.mrf.mxu0
    %v754 = vadd.f32 %v309, %v753
    %v755 = vpop.f32.mrf.mxu0
    %v756 = vpop.f32.mrf.mxu0
    %v757 = vadd.f32 %v314, %v756
    %v758 = vpop.f32.mrf.mxu0
    %759 = vmatprep.mubr.bf16.mxu0 0
    %760 = vmatmul.mubr.bf16.gmra.mxu0 %v571
    %v761 = vpop.f32.mrf.mxu0
    %v762 = vadd.f32 %v319, %v761
    %v763 = vpop.f32.mrf.mxu0
    %v764 = vpop.f32.mrf.mxu0
    %v765 = vadd.f32 %v324, %v764
    %v766 = vpop.f32.mrf.mxu0
    %767 = vmatprep.mubr.bf16.mxu0 0
    %768 = vmatmul.mubr.bf16.gmra.mxu0 %v574
    %v769 = vpop.f32.mrf.mxu0
    %v770 = vadd.f32 %v329, %v769
    %v771 = vpop.f32.mrf.mxu0
    %v772 = vpop.f32.mrf.mxu0
    %v773 = vadd.f32 %v334, %v772
    %v774 = vpop.f32.mrf.mxu0
    %775 = vmatprep.mubr.bf16.mxu0 0
    %776 = vmatmul.mubr.bf16.gmra.mxu0 %v577
    %v777 = vpop.f32.mrf.mxu0
    %v778 = vadd.f32 %v339, %v777
    %v779 = vpop.f32.mrf.mxu0
    %v780 = vpop.f32.mrf.mxu0
    %v781 = vadd.f32 %v344, %v780
    %v782 = vpop.f32.mrf.mxu0
    %783 = vmatprep.mubr.bf16.mxu0 0
    %784 = vmatmul.mubr.bf16.gmra.mxu0 %v580
    %v785 = vpop.f32.mrf.mxu0
    %v786 = vadd.f32 %v349, %v785
    %v787 = vpop.f32.mrf.mxu0
    %v788 = vpop.f32.mrf.mxu0
    %v789 = vadd.f32 %v354, %v788
    %v790 = vpop.f32.mrf.mxu0
    %791 = vmatprep.mubr.bf16.mxu0 0
    %792 = vmatmul.mubr.bf16.gmra.mxu0 %v583
    %v793 = vpop.f32.mrf.mxu0
    %v794 = vadd.f32 %v359, %v793
    %v795 = vpop.f32.mrf.mxu0
    %v796 = vpop.f32.mrf.mxu0
    %v797 = vadd.f32 %v364, %v796
    %v798 = vpop.f32.mrf.mxu0
    %799 = vmatprep.mubr.bf16.mxu0 0
    %800 = vmatmul.mubr.bf16.gmra.mxu0 %v586
    %v801 = vpop.f32.mrf.mxu0
    %v802 = vadd.f32 %v369, %v801
    %v803 = vpop.f32.mrf.mxu0
    %v804 = vpop.f32.mrf.mxu0
    %v805 = vadd.f32 %v374, %v804
    %v806 = vpop.f32.mrf.mxu0
    %807 = vmatprep.mubr.bf16.mxu0 0
    %808 = vmatmul.mubr.bf16.gmra.mxu0 %v589
    %v809 = vpop.f32.mrf.mxu0
    %v810 = vadd.f32 %v379, %v809
    %v811 = vpop.f32.mrf.mxu0
    %v812 = vpop.f32.mrf.mxu0
    %v813 = vadd.f32 %v384, %v812
    %v814 = vpop.f32.mrf.mxu0
    %815 = vdwg.mxu0
    %v816 = vxor.u32 %v626, 2147483648
    %v817 = vxor.u32 %v629, 2147483648
    %v818 = vxor.u32 %v634, 2147483648
    %v819 = vxor.u32 %v637, 2147483648
    %v820 = vxor.u32 %v642, 2147483648
    %v821 = vxor.u32 %v645, 2147483648
    %v822 = vxor.u32 %v650, 2147483648
    %v823 = vxor.u32 %v653, 2147483648
    %v824 = vxor.u32 %v658, 2147483648
    %v825 = vxor.u32 %v661, 2147483648
    %v826 = vxor.u32 %v666, 2147483648
    %v827 = vxor.u32 %v669, 2147483648
    %v828 = vxor.u32 %v674, 2147483648
    %v829 = vxor.u32 %v677, 2147483648
    %v830 = vxor.u32 %v682, 2147483648
    %v831 = vxor.u32 %v685, 2147483648
    %v832 = vmul.f32 %v816, 1.442695
    %v833 = vpow.pop %v832
    %v834 = vmul.f32 %v817, 1.442695
    %v835 = vpow.pop %v834
    %v836 = vmul.f32 %v818, 1.442695
    %v837 = vpow.pop %v836
    %v838 = vmul.f32 %v819, 1.442695
    %v839 = vpow.pop %v838
    %v840 = vmul.f32 %v820, 1.442695
    %v841 = vpow.pop %v840
    %v842 = vmul.f32 %v821, 1.442695
    %v843 = vpow.pop %v842
    %v844 = vmul.f32 %v822, 1.442695
    %v845 = vpow.pop %v844
    %v846 = vmul.f32 %v823, 1.442695
    %v847 = vpow.pop %v846
    %v848 = vmul.f32 %v824, 1.442695
    %v849 = vpow.pop %v848
    %v850 = vmul.f32 %v825, 1.442695
    %v851 = vpow.pop %v850
    %v852 = vmul.f32 %v826, 1.442695
    %v853 = vpow.pop %v852
    %v854 = vmul.f32 %v827, 1.442695
    %v855 = vpow.pop %v854
    %v856 = vmul.f32 %v828, 1.442695
    %v857 = vpow.pop %v856
    %v858 = vmul.f32 %v829, 1.442695
    %v859 = vpow.pop %v858
    %v860 = vmul.f32 %v830, 1.442695
    %v861 = vpow.pop %v860
    %v862 = vmul.f32 %v831, 1.442695
    %v863 = vpow.pop %v862
    %v864 = vadd.f32 %v833, 1.0
    %v865 = vadd.f32 %v835, 1.0
    %v866 = vadd.f32 %v837, 1.0
    %v867 = vadd.f32 %v839, 1.0
    %v868 = vadd.f32 %v841, 1.0
    %v869 = vadd.f32 %v843, 1.0
    %v870 = vadd.f32 %v845, 1.0
    %v871 = vadd.f32 %v847, 1.0
    %v872 = vadd.f32 %v849, 1.0
    %v873 = vadd.f32 %v851, 1.0
    %v874 = vadd.f32 %v853, 1.0
    %v875 = vadd.f32 %v855, 1.0
    %v876 = vadd.f32 %v857, 1.0
    %v877 = vadd.f32 %v859, 1.0
    %v878 = vadd.f32 %v861, 1.0
    %v879 = vadd.f32 %v863, 1.0
    %v880 = vrcp.pop %v864
    %v881 = vmul.f32 1.0, %v880
    %v882 = vrcp.pop %v865
    %v883 = vmul.f32 1.0, %v882
    %v884 = vrcp.pop %v866
    %v885 = vmul.f32 1.0, %v884
    %v886 = vrcp.pop %v867
    %v887 = vmul.f32 1.0, %v886
    %v888 = vrcp.pop %v868
    %v889 = vmul.f32 1.0, %v888
    %v890 = vrcp.pop %v869
    %v891 = vmul.f32 1.0, %v890
    %v892 = vrcp.pop %v870
    %v893 = vmul.f32 1.0, %v892
    %v894 = vrcp.pop %v871
    %v895 = vmul.f32 1.0, %v894
    %v896 = vrcp.pop %v872
    %v897 = vmul.f32 1.0, %v896
    %v898 = vrcp.pop %v873
    %v899 = vmul.f32 1.0, %v898
    %v900 = vrcp.pop %v874
    %v901 = vmul.f32 1.0, %v900
    %v902 = vrcp.pop %v875
    %v903 = vmul.f32 1.0, %v902
    %v904 = vrcp.pop %v876
    %v905 = vmul.f32 1.0, %v904
    %v906 = vrcp.pop %v877
    %v907 = vmul.f32 1.0, %v906
    %v908 = vrcp.pop %v878
    %v909 = vmul.f32 1.0, %v908
    %v910 = vrcp.pop %v879
    %v911 = vmul.f32 1.0, %v910
    %v912 = vtanh.pop %v690
    %v913 = vtanh.pop %v693
    %v914 = vtanh.pop %v698
    %v915 = vtanh.pop %v701
    %v916 = vtanh.pop %v706
    %v917 = vtanh.pop %v709
    %v918 = vtanh.pop %v714
    %v919 = vtanh.pop %v717
    %v920 = vtanh.pop %v722
    %v921 = vtanh.pop %v725
    %v922 = vtanh.pop %v730
    %v923 = vtanh.pop %v733
    %v924 = vtanh.pop %v738
    %v925 = vtanh.pop %v741
    %v926 = vtanh.pop %v746
    %v927 = vtanh.pop %v749
    %v928 = vxor.u32 %v754, 2147483648
    %v929 = vxor.u32 %v757, 2147483648
    %v930 = vxor.u32 %v762, 2147483648
    %v931 = vxor.u32 %v765, 2147483648
    %v932 = vxor.u32 %v770, 2147483648
    %v933 = vxor.u32 %v773, 2147483648
    %v934 = vxor.u32 %v778, 2147483648
    %v935 = vxor.u32 %v781, 2147483648
    %v936 = vxor.u32 %v786, 2147483648
    %v937 = vxor.u32 %v789, 2147483648
    %v938 = vxor.u32 %v794, 2147483648
    %v939 = vxor.u32 %v797, 2147483648
    %v940 = vxor.u32 %v802, 2147483648
    %v941 = vxor.u32 %v805, 2147483648
    %v942 = vxor.u32 %v810, 2147483648
    %v943 = vxor.u32 %v813, 2147483648
    %v944 = vmul.f32 %v928, 1.442695
    %v945 = vpow.pop %v944
    %v946 = vmul.f32 %v929, 1.442695
    %v947 = vpow.pop %v946
    %v948 = vmul.f32 %v930, 1.442695
    %v949 = vpow.pop %v948
    %v950 = vmul.f32 %v931, 1.442695
    %v951 = vpow.pop %v950
    %v952 = vmul.f32 %v932, 1.442695
    %v953 = vpow.pop %v952
    %v954 = vmul.f32 %v933, 1.442695
    %v955 = vpow.pop %v954
    %v956 = vmul.f32 %v934, 1.442695
    %v957 = vpow.pop %v956
    %v958 = vmul.f32 %v935, 1.442695
    %v959 = vpow.pop %v958
    %v960 = vmul.f32 %v936, 1.442695
    %v961 = vpow.pop %v960
    %v962 = vmul.f32 %v937, 1.442695
    %v963 = vpow.pop %v962
    %v964 = vmul.f32 %v938, 1.442695
    %v965 = vpow.pop %v964
    %v966 = vmul.f32 %v939, 1.442695
    %v967 = vpow.pop %v966
    %v968 = vmul.f32 %v940, 1.442695
    %v969 = vpow.pop %v968
    %v970 = vmul.f32 %v941, 1.442695
    %v971 = vpow.pop %v970
    %v972 = vmul.f32 %v942, 1.442695
    %v973 = vpow.pop %v972
    %v974 = vmul.f32 %v943, 1.442695
    %v975 = vpow.pop %v974
    %v976 = vadd.f32 %v945, 1.0
    %v977 = vadd.f32 %v947, 1.0
    %v978 = vadd.f32 %v949, 1.0
    %v979 = vadd.f32 %v951, 1.0
    %v980 = vadd.f32 %v953, 1.0
    %v981 = vadd.f32 %v955, 1.0
    %v982 = vadd.f32 %v957, 1.0
    %v983 = vadd.f32 %v959, 1.0
    %v984 = vadd.f32 %v961, 1.0
    %v985 = vadd.f32 %v963, 1.0
    %v986 = vadd.f32 %v965, 1.0
    %v987 = vadd.f32 %v967, 1.0
    %v988 = vadd.f32 %v969, 1.0
    %v989 = vadd.f32 %v971, 1.0
    %v990 = vadd.f32 %v973, 1.0
    %v991 = vadd.f32 %v975, 1.0
    %v992 = vrcp.pop %v976
    %v993 = vmul.f32 1.0, %v992
    %v994 = vrcp.pop %v977
    %v995 = vmul.f32 1.0, %v994
    %v996 = vrcp.pop %v978
    %v997 = vmul.f32 1.0, %v996
    %v998 = vrcp.pop %v979
    %v999 = vmul.f32 1.0, %v998
    %v1000 = vrcp.pop %v980
    %v1001 = vmul.f32 1.0, %v1000
    %v1002 = vrcp.pop %v981
    %v1003 = vmul.f32 1.0, %v1002
    %v1004 = vrcp.pop %v982
    %v1005 = vmul.f32 1.0, %v1004
    %v1006 = vrcp.pop %v983
    %v1007 = vmul.f32 1.0, %v1006
    %v1008 = vrcp.pop %v984
    %v1009 = vmul.f32 1.0, %v1008
    %v1010 = vrcp.pop %v985
    %v1011 = vmul.f32 1.0, %v1010
    %v1012 = vrcp.pop %v986
    %v1013 = vmul.f32 1.0, %v1012
    %v1014 = vrcp.pop %v987
    %v1015 = vmul.f32 1.0, %v1014
    %v1016 = vrcp.pop %v988
    %v1017 = vmul.f32 1.0, %v1016
    %v1018 = vrcp.pop %v989
    %v1019 = vmul.f32 1.0, %v1018
    %v1020 = vrcp.pop %v990
    %v1021 = vmul.f32 1.0, %v1020
    %v1022 = vrcp.pop %v991
    %v1023 = vmul.f32 1.0, %v1022
    %v1024 = vmul.f32 %v881, %v912
    %v1025 = vmul.f32 %v883, %v913
    %v1026 = vmul.f32 %v885, %v914
    %v1027 = vmul.f32 %v887, %v915
    %v1028 = vmul.f32 %v889, %v916
    %v1029 = vmul.f32 %v891, %v917
    %v1030 = vmul.f32 %v893, %v918
    %v1031 = vmul.f32 %v895, %v919
    %v1032 = vmul.f32 %v897, %v920
    %v1033 = vmul.f32 %v899, %v921
    %v1034 = vmul.f32 %v901, %v922
    %v1035 = vmul.f32 %v903, %v923
    %v1036 = vmul.f32 %v905, %v924
    %v1037 = vmul.f32 %v907, %v925
    %v1038 = vmul.f32 %v909, %v926
    %v1039 = vmul.f32 %v911, %v927
    %v1040 = vtanh.pop %v1024
    %v1041 = vtanh.pop %v1025
    %v1042 = vtanh.pop %v1026
    %v1043 = vtanh.pop %v1027
    %v1044 = vtanh.pop %v1028
    %v1045 = vtanh.pop %v1029
    %v1046 = vtanh.pop %v1030
    %v1047 = vtanh.pop %v1031
    %v1048 = vtanh.pop %v1032
    %v1049 = vtanh.pop %v1033
    %v1050 = vtanh.pop %v1034
    %v1051 = vtanh.pop %v1035
    %v1052 = vtanh.pop %v1036
    %v1053 = vtanh.pop %v1037
    %v1054 = vtanh.pop %v1038
    %v1055 = vtanh.pop %v1039
    %v1056 = vmul.f32 %v993, %v1040
    %v1057 = vmul.f32 %v995, %v1041
    %v1058 = vmul.f32 %v997, %v1042
    %v1059 = vmul.f32 %v999, %v1043
    %v1060 = vmul.f32 %v1001, %v1044
    %v1061 = vmul.f32 %v1003, %v1045
    %v1062 = vmul.f32 %v1005, %v1046
    %v1063 = vmul.f32 %v1007, %v1047
    %v1064 = vmul.f32 %v1009, %v1048
    %v1065 = vmul.f32 %v1011, %v1049
    %v1066 = vmul.f32 %v1013, %v1050
    %v1067 = vmul.f32 %v1015, %v1051
    %v1068 = vmul.f32 %v1017, %v1052
    %v1069 = vmul.f32 %v1019, %v1053
    %v1070 = vmul.f32 %v1021, %v1054
    %v1071 = vmul.f32 %v1023, %v1055
    %v1072 = vpack.c.bf16 %v1057, %v1056
    %v1073 = vpack.c.bf16 %v1059, %v1058
    %v1074 = vpack.c.bf16 %v1061, %v1060
    %v1075 = vpack.c.bf16 %v1063, %v1062
    %v1076 = vpack.c.bf16 %v1065, %v1064
    %v1077 = vpack.c.bf16 %v1067, %v1066
    %v1078 = vpack.c.bf16 %v1069, %v1068
    %v1079 = vpack.c.bf16 %v1071, %v1070
    %v1080 = vld [vmem:[%s3] sm:$0xf]
    %v1081 = vld [vmem:[%s3 + $0x4] sm:$0xf]
    %v1082 = vld [vmem:[%s3 + $0x8] sm:$0xf]
    %v1083 = vld [vmem:[%s3 + $0xc] sm:$0xf]
    %v1084 = vld [vmem:[%s3 + $0x10] sm:$0xf]
    %v1085 = vld [vmem:[%s3 + $0x14] sm:$0xf]
    %v1086 = vld [vmem:[%s3 + $0x18] sm:$0xf]
    %v1087 = vld [vmem:[%s3 + $0x1c] sm:$0xf]
    %v1088 = vld [vmem:[%s3 + $0x20] sm:$0xf]
    %v1089 = vld [vmem:[%s3 + $0x24] sm:$0xf]
    %v1090 = vld [vmem:[%s3 + $0x28] sm:$0xf]
    %v1091 = vld [vmem:[%s3 + $0x2c] sm:$0xf]
    %v1092 = vld [vmem:[%s3 + $0x30] sm:$0xf]
    %v1093 = vld [vmem:[%s3 + $0x34] sm:$0xf]
    %v1094 = vld [vmem:[%s3 + $0x38] sm:$0xf]
    %v1095 = vld [vmem:[%s3 + $0x3c] sm:$0xf]
    %v1096 = vld [vmem:[%s3 + $0x40] sm:$0xf]
    %v1097 = vld [vmem:[%s3 + $0x44] sm:$0xf]
    %v1098 = vld [vmem:[%s3 + $0x48] sm:$0xf]
    %v1099 = vld [vmem:[%s3 + $0x4c] sm:$0xf]
    %v1100 = vld [vmem:[%s3 + $0x50] sm:$0xf]
    %v1101 = vld [vmem:[%s3 + $0x54] sm:$0xf]
    %v1102 = vld [vmem:[%s3 + $0x58] sm:$0xf]
    %v1103 = vld [vmem:[%s3 + $0x5c] sm:$0xf]
    %v1104 = vld [vmem:[%s3 + $0x60] sm:$0xf]
    %v1105 = vld [vmem:[%s3 + $0x64] sm:$0xf]
    %v1106 = vld [vmem:[%s3 + $0x68] sm:$0xf]
    %v1107 = vld [vmem:[%s3 + $0x6c] sm:$0xf]
    %v1108 = vld [vmem:[%s3 + $0x70] sm:$0xf]
    %v1109 = vld [vmem:[%s3 + $0x74] sm:$0xf]
    %v1110 = vld [vmem:[%s3 + $0x78] sm:$0xf]
    %v1111 = vld [vmem:[%s3 + $0x7c] sm:$0xf]
    %v1112 = vld [vmem:[%s3 + $0x80] sm:$0xf]
    %v1113 = vld [vmem:[%s3 + $0x84] sm:$0xf]
    %v1114 = vld [vmem:[%s3 + $0x88] sm:$0xf]
    %v1115 = vld [vmem:[%s3 + $0x8c] sm:$0xf]
    %v1116 = vld [vmem:[%s3 + $0x90] sm:$0xf]
    %v1117 = vld [vmem:[%s3 + $0x94] sm:$0xf]
    %v1118 = vld [vmem:[%s3 + $0x98] sm:$0xf]
    %v1119 = vld [vmem:[%s3 + $0x9c] sm:$0xf]
    %v1120 = vld [vmem:[%s3 + $0xa0] sm:$0xf]
    %v1121 = vld [vmem:[%s3 + $0xa4] sm:$0xf]
    %v1122 = vld [vmem:[%s3 + $0xa8] sm:$0xf]
    %v1123 = vld [vmem:[%s3 + $0xac] sm:$0xf]
    %v1124 = vld [vmem:[%s3 + $0xb0] sm:$0xf]
    %v1125 = vld [vmem:[%s3 + $0xb4] sm:$0xf]
    %v1126 = vld [vmem:[%s3 + $0xb8] sm:$0xf]
    %v1127 = vld [vmem:[%s3 + $0xbc] sm:$0xf]
    %v1128 = vld [vmem:[%s4] sm:$0xff]
    %v1129 = vld [vmem:[%s4 + $0x8] sm:$0xff]
    %v1130 = vld [vmem:[%s4 + $0x10] sm:$0xff]
    %v1131 = vld [vmem:[%s4 + $0x18] sm:$0xff]
    %v1132 = vld [vmem:[%s4 + $0x20] sm:$0xff]
    %v1133 = vld [vmem:[%s4 + $0x28] sm:$0xff]
    %v1134 = vld [vmem:[%s4 + $0x30] sm:$0xff]
    %v1135 = vld [vmem:[%s4 + $0x38] sm:$0xff]
    %v1136 = vld [vmem:[%s4 + $0x40] sm:$0xff]
    %v1137 = vld [vmem:[%s4 + $0x48] sm:$0xff]
    %v1138 = vld [vmem:[%s4 + $0x50] sm:$0xff]
    %v1139 = vld [vmem:[%s4 + $0x58] sm:$0xff]
    %v1140 = vld [vmem:[%s4 + $0x60] sm:$0xff]
    %v1141 = vld [vmem:[%s4 + $0x68] sm:$0xff]
    %v1142 = vld [vmem:[%s4 + $0x70] sm:$0xff]
    %v1143 = vld [vmem:[%s4 + $0x78] sm:$0xff]
    %v1144 = vld [vmem:[%s4 + $0x80] sm:$0xff]
    %v1145 = vld [vmem:[%s4 + $0x88] sm:$0xff]
    %v1146 = vld [vmem:[%s4 + $0x90] sm:$0xff]
    %v1147 = vld [vmem:[%s4 + $0x98] sm:$0xff]
    %v1148 = vld [vmem:[%s4 + $0xa0] sm:$0xff]
    %v1149 = vld [vmem:[%s4 + $0xa8] sm:$0xff]
    %v1150 = vld [vmem:[%s4 + $0xb0] sm:$0xff]
    %v1151 = vld [vmem:[%s4 + $0xb8] sm:$0xff]
    %v1152 = vld [vmem:[%s4 + $0xc0] sm:$0xff]
    %v1153 = vld [vmem:[%s4 + $0xc8] sm:$0xff]
    %v1154 = vld [vmem:[%s4 + $0xd0] sm:$0xff]
    %v1155 = vld [vmem:[%s4 + $0xd8] sm:$0xff]
    %v1156 = vld [vmem:[%s4 + $0xe0] sm:$0xff]
    %v1157 = vld [vmem:[%s4 + $0xe8] sm:$0xff]
    %v1158 = vld [vmem:[%s4 + $0xf0] sm:$0xff]
    %v1159 = vld [vmem:[%s4 + $0xf8] sm:$0xff]
    %v1160 = vld [vmem:[%s4 + $0x100] sm:$0xff]
    %v1161 = vld [vmem:[%s4 + $0x108] sm:$0xff]
    %v1162 = vld [vmem:[%s4 + $0x110] sm:$0xff]
    %v1163 = vld [vmem:[%s4 + $0x118] sm:$0xff]
    %v1164 = vld [vmem:[%s4 + $0x120] sm:$0xff]
    %v1165 = vld [vmem:[%s4 + $0x128] sm:$0xff]
    %v1166 = vld [vmem:[%s4 + $0x130] sm:$0xff]
    %v1167 = vld [vmem:[%s4 + $0x138] sm:$0xff]
    %v1168 = vld [vmem:[%s4 + $0x140] sm:$0xff]
    %v1169 = vld [vmem:[%s4 + $0x148] sm:$0xff]
    %v1170 = vld [vmem:[%s4 + $0x150] sm:$0xff]
    %v1171 = vld [vmem:[%s4 + $0x158] sm:$0xff]
    %v1172 = vld [vmem:[%s4 + $0x160] sm:$0xff]
    %v1173 = vld [vmem:[%s4 + $0x168] sm:$0xff]
    %v1174 = vld [vmem:[%s4 + $0x170] sm:$0xff]
    %v1175 = vld [vmem:[%s4 + $0x178] sm:$0xff]
    %1177 = vset.pattern.permute.xlu0 0
    %1178 = vperm.xlu0 %1177, %v1128
    %v1179 = vpop.permute.xlu0 %1178
    %1182 = vset.pattern.permute.xlu0 0
    %1183 = vperm.xlu0 %1182, %v1129
    %v1184 = vpop.permute.xlu0 %1183
    %1187 = vset.pattern.permute.xlu0 0
    %1188 = vperm.xlu0 %1187, %v1130
    %v1189 = vpop.permute.xlu0 %1188
    %1192 = vset.pattern.permute.xlu0 0
    %1193 = vperm.xlu0 %1192, %v1131
    %v1194 = vpop.permute.xlu0 %1193
    %1197 = vset.pattern.permute.xlu0 0
    %1198 = vperm.xlu0 %1197, %v1132
    %v1199 = vpop.permute.xlu0 %1198
    %1202 = vset.pattern.permute.xlu0 0
    %1203 = vperm.xlu0 %1202, %v1133
    %v1204 = vpop.permute.xlu0 %1203
    %1207 = vset.pattern.permute.xlu0 0
    %1208 = vperm.xlu0 %1207, %v1134
    %v1209 = vpop.permute.xlu0 %1208
    %1212 = vset.pattern.permute.xlu0 0
    %1213 = vperm.xlu0 %1212, %v1135
    %v1214 = vpop.permute.xlu0 %1213
    %1217 = vset.pattern.permute.xlu0 0
    %1218 = vperm.xlu0 %1217, %v1136
    %v1219 = vpop.permute.xlu0 %1218
    %1222 = vset.pattern.permute.xlu0 0
    %1223 = vperm.xlu0 %1222, %v1137
    %v1224 = vpop.permute.xlu0 %1223
    %1227 = vset.pattern.permute.xlu0 0
    %1228 = vperm.xlu0 %1227, %v1138
    %v1229 = vpop.permute.xlu0 %1228
    %1232 = vset.pattern.permute.xlu0 0
    %1233 = vperm.xlu0 %1232, %v1139
    %v1234 = vpop.permute.xlu0 %1233
    %1237 = vset.pattern.permute.xlu0 0
    %1238 = vperm.xlu0 %1237, %v1140
    %v1239 = vpop.permute.xlu0 %1238
    %1242 = vset.pattern.permute.xlu0 0
    %1243 = vperm.xlu0 %1242, %v1141
    %v1244 = vpop.permute.xlu0 %1243
    %1247 = vset.pattern.permute.xlu0 0
    %1248 = vperm.xlu0 %1247, %v1142
    %v1249 = vpop.permute.xlu0 %1248
    %1252 = vset.pattern.permute.xlu0 0
    %1253 = vperm.xlu0 %1252, %v1143
    %v1254 = vpop.permute.xlu0 %1253
    %1257 = vset.pattern.permute.xlu0 0
    %1258 = vperm.xlu0 %1257, %v1144
    %v1259 = vpop.permute.xlu0 %1258
    %1262 = vset.pattern.permute.xlu0 0
    %1263 = vperm.xlu0 %1262, %v1145
    %v1264 = vpop.permute.xlu0 %1263
    %1267 = vset.pattern.permute.xlu0 0
    %1268 = vperm.xlu0 %1267, %v1146
    %v1269 = vpop.permute.xlu0 %1268
    %1272 = vset.pattern.permute.xlu0 0
    %1273 = vperm.xlu0 %1272, %v1147
    %v1274 = vpop.permute.xlu0 %1273
    %1277 = vset.pattern.permute.xlu0 0
    %1278 = vperm.xlu0 %1277, %v1148
    %v1279 = vpop.permute.xlu0 %1278
    %1282 = vset.pattern.permute.xlu0 0
    %1283 = vperm.xlu0 %1282, %v1149
    %v1284 = vpop.permute.xlu0 %1283
    %1287 = vset.pattern.permute.xlu0 0
    %1288 = vperm.xlu0 %1287, %v1150
    %v1289 = vpop.permute.xlu0 %1288
    %1292 = vset.pattern.permute.xlu0 0
    %1293 = vperm.xlu0 %1292, %v1151
    %v1294 = vpop.permute.xlu0 %1293
    %1297 = vset.pattern.permute.xlu0 0
    %1298 = vperm.xlu0 %1297, %v1152
    %v1299 = vpop.permute.xlu0 %1298
    %1302 = vset.pattern.permute.xlu0 0
    %1303 = vperm.xlu0 %1302, %v1153
    %v1304 = vpop.permute.xlu0 %1303
    %1307 = vset.pattern.permute.xlu0 0
    %1308 = vperm.xlu0 %1307, %v1154
    %v1309 = vpop.permute.xlu0 %1308
    %1312 = vset.pattern.permute.xlu0 0
    %1313 = vperm.xlu0 %1312, %v1155
    %v1314 = vpop.permute.xlu0 %1313
    %1317 = vset.pattern.permute.xlu0 0
    %1318 = vperm.xlu0 %1317, %v1156
    %v1319 = vpop.permute.xlu0 %1318
    %1322 = vset.pattern.permute.xlu0 0
    %1323 = vperm.xlu0 %1322, %v1157
    %v1324 = vpop.permute.xlu0 %1323
    %1327 = vset.pattern.permute.xlu0 0
    %1328 = vperm.xlu0 %1327, %v1158
    %v1329 = vpop.permute.xlu0 %1328
    %1332 = vset.pattern.permute.xlu0 0
    %1333 = vperm.xlu0 %1332, %v1159
    %v1334 = vpop.permute.xlu0 %1333
    %1337 = vset.pattern.permute.xlu0 0
    %1338 = vperm.xlu0 %1337, %v1160
    %v1339 = vpop.permute.xlu0 %1338
    %1342 = vset.pattern.permute.xlu0 0
    %1343 = vperm.xlu0 %1342, %v1161
    %v1344 = vpop.permute.xlu0 %1343
    %1347 = vset.pattern.permute.xlu0 0
    %1348 = vperm.xlu0 %1347, %v1162
    %v1349 = vpop.permute.xlu0 %1348
    %1352 = vset.pattern.permute.xlu0 0
    %1353 = vperm.xlu0 %1352, %v1163
    %v1354 = vpop.permute.xlu0 %1353
    %1357 = vset.pattern.permute.xlu0 0
    %1358 = vperm.xlu0 %1357, %v1164
    %v1359 = vpop.permute.xlu0 %1358
    %1362 = vset.pattern.permute.xlu0 0
    %1363 = vperm.xlu0 %1362, %v1165
    %v1364 = vpop.permute.xlu0 %1363
    %1367 = vset.pattern.permute.xlu0 0
    %1368 = vperm.xlu0 %1367, %v1166
    %v1369 = vpop.permute.xlu0 %1368
    %1372 = vset.pattern.permute.xlu0 0
    %1373 = vperm.xlu0 %1372, %v1167
    %v1374 = vpop.permute.xlu0 %1373
    %1377 = vset.pattern.permute.xlu0 0
    %1378 = vperm.xlu0 %1377, %v1168
    %v1379 = vpop.permute.xlu0 %1378
    %1382 = vset.pattern.permute.xlu0 0
    %1383 = vperm.xlu0 %1382, %v1169
    %v1384 = vpop.permute.xlu0 %1383
    %1387 = vset.pattern.permute.xlu0 0
    %1388 = vperm.xlu0 %1387, %v1170
    %v1389 = vpop.permute.xlu0 %1388
    %1392 = vset.pattern.permute.xlu0 0
    %1393 = vperm.xlu0 %1392, %v1171
    %v1394 = vpop.permute.xlu0 %1393
    %1397 = vset.pattern.permute.xlu0 0
    %1398 = vperm.xlu0 %1397, %v1172
    %v1399 = vpop.permute.xlu0 %1398
    %1402 = vset.pattern.permute.xlu0 0
    %1403 = vperm.xlu0 %1402, %v1173
    %v1404 = vpop.permute.xlu0 %1403
    %1407 = vset.pattern.permute.xlu0 0
    %1408 = vperm.xlu0 %1407, %v1174
    %v1409 = vpop.permute.xlu0 %1408
    %1412 = vset.pattern.permute.xlu0 0
    %1413 = vperm.xlu0 %1412, %v1175
    %v1414 = vpop.permute.xlu0 %1413
    %v1464 = vunpack.c.l.b16 %v1080
    %v1465 = vunpack.c.l.b16 %v1081
    %v1466 = vunpack.c.l.b16 %v1082
    %v1467 = vunpack.c.l.b16 %v1083
    %v1468 = vunpack.c.l.b16 %v1084
    %v1469 = vunpack.c.l.b16 %v1085
    %v1470 = vunpack.c.l.b16 %v1086
    %v1471 = vunpack.c.l.b16 %v1087
    %v1472 = vunpack.c.l.b16 %v1088
    %v1473 = vunpack.c.l.b16 %v1089
    %v1474 = vunpack.c.l.b16 %v1090
    %v1475 = vunpack.c.l.b16 %v1091
    %v1476 = vunpack.c.l.b16 %v1092
    %v1477 = vunpack.c.l.b16 %v1093
    %v1478 = vunpack.c.l.b16 %v1094
    %v1479 = vunpack.c.l.b16 %v1095
    %v1480 = vunpack.c.l.b16 %v1096
    %v1481 = vunpack.c.l.b16 %v1097
    %v1482 = vunpack.c.l.b16 %v1098
    %v1483 = vunpack.c.l.b16 %v1099
    %v1484 = vunpack.c.l.b16 %v1100
    %v1485 = vunpack.c.l.b16 %v1101
    %v1486 = vunpack.c.l.b16 %v1102
    %v1487 = vunpack.c.l.b16 %v1103
    %v1488 = vunpack.c.l.b16 %v1104
    %v1489 = vunpack.c.l.b16 %v1105
    %v1490 = vunpack.c.l.b16 %v1106
    %v1491 = vunpack.c.l.b16 %v1107
    %v1492 = vunpack.c.l.b16 %v1108
    %v1493 = vunpack.c.l.b16 %v1109
    %v1494 = vunpack.c.l.b16 %v1110
    %v1495 = vunpack.c.l.b16 %v1111
    %v1496 = vunpack.c.l.b16 %v1112
    %v1497 = vunpack.c.l.b16 %v1113
    %v1498 = vunpack.c.l.b16 %v1114
    %v1499 = vunpack.c.l.b16 %v1115
    %v1500 = vunpack.c.l.b16 %v1116
    %v1501 = vunpack.c.l.b16 %v1117
    %v1502 = vunpack.c.l.b16 %v1118
    %v1503 = vunpack.c.l.b16 %v1119
    %v1504 = vunpack.c.l.b16 %v1120
    %v1505 = vunpack.c.l.b16 %v1121
    %v1506 = vunpack.c.l.b16 %v1122
    %v1507 = vunpack.c.l.b16 %v1123
    %v1508 = vunpack.c.l.b16 %v1124
    %v1509 = vunpack.c.l.b16 %v1125
    %v1510 = vunpack.c.l.b16 %v1126
    %v1511 = vunpack.c.l.b16 %v1127
    %v1512 = vpack.c.b16 %v1465, %v1464
    %v1513 = vpack.c.b16 %v1467, %v1466
    %v1514 = vpack.c.b16 %v1469, %v1468
    %v1515 = vpack.c.b16 %v1471, %v1470
    %v1516 = vpack.c.b16 %v1473, %v1472
    %v1517 = vpack.c.b16 %v1475, %v1474
    %v1518 = vpack.c.b16 %v1477, %v1476
    %v1519 = vpack.c.b16 %v1479, %v1478
    %v1520 = vpack.c.b16 %v1481, %v1480
    %v1521 = vpack.c.b16 %v1483, %v1482
    %v1522 = vpack.c.b16 %v1485, %v1484
    %v1523 = vpack.c.b16 %v1487, %v1486
    %v1524 = vpack.c.b16 %v1489, %v1488
    %v1525 = vpack.c.b16 %v1491, %v1490
    %v1526 = vpack.c.b16 %v1493, %v1492
    %v1527 = vpack.c.b16 %v1495, %v1494
    %v1528 = vpack.c.b16 %v1497, %v1496
    %v1529 = vpack.c.b16 %v1499, %v1498
    %v1530 = vpack.c.b16 %v1501, %v1500
    %v1531 = vpack.c.b16 %v1503, %v1502
    %v1532 = vpack.c.b16 %v1505, %v1504
    %v1533 = vpack.c.b16 %v1507, %v1506
    %v1534 = vpack.c.b16 %v1509, %v1508
    %v1535 = vpack.c.b16 %v1511, %v1510
    %1560 = vmatprep.subr.bf16.mxu0 0
    %1561 = vmatpush1.bf16.msra.mxu0 %v1079
    %1562 = vmatprep.subr.bf16.mxu0 0
    %1563 = vmatpush1.bf16.msra.mxu0 %v1078
    %1564 = vmatprep.subr.bf16.mxu0 0
    %1565 = vmatpush1.bf16.msra.mxu0 %v1077
    %1566 = vmatprep.subr.bf16.mxu0 0
    %1567 = vmatpush1.bf16.msra.mxu0 %v1076
    %1568 = vmatprep.subr.bf16.mxu0 0
    %1569 = vmatpush1.bf16.msra.mxu0 %v1075
    %1570 = vmatprep.subr.bf16.mxu0 0
    %1571 = vmatpush1.bf16.msra.mxu0 %v1074
    %1572 = vmatprep.subr.bf16.mxu0 0
    %1573 = vmatpush1.bf16.msra.mxu0 %v1073
    %1574 = vmatprep.subr.bf16.mxu0 0
    %1575 = vmatpush1.bf16.msra.mxu0 %v1072
    %1576 = vmatprep.subr.bf16.mxu0 0
    %1577 = vmatpush2.bf16.msra.mxu0 0
    %1578 = vmatprep.subr.bf16.mxu0 0
    %1579 = vmatpush2.bf16.msra.mxu0 0
    %1580 = vmatprep.subr.bf16.mxu0 0
    %1581 = vmatpush2.bf16.msra.mxu0 0
    %1582 = vmatprep.subr.bf16.mxu0 0
    %1583 = vmatpush2.bf16.msra.mxu0 0
    %1584 = vmatprep.subr.bf16.mxu0 0
    %1585 = vmatpush2.bf16.msra.mxu0 0
    %1586 = vmatprep.subr.bf16.mxu0 0
    %1587 = vmatpush2.bf16.msra.mxu0 0
    %1588 = vmatprep.subr.bf16.mxu0 0
    %1589 = vmatpush2.bf16.msra.mxu0 0
    %1590 = vmatprep.subr.bf16.mxu0 0
    %1591 = vmatpush2.bf16.msra.mxu0 0
    %1592 = vmatprep.mubr.bf16.mxu0 0
    %1593 = vmatmul.mubr.bf16.gmra.mxu0 %v1512
    %v1594 = vpop.f32.mrf.mxu0
    %v1595 = vadd.f32 %v1179, %v1594
    %v1596 = vpop.f32.mrf.mxu0
    %v1597 = vpop.f32.mrf.mxu0
    %v1598 = vadd.f32 %v1184, %v1597
    %v1599 = vpop.f32.mrf.mxu0
    %1600 = vmatprep.mubr.bf16.mxu0 0
    %1601 = vmatmul.mubr.bf16.gmra.mxu0 %v1513
    %v1602 = vpop.f32.mrf.mxu0
    %v1603 = vadd.f32 %v1189, %v1602
    %v1604 = vpop.f32.mrf.mxu0
    %v1605 = vpop.f32.mrf.mxu0
    %v1606 = vadd.f32 %v1194, %v1605
    %v1607 = vpop.f32.mrf.mxu0
    %1608 = vmatprep.mubr.bf16.mxu0 0
    %1609 = vmatmul.mubr.bf16.gmra.mxu0 %v1514
    %v1610 = vpop.f32.mrf.mxu0
    %v1611 = vadd.f32 %v1199, %v1610
    %v1612 = vpop.f32.mrf.mxu0
    %v1613 = vpop.f32.mrf.mxu0
    %v1614 = vadd.f32 %v1204, %v1613
    %v1615 = vpop.f32.mrf.mxu0
    %1616 = vmatprep.mubr.bf16.mxu0 0
    %1617 = vmatmul.mubr.bf16.gmra.mxu0 %v1515
    %v1618 = vpop.f32.mrf.mxu0
    %v1619 = vadd.f32 %v1209, %v1618
    %v1620 = vpop.f32.mrf.mxu0
    %v1621 = vpop.f32.mrf.mxu0
    %v1622 = vadd.f32 %v1214, %v1621
    %v1623 = vpop.f32.mrf.mxu0
    %1624 = vmatprep.mubr.bf16.mxu0 0
    %1625 = vmatmul.mubr.bf16.gmra.mxu0 %v1516
    %v1626 = vpop.f32.mrf.mxu0
    %v1627 = vadd.f32 %v1219, %v1626
    %v1628 = vpop.f32.mrf.mxu0
    %v1629 = vpop.f32.mrf.mxu0
    %v1630 = vadd.f32 %v1224, %v1629
    %v1631 = vpop.f32.mrf.mxu0
    %1632 = vmatprep.mubr.bf16.mxu0 0
    %1633 = vmatmul.mubr.bf16.gmra.mxu0 %v1517
    %v1634 = vpop.f32.mrf.mxu0
    %v1635 = vadd.f32 %v1229, %v1634
    %v1636 = vpop.f32.mrf.mxu0
    %v1637 = vpop.f32.mrf.mxu0
    %v1638 = vadd.f32 %v1234, %v1637
    %v1639 = vpop.f32.mrf.mxu0
    %1640 = vmatprep.mubr.bf16.mxu0 0
    %1641 = vmatmul.mubr.bf16.gmra.mxu0 %v1518
    %v1642 = vpop.f32.mrf.mxu0
    %v1643 = vadd.f32 %v1239, %v1642
    %v1644 = vpop.f32.mrf.mxu0
    %v1645 = vpop.f32.mrf.mxu0
    %v1646 = vadd.f32 %v1244, %v1645
    %v1647 = vpop.f32.mrf.mxu0
    %1648 = vmatprep.mubr.bf16.mxu0 0
    %1649 = vmatmul.mubr.bf16.gmra.mxu0 %v1519
    %v1650 = vpop.f32.mrf.mxu0
    %v1651 = vadd.f32 %v1249, %v1650
    %v1652 = vpop.f32.mrf.mxu0
    %v1653 = vpop.f32.mrf.mxu0
    %v1654 = vadd.f32 %v1254, %v1653
    %v1655 = vpop.f32.mrf.mxu0
    %1656 = vmatprep.mubr.bf16.mxu0 0
    %1657 = vmatmul.mubr.bf16.gmra.mxu0 %v1520
    %v1658 = vpop.f32.mrf.mxu0
    %v1659 = vadd.f32 %v1259, %v1658
    %v1660 = vpop.f32.mrf.mxu0
    %v1661 = vpop.f32.mrf.mxu0
    %v1662 = vadd.f32 %v1264, %v1661
    %v1663 = vpop.f32.mrf.mxu0
    %1664 = vmatprep.mubr.bf16.mxu0 0
    %1665 = vmatmul.mubr.bf16.gmra.mxu0 %v1521
    %v1666 = vpop.f32.mrf.mxu0
    %v1667 = vadd.f32 %v1269, %v1666
    %v1668 = vpop.f32.mrf.mxu0
    %v1669 = vpop.f32.mrf.mxu0
    %v1670 = vadd.f32 %v1274, %v1669
    %v1671 = vpop.f32.mrf.mxu0
    %1672 = vmatprep.mubr.bf16.mxu0 0
    %1673 = vmatmul.mubr.bf16.gmra.mxu0 %v1522
    %v1674 = vpop.f32.mrf.mxu0
    %v1675 = vadd.f32 %v1279, %v1674
    %v1676 = vpop.f32.mrf.mxu0
    %v1677 = vpop.f32.mrf.mxu0
    %v1678 = vadd.f32 %v1284, %v1677
    %v1679 = vpop.f32.mrf.mxu0
    %1680 = vmatprep.mubr.bf16.mxu0 0
    %1681 = vmatmul.mubr.bf16.gmra.mxu0 %v1523
    %v1682 = vpop.f32.mrf.mxu0
    %v1683 = vadd.f32 %v1289, %v1682
    %v1684 = vpop.f32.mrf.mxu0
    %v1685 = vpop.f32.mrf.mxu0
    %v1686 = vadd.f32 %v1294, %v1685
    %v1687 = vpop.f32.mrf.mxu0
    %1688 = vmatprep.mubr.bf16.mxu0 0
    %1689 = vmatmul.mubr.bf16.gmra.mxu0 %v1524
    %v1690 = vpop.f32.mrf.mxu0
    %v1691 = vadd.f32 %v1299, %v1690
    %v1692 = vpop.f32.mrf.mxu0
    %v1693 = vpop.f32.mrf.mxu0
    %v1694 = vadd.f32 %v1304, %v1693
    %v1695 = vpop.f32.mrf.mxu0
    %1696 = vmatprep.mubr.bf16.mxu0 0
    %1697 = vmatmul.mubr.bf16.gmra.mxu0 %v1525
    %v1698 = vpop.f32.mrf.mxu0
    %v1699 = vadd.f32 %v1309, %v1698
    %v1700 = vpop.f32.mrf.mxu0
    %v1701 = vpop.f32.mrf.mxu0
    %v1702 = vadd.f32 %v1314, %v1701
    %v1703 = vpop.f32.mrf.mxu0
    %1704 = vmatprep.mubr.bf16.mxu0 0
    %1705 = vmatmul.mubr.bf16.gmra.mxu0 %v1526
    %v1706 = vpop.f32.mrf.mxu0
    %v1707 = vadd.f32 %v1319, %v1706
    %v1708 = vpop.f32.mrf.mxu0
    %v1709 = vpop.f32.mrf.mxu0
    %v1710 = vadd.f32 %v1324, %v1709
    %v1711 = vpop.f32.mrf.mxu0
    %1712 = vmatprep.mubr.bf16.mxu0 0
    %1713 = vmatmul.mubr.bf16.gmra.mxu0 %v1527
    %v1714 = vpop.f32.mrf.mxu0
    %v1715 = vadd.f32 %v1329, %v1714
    %v1716 = vpop.f32.mrf.mxu0
    %v1717 = vpop.f32.mrf.mxu0
    %v1718 = vadd.f32 %v1334, %v1717
    %v1719 = vpop.f32.mrf.mxu0
    %1720 = vmatprep.mubr.bf16.mxu0 0
    %1721 = vmatmul.mubr.bf16.gmra.mxu0 %v1528
    %v1722 = vpop.f32.mrf.mxu0
    %v1723 = vadd.f32 %v1339, %v1722
    %v1724 = vpop.f32.mrf.mxu0
    %v1725 = vpop.f32.mrf.mxu0
    %v1726 = vadd.f32 %v1344, %v1725
    %v1727 = vpop.f32.mrf.mxu0
    %1728 = vmatprep.mubr.bf16.mxu0 0
    %1729 = vmatmul.mubr.bf16.gmra.mxu0 %v1529
    %v1730 = vpop.f32.mrf.mxu0
    %v1731 = vadd.f32 %v1349, %v1730
    %v1732 = vpop.f32.mrf.mxu0
    %v1733 = vpop.f32.mrf.mxu0
    %v1734 = vadd.f32 %v1354, %v1733
    %v1735 = vpop.f32.mrf.mxu0
    %1736 = vmatprep.mubr.bf16.mxu0 0
    %1737 = vmatmul.mubr.bf16.gmra.mxu0 %v1530
    %v1738 = vpop.f32.mrf.mxu0
    %v1739 = vadd.f32 %v1359, %v1738
    %v1740 = vpop.f32.mrf.mxu0
    %v1741 = vpop.f32.mrf.mxu0
    %v1742 = vadd.f32 %v1364, %v1741
    %v1743 = vpop.f32.mrf.mxu0
    %1744 = vmatprep.mubr.bf16.mxu0 0
    %1745 = vmatmul.mubr.bf16.gmra.mxu0 %v1531
    %v1746 = vpop.f32.mrf.mxu0
    %v1747 = vadd.f32 %v1369, %v1746
    %v1748 = vpop.f32.mrf.mxu0
    %v1749 = vpop.f32.mrf.mxu0
    %v1750 = vadd.f32 %v1374, %v1749
    %v1751 = vpop.f32.mrf.mxu0
    %1752 = vmatprep.mubr.bf16.mxu0 0
    %1753 = vmatmul.mubr.bf16.gmra.mxu0 %v1532
    %v1754 = vpop.f32.mrf.mxu0
    %v1755 = vadd.f32 %v1379, %v1754
    %v1756 = vpop.f32.mrf.mxu0
    %v1757 = vpop.f32.mrf.mxu0
    %v1758 = vadd.f32 %v1384, %v1757
    %v1759 = vpop.f32.mrf.mxu0
    %1760 = vmatprep.mubr.bf16.mxu0 0
    %1761 = vmatmul.mubr.bf16.gmra.mxu0 %v1533
    %v1762 = vpop.f32.mrf.mxu0
    %v1763 = vadd.f32 %v1389, %v1762
    %v1764 = vpop.f32.mrf.mxu0
    %v1765 = vpop.f32.mrf.mxu0
    %v1766 = vadd.f32 %v1394, %v1765
    %v1767 = vpop.f32.mrf.mxu0
    %1768 = vmatprep.mubr.bf16.mxu0 0
    %1769 = vmatmul.mubr.bf16.gmra.mxu0 %v1534
    %v1770 = vpop.f32.mrf.mxu0
    %v1771 = vadd.f32 %v1399, %v1770
    %v1772 = vpop.f32.mrf.mxu0
    %v1773 = vpop.f32.mrf.mxu0
    %v1774 = vadd.f32 %v1404, %v1773
    %v1775 = vpop.f32.mrf.mxu0
    %1776 = vmatprep.mubr.bf16.mxu0 0
    %1777 = vmatmul.mubr.bf16.gmra.mxu0 %v1535
    %v1778 = vpop.f32.mrf.mxu0
    %v1779 = vadd.f32 %v1409, %v1778
    %v1780 = vpop.f32.mrf.mxu0
    %v1781 = vpop.f32.mrf.mxu0
    %v1782 = vadd.f32 %v1414, %v1781
    %v1783 = vpop.f32.mrf.mxu0
    %1784 = vdwg.mxu0
    %v1785 = vxor.u32 %v1595, 2147483648
    %v1786 = vxor.u32 %v1598, 2147483648
    %v1787 = vxor.u32 %v1603, 2147483648
    %v1788 = vxor.u32 %v1606, 2147483648
    %v1789 = vxor.u32 %v1611, 2147483648
    %v1790 = vxor.u32 %v1614, 2147483648
    %v1791 = vxor.u32 %v1619, 2147483648
    %v1792 = vxor.u32 %v1622, 2147483648
    %v1793 = vxor.u32 %v1627, 2147483648
    %v1794 = vxor.u32 %v1630, 2147483648
    %v1795 = vxor.u32 %v1635, 2147483648
    %v1796 = vxor.u32 %v1638, 2147483648
    %v1797 = vxor.u32 %v1643, 2147483648
    %v1798 = vxor.u32 %v1646, 2147483648
    %v1799 = vxor.u32 %v1651, 2147483648
    %v1800 = vxor.u32 %v1654, 2147483648
    %v1801 = vmul.f32 %v1785, 1.442695
    %v1802 = vpow.pop %v1801
    %v1803 = vmul.f32 %v1786, 1.442695
    %v1804 = vpow.pop %v1803
    %v1805 = vmul.f32 %v1787, 1.442695
    %v1806 = vpow.pop %v1805
    %v1807 = vmul.f32 %v1788, 1.442695
    %v1808 = vpow.pop %v1807
    %v1809 = vmul.f32 %v1789, 1.442695
    %v1810 = vpow.pop %v1809
    %v1811 = vmul.f32 %v1790, 1.442695
    %v1812 = vpow.pop %v1811
    %v1813 = vmul.f32 %v1791, 1.442695
    %v1814 = vpow.pop %v1813
    %v1815 = vmul.f32 %v1792, 1.442695
    %v1816 = vpow.pop %v1815
    %v1817 = vmul.f32 %v1793, 1.442695
    %v1818 = vpow.pop %v1817
    %v1819 = vmul.f32 %v1794, 1.442695
    %v1820 = vpow.pop %v1819
    %v1821 = vmul.f32 %v1795, 1.442695
    %v1822 = vpow.pop %v1821
    %v1823 = vmul.f32 %v1796, 1.442695
    %v1824 = vpow.pop %v1823
    %v1825 = vmul.f32 %v1797, 1.442695
    %v1826 = vpow.pop %v1825
    %v1827 = vmul.f32 %v1798, 1.442695
    %v1828 = vpow.pop %v1827
    %v1829 = vmul.f32 %v1799, 1.442695
    %v1830 = vpow.pop %v1829
    %v1831 = vmul.f32 %v1800, 1.442695
    %v1832 = vpow.pop %v1831
    %v1833 = vadd.f32 %v1802, 1.0
    %v1834 = vadd.f32 %v1804, 1.0
    %v1835 = vadd.f32 %v1806, 1.0
    %v1836 = vadd.f32 %v1808, 1.0
    %v1837 = vadd.f32 %v1810, 1.0
    %v1838 = vadd.f32 %v1812, 1.0
    %v1839 = vadd.f32 %v1814, 1.0
    %v1840 = vadd.f32 %v1816, 1.0
    %v1841 = vadd.f32 %v1818, 1.0
    %v1842 = vadd.f32 %v1820, 1.0
    %v1843 = vadd.f32 %v1822, 1.0
    %v1844 = vadd.f32 %v1824, 1.0
    %v1845 = vadd.f32 %v1826, 1.0
    %v1846 = vadd.f32 %v1828, 1.0
    %v1847 = vadd.f32 %v1830, 1.0
    %v1848 = vadd.f32 %v1832, 1.0
    %v1849 = vrcp.pop %v1833
    %v1850 = vmul.f32 1.0, %v1849
    %v1851 = vrcp.pop %v1834
    %v1852 = vmul.f32 1.0, %v1851
    %v1853 = vrcp.pop %v1835
    %v1854 = vmul.f32 1.0, %v1853
    %v1855 = vrcp.pop %v1836
    %v1856 = vmul.f32 1.0, %v1855
    %v1857 = vrcp.pop %v1837
    %v1858 = vmul.f32 1.0, %v1857
    %v1859 = vrcp.pop %v1838
    %v1860 = vmul.f32 1.0, %v1859
    %v1861 = vrcp.pop %v1839
    %v1862 = vmul.f32 1.0, %v1861
    %v1863 = vrcp.pop %v1840
    %v1864 = vmul.f32 1.0, %v1863
    %v1865 = vrcp.pop %v1841
    %v1866 = vmul.f32 1.0, %v1865
    %v1867 = vrcp.pop %v1842
    %v1868 = vmul.f32 1.0, %v1867
    %v1869 = vrcp.pop %v1843
    %v1870 = vmul.f32 1.0, %v1869
    %v1871 = vrcp.pop %v1844
    %v1872 = vmul.f32 1.0, %v1871
    %v1873 = vrcp.pop %v1845
    %v1874 = vmul.f32 1.0, %v1873
    %v1875 = vrcp.pop %v1846
    %v1876 = vmul.f32 1.0, %v1875
    %v1877 = vrcp.pop %v1847
    %v1878 = vmul.f32 1.0, %v1877
    %v1879 = vrcp.pop %v1848
    %v1880 = vmul.f32 1.0, %v1879
    %v1881 = vtanh.pop %v1659
    %v1882 = vtanh.pop %v1662
    %v1883 = vtanh.pop %v1667
    %v1884 = vtanh.pop %v1670
    %v1885 = vtanh.pop %v1675
    %v1886 = vtanh.pop %v1678
    %v1887 = vtanh.pop %v1683
    %v1888 = vtanh.pop %v1686
    %v1889 = vtanh.pop %v1691
    %v1890 = vtanh.pop %v1694
    %v1891 = vtanh.pop %v1699
    %v1892 = vtanh.pop %v1702
    %v1893 = vtanh.pop %v1707
    %v1894 = vtanh.pop %v1710
    %v1895 = vtanh.pop %v1715
    %v1896 = vtanh.pop %v1718
    %v1897 = vxor.u32 %v1723, 2147483648
    %v1898 = vxor.u32 %v1726, 2147483648
    %v1899 = vxor.u32 %v1731, 2147483648
    %v1900 = vxor.u32 %v1734, 2147483648
    %v1901 = vxor.u32 %v1739, 2147483648
    %v1902 = vxor.u32 %v1742, 2147483648
    %v1903 = vxor.u32 %v1747, 2147483648
    %v1904 = vxor.u32 %v1750, 2147483648
    %v1905 = vxor.u32 %v1755, 2147483648
    %v1906 = vxor.u32 %v1758, 2147483648
    %v1907 = vxor.u32 %v1763, 2147483648
    %v1908 = vxor.u32 %v1766, 2147483648
    %v1909 = vxor.u32 %v1771, 2147483648
    %v1910 = vxor.u32 %v1774, 2147483648
    %v1911 = vxor.u32 %v1779, 2147483648
    %v1912 = vxor.u32 %v1782, 2147483648
    %v1913 = vmul.f32 %v1897, 1.442695
    %v1914 = vpow.pop %v1913
    %v1915 = vmul.f32 %v1898, 1.442695
    %v1916 = vpow.pop %v1915
    %v1917 = vmul.f32 %v1899, 1.442695
    %v1918 = vpow.pop %v1917
    %v1919 = vmul.f32 %v1900, 1.442695
    %v1920 = vpow.pop %v1919
    %v1921 = vmul.f32 %v1901, 1.442695
    %v1922 = vpow.pop %v1921
    %v1923 = vmul.f32 %v1902, 1.442695
    %v1924 = vpow.pop %v1923
    %v1925 = vmul.f32 %v1903, 1.442695
    %v1926 = vpow.pop %v1925
    %v1927 = vmul.f32 %v1904, 1.442695
    %v1928 = vpow.pop %v1927
    %v1929 = vmul.f32 %v1905, 1.442695
    %v1930 = vpow.pop %v1929
    %v1931 = vmul.f32 %v1906, 1.442695
    %v1932 = vpow.pop %v1931
    %v1933 = vmul.f32 %v1907, 1.442695
    %v1934 = vpow.pop %v1933
    %v1935 = vmul.f32 %v1908, 1.442695
    %v1936 = vpow.pop %v1935
    %v1937 = vmul.f32 %v1909, 1.442695
    %v1938 = vpow.pop %v1937
    %v1939 = vmul.f32 %v1910, 1.442695
    %v1940 = vpow.pop %v1939
    %v1941 = vmul.f32 %v1911, 1.442695
    %v1942 = vpow.pop %v1941
    %v1943 = vmul.f32 %v1912, 1.442695
    %v1944 = vpow.pop %v1943
    %v1945 = vadd.f32 %v1914, 1.0
    %v1946 = vadd.f32 %v1916, 1.0
    %v1947 = vadd.f32 %v1918, 1.0
    %v1948 = vadd.f32 %v1920, 1.0
    %v1949 = vadd.f32 %v1922, 1.0
    %v1950 = vadd.f32 %v1924, 1.0
    %v1951 = vadd.f32 %v1926, 1.0
    %v1952 = vadd.f32 %v1928, 1.0
    %v1953 = vadd.f32 %v1930, 1.0
    %v1954 = vadd.f32 %v1932, 1.0
    %v1955 = vadd.f32 %v1934, 1.0
    %v1956 = vadd.f32 %v1936, 1.0
    %v1957 = vadd.f32 %v1938, 1.0
    %v1958 = vadd.f32 %v1940, 1.0
    %v1959 = vadd.f32 %v1942, 1.0
    %v1960 = vadd.f32 %v1944, 1.0
    %v1961 = vrcp.pop %v1945
    %v1962 = vmul.f32 1.0, %v1961
    %v1963 = vrcp.pop %v1946
    %v1964 = vmul.f32 1.0, %v1963
    %v1965 = vrcp.pop %v1947
    %v1966 = vmul.f32 1.0, %v1965
    %v1967 = vrcp.pop %v1948
    %v1968 = vmul.f32 1.0, %v1967
    %v1969 = vrcp.pop %v1949
    %v1970 = vmul.f32 1.0, %v1969
    %v1971 = vrcp.pop %v1950
    %v1972 = vmul.f32 1.0, %v1971
    %v1973 = vrcp.pop %v1951
    %v1974 = vmul.f32 1.0, %v1973
    %v1975 = vrcp.pop %v1952
    %v1976 = vmul.f32 1.0, %v1975
    %v1977 = vrcp.pop %v1953
    %v1978 = vmul.f32 1.0, %v1977
    %v1979 = vrcp.pop %v1954
    %v1980 = vmul.f32 1.0, %v1979
    %v1981 = vrcp.pop %v1955
    %v1982 = vmul.f32 1.0, %v1981
    %v1983 = vrcp.pop %v1956
    %v1984 = vmul.f32 1.0, %v1983
    %v1985 = vrcp.pop %v1957
    %v1986 = vmul.f32 1.0, %v1985
    %v1987 = vrcp.pop %v1958
    %v1988 = vmul.f32 1.0, %v1987
    %v1989 = vrcp.pop %v1959
    %v1990 = vmul.f32 1.0, %v1989
    %v1991 = vrcp.pop %v1960
    %v1992 = vmul.f32 1.0, %v1991
    %v1993 = vmul.f32 %v1850, %v1881
    %v1994 = vmul.f32 %v1852, %v1882
    %v1995 = vmul.f32 %v1854, %v1883
    %v1996 = vmul.f32 %v1856, %v1884
    %v1997 = vmul.f32 %v1858, %v1885
    %v1998 = vmul.f32 %v1860, %v1886
    %v1999 = vmul.f32 %v1862, %v1887
    %v2000 = vmul.f32 %v1864, %v1888
    %v2001 = vmul.f32 %v1866, %v1889
    %v2002 = vmul.f32 %v1868, %v1890
    %v2003 = vmul.f32 %v1870, %v1891
    %v2004 = vmul.f32 %v1872, %v1892
    %v2005 = vmul.f32 %v1874, %v1893
    %v2006 = vmul.f32 %v1876, %v1894
    %v2007 = vmul.f32 %v1878, %v1895
    %v2008 = vmul.f32 %v1880, %v1896
    %v2009 = vtanh.pop %v1993
    %v2010 = vtanh.pop %v1994
    %v2011 = vtanh.pop %v1995
    %v2012 = vtanh.pop %v1996
    %v2013 = vtanh.pop %v1997
    %v2014 = vtanh.pop %v1998
    %v2015 = vtanh.pop %v1999
    %v2016 = vtanh.pop %v2000
    %v2017 = vtanh.pop %v2001
    %v2018 = vtanh.pop %v2002
    %v2019 = vtanh.pop %v2003
    %v2020 = vtanh.pop %v2004
    %v2021 = vtanh.pop %v2005
    %v2022 = vtanh.pop %v2006
    %v2023 = vtanh.pop %v2007
    %v2024 = vtanh.pop %v2008
    %v2025 = vmul.f32 %v1962, %v2009
    %v2026 = vmul.f32 %v1964, %v2010
    %v2027 = vmul.f32 %v1966, %v2011
    %v2028 = vmul.f32 %v1968, %v2012
    %v2029 = vmul.f32 %v1970, %v2013
    %v2030 = vmul.f32 %v1972, %v2014
    %v2031 = vmul.f32 %v1974, %v2015
    %v2032 = vmul.f32 %v1976, %v2016
    %v2033 = vmul.f32 %v1978, %v2017
    %v2034 = vmul.f32 %v1980, %v2018
    %v2035 = vmul.f32 %v1982, %v2019
    %v2036 = vmul.f32 %v1984, %v2020
    %v2037 = vmul.f32 %v1986, %v2021
    %v2038 = vmul.f32 %v1988, %v2022
    %v2039 = vmul.f32 %v1990, %v2023
    %v2040 = vmul.f32 %v1992, %v2024
    %v2041 = vpack.c.bf16 %v2026, %v2025
    %v2042 = vpack.c.bf16 %v2028, %v2027
    %v2043 = vpack.c.bf16 %v2030, %v2029
    %v2044 = vpack.c.bf16 %v2032, %v2031
    %v2045 = vpack.c.bf16 %v2034, %v2033
    %v2046 = vpack.c.bf16 %v2036, %v2035
    %v2047 = vpack.c.bf16 %v2038, %v2037
    %v2048 = vpack.c.bf16 %v2040, %v2039
    %v2049 = vld [vmem:[%s5] sm:$0xf]
    %v2050 = vld [vmem:[%s5 + $0x4] sm:$0xf]
    %v2051 = vld [vmem:[%s5 + $0x8] sm:$0xf]
    %v2052 = vld [vmem:[%s5 + $0xc] sm:$0xf]
    %v2053 = vld [vmem:[%s5 + $0x10] sm:$0xf]
    %v2054 = vld [vmem:[%s5 + $0x14] sm:$0xf]
    %v2055 = vld [vmem:[%s5 + $0x18] sm:$0xf]
    %v2056 = vld [vmem:[%s5 + $0x1c] sm:$0xf]
    %v2057 = vld [vmem:[%s5 + $0x20] sm:$0xf]
    %v2058 = vld [vmem:[%s5 + $0x24] sm:$0xf]
    %v2059 = vld [vmem:[%s5 + $0x28] sm:$0xf]
    %v2060 = vld [vmem:[%s5 + $0x2c] sm:$0xf]
    %v2061 = vld [vmem:[%s5 + $0x30] sm:$0xf]
    %v2062 = vld [vmem:[%s5 + $0x34] sm:$0xf]
    %v2063 = vld [vmem:[%s5 + $0x38] sm:$0xf]
    %v2064 = vld [vmem:[%s5 + $0x3c] sm:$0xf]
    %v2065 = vld [vmem:[%s5 + $0x40] sm:$0xf]
    %v2066 = vld [vmem:[%s5 + $0x44] sm:$0xf]
    %v2067 = vld [vmem:[%s5 + $0x48] sm:$0xf]
    %v2068 = vld [vmem:[%s5 + $0x4c] sm:$0xf]
    %v2069 = vld [vmem:[%s5 + $0x50] sm:$0xf]
    %v2070 = vld [vmem:[%s5 + $0x54] sm:$0xf]
    %v2071 = vld [vmem:[%s5 + $0x58] sm:$0xf]
    %v2072 = vld [vmem:[%s5 + $0x5c] sm:$0xf]
    %v2073 = vld [vmem:[%s5 + $0x60] sm:$0xf]
    %v2074 = vld [vmem:[%s5 + $0x64] sm:$0xf]
    %v2075 = vld [vmem:[%s5 + $0x68] sm:$0xf]
    %v2076 = vld [vmem:[%s5 + $0x6c] sm:$0xf]
    %v2077 = vld [vmem:[%s5 + $0x70] sm:$0xf]
    %v2078 = vld [vmem:[%s5 + $0x74] sm:$0xf]
    %v2079 = vld [vmem:[%s5 + $0x78] sm:$0xf]
    %v2080 = vld [vmem:[%s5 + $0x7c] sm:$0xf]
    %v2081 = vld [vmem:[%s6] sm:$0xff]
    %v2082 = vld [vmem:[%s6 + $0x8] sm:$0xff]
    %v2083 = vld [vmem:[%s6 + $0x10] sm:$0xff]
    %v2084 = vld [vmem:[%s6 + $0x18] sm:$0xff]
    %v2085 = vld [vmem:[%s6 + $0x20] sm:$0xff]
    %v2086 = vld [vmem:[%s6 + $0x28] sm:$0xff]
    %v2087 = vld [vmem:[%s6 + $0x30] sm:$0xff]
    %v2088 = vld [vmem:[%s6 + $0x38] sm:$0xff]
    %v2089 = vld [vmem:[%s6 + $0x40] sm:$0xff]
    %v2090 = vld [vmem:[%s6 + $0x48] sm:$0xff]
    %v2091 = vld [vmem:[%s6 + $0x50] sm:$0xff]
    %v2092 = vld [vmem:[%s6 + $0x58] sm:$0xff]
    %v2093 = vld [vmem:[%s6 + $0x60] sm:$0xff]
    %v2094 = vld [vmem:[%s6 + $0x68] sm:$0xff]
    %v2095 = vld [vmem:[%s6 + $0x70] sm:$0xff]
    %v2096 = vld [vmem:[%s6 + $0x78] sm:$0xff]
    %v2097 = vld [vmem:[%s6 + $0x80] sm:$0xff]
    %v2098 = vld [vmem:[%s6 + $0x88] sm:$0xff]
    %v2099 = vld [vmem:[%s6 + $0x90] sm:$0xff]
    %v2100 = vld [vmem:[%s6 + $0x98] sm:$0xff]
    %v2101 = vld [vmem:[%s6 + $0xa0] sm:$0xff]
    %v2102 = vld [vmem:[%s6 + $0xa8] sm:$0xff]
    %v2103 = vld [vmem:[%s6 + $0xb0] sm:$0xff]
    %v2104 = vld [vmem:[%s6 + $0xb8] sm:$0xff]
    %v2105 = vld [vmem:[%s6 + $0xc0] sm:$0xff]
    %v2106 = vld [vmem:[%s6 + $0xc8] sm:$0xff]
    %v2107 = vld [vmem:[%s6 + $0xd0] sm:$0xff]
    %v2108 = vld [vmem:[%s6 + $0xd8] sm:$0xff]
    %v2109 = vld [vmem:[%s6 + $0xe0] sm:$0xff]
    %v2110 = vld [vmem:[%s6 + $0xe8] sm:$0xff]
    %v2111 = vld [vmem:[%s6 + $0xf0] sm:$0xff]
    %v2112 = vld [vmem:[%s6 + $0xf8] sm:$0xff]
    %2114 = vset.pattern.permute.xlu0 0
    %2115 = vperm.xlu0 %2114, %v2081
    %v2116 = vpop.permute.xlu0 %2115
    %2119 = vset.pattern.permute.xlu0 0
    %2120 = vperm.xlu0 %2119, %v2082
    %v2121 = vpop.permute.xlu0 %2120
    %2124 = vset.pattern.permute.xlu0 0
    %2125 = vperm.xlu0 %2124, %v2083
    %v2126 = vpop.permute.xlu0 %2125
    %2129 = vset.pattern.permute.xlu0 0
    %2130 = vperm.xlu0 %2129, %v2084
    %v2131 = vpop.permute.xlu0 %2130
    %2134 = vset.pattern.permute.xlu0 0
    %2135 = vperm.xlu0 %2134, %v2085
    %v2136 = vpop.permute.xlu0 %2135
    %2139 = vset.pattern.permute.xlu0 0
    %2140 = vperm.xlu0 %2139, %v2086
    %v2141 = vpop.permute.xlu0 %2140
    %2144 = vset.pattern.permute.xlu0 0
    %2145 = vperm.xlu0 %2144, %v2087
    %v2146 = vpop.permute.xlu0 %2145
    %2149 = vset.pattern.permute.xlu0 0
    %2150 = vperm.xlu0 %2149, %v2088
    %v2151 = vpop.permute.xlu0 %2150
    %2154 = vset.pattern.permute.xlu0 0
    %2155 = vperm.xlu0 %2154, %v2089
    %v2156 = vpop.permute.xlu0 %2155
    %2159 = vset.pattern.permute.xlu0 0
    %2160 = vperm.xlu0 %2159, %v2090
    %v2161 = vpop.permute.xlu0 %2160
    %2164 = vset.pattern.permute.xlu0 0
    %2165 = vperm.xlu0 %2164, %v2091
    %v2166 = vpop.permute.xlu0 %2165
    %2169 = vset.pattern.permute.xlu0 0
    %2170 = vperm.xlu0 %2169, %v2092
    %v2171 = vpop.permute.xlu0 %2170
    %2174 = vset.pattern.permute.xlu0 0
    %2175 = vperm.xlu0 %2174, %v2093
    %v2176 = vpop.permute.xlu0 %2175
    %2179 = vset.pattern.permute.xlu0 0
    %2180 = vperm.xlu0 %2179, %v2094
    %v2181 = vpop.permute.xlu0 %2180
    %2184 = vset.pattern.permute.xlu0 0
    %2185 = vperm.xlu0 %2184, %v2095
    %v2186 = vpop.permute.xlu0 %2185
    %2189 = vset.pattern.permute.xlu0 0
    %2190 = vperm.xlu0 %2189, %v2096
    %v2191 = vpop.permute.xlu0 %2190
    %2194 = vset.pattern.permute.xlu0 0
    %2195 = vperm.xlu0 %2194, %v2097
    %v2196 = vpop.permute.xlu0 %2195
    %2199 = vset.pattern.permute.xlu0 0
    %2200 = vperm.xlu0 %2199, %v2098
    %v2201 = vpop.permute.xlu0 %2200
    %2204 = vset.pattern.permute.xlu0 0
    %2205 = vperm.xlu0 %2204, %v2099
    %v2206 = vpop.permute.xlu0 %2205
    %2209 = vset.pattern.permute.xlu0 0
    %2210 = vperm.xlu0 %2209, %v2100
    %v2211 = vpop.permute.xlu0 %2210
    %2214 = vset.pattern.permute.xlu0 0
    %2215 = vperm.xlu0 %2214, %v2101
    %v2216 = vpop.permute.xlu0 %2215
    %2219 = vset.pattern.permute.xlu0 0
    %2220 = vperm.xlu0 %2219, %v2102
    %v2221 = vpop.permute.xlu0 %2220
    %2224 = vset.pattern.permute.xlu0 0
    %2225 = vperm.xlu0 %2224, %v2103
    %v2226 = vpop.permute.xlu0 %2225
    %2229 = vset.pattern.permute.xlu0 0
    %2230 = vperm.xlu0 %2229, %v2104
    %v2231 = vpop.permute.xlu0 %2230
    %2234 = vset.pattern.permute.xlu0 0
    %2235 = vperm.xlu0 %2234, %v2105
    %v2236 = vpop.permute.xlu0 %2235
    %2239 = vset.pattern.permute.xlu0 0
    %2240 = vperm.xlu0 %2239, %v2106
    %v2241 = vpop.permute.xlu0 %2240
    %2244 = vset.pattern.permute.xlu0 0
    %2245 = vperm.xlu0 %2244, %v2107
    %v2246 = vpop.permute.xlu0 %2245
    %2249 = vset.pattern.permute.xlu0 0
    %2250 = vperm.xlu0 %2249, %v2108
    %v2251 = vpop.permute.xlu0 %2250
    %2254 = vset.pattern.permute.xlu0 0
    %2255 = vperm.xlu0 %2254, %v2109
    %v2256 = vpop.permute.xlu0 %2255
    %2259 = vset.pattern.permute.xlu0 0
    %2260 = vperm.xlu0 %2259, %v2110
    %v2261 = vpop.permute.xlu0 %2260
    %2264 = vset.pattern.permute.xlu0 0
    %2265 = vperm.xlu0 %2264, %v2111
    %v2266 = vpop.permute.xlu0 %2265
    %2269 = vset.pattern.permute.xlu0 0
    %2270 = vperm.xlu0 %2269, %v2112
    %v2271 = vpop.permute.xlu0 %2270
    %v2305 = vunpack.c.l.b16 %v2049
    %v2306 = vunpack.c.l.b16 %v2050
    %v2307 = vunpack.c.l.b16 %v2051
    %v2308 = vunpack.c.l.b16 %v2052
    %v2309 = vunpack.c.l.b16 %v2053
    %v2310 = vunpack.c.l.b16 %v2054
    %v2311 = vunpack.c.l.b16 %v2055
    %v2312 = vunpack.c.l.b16 %v2056
    %v2313 = vunpack.c.l.b16 %v2057
    %v2314 = vunpack.c.l.b16 %v2058
    %v2315 = vunpack.c.l.b16 %v2059
    %v2316 = vunpack.c.l.b16 %v2060
    %v2317 = vunpack.c.l.b16 %v2061
    %v2318 = vunpack.c.l.b16 %v2062
    %v2319 = vunpack.c.l.b16 %v2063
    %v2320 = vunpack.c.l.b16 %v2064
    %v2321 = vunpack.c.l.b16 %v2065
    %v2322 = vunpack.c.l.b16 %v2066
    %v2323 = vunpack.c.l.b16 %v2067
    %v2324 = vunpack.c.l.b16 %v2068
    %v2325 = vunpack.c.l.b16 %v2069
    %v2326 = vunpack.c.l.b16 %v2070
    %v2327 = vunpack.c.l.b16 %v2071
    %v2328 = vunpack.c.l.b16 %v2072
    %v2329 = vunpack.c.l.b16 %v2073
    %v2330 = vunpack.c.l.b16 %v2074
    %v2331 = vunpack.c.l.b16 %v2075
    %v2332 = vunpack.c.l.b16 %v2076
    %v2333 = vunpack.c.l.b16 %v2077
    %v2334 = vunpack.c.l.b16 %v2078
    %v2335 = vunpack.c.l.b16 %v2079
    %v2336 = vunpack.c.l.b16 %v2080
    %v2337 = vpack.c.b16 %v2306, %v2305
    %v2338 = vpack.c.b16 %v2308, %v2307
    %v2339 = vpack.c.b16 %v2310, %v2309
    %v2340 = vpack.c.b16 %v2312, %v2311
    %v2341 = vpack.c.b16 %v2314, %v2313
    %v2342 = vpack.c.b16 %v2316, %v2315
    %v2343 = vpack.c.b16 %v2318, %v2317
    %v2344 = vpack.c.b16 %v2320, %v2319
    %v2345 = vpack.c.b16 %v2322, %v2321
    %v2346 = vpack.c.b16 %v2324, %v2323
    %v2347 = vpack.c.b16 %v2326, %v2325
    %v2348 = vpack.c.b16 %v2328, %v2327
    %v2349 = vpack.c.b16 %v2330, %v2329
    %v2350 = vpack.c.b16 %v2332, %v2331
    %v2351 = vpack.c.b16 %v2334, %v2333
    %v2352 = vpack.c.b16 %v2336, %v2335
    %2369 = vmatprep.subr.bf16.mxu0 0
    %2370 = vmatpush1.bf16.msra.mxu0 %v2048
    %2371 = vmatprep.subr.bf16.mxu0 0
    %2372 = vmatpush1.bf16.msra.mxu0 %v2047
    %2373 = vmatprep.subr.bf16.mxu0 0
    %2374 = vmatpush1.bf16.msra.mxu0 %v2046
    %2375 = vmatprep.subr.bf16.mxu0 0
    %2376 = vmatpush1.bf16.msra.mxu0 %v2045
    %2377 = vmatprep.subr.bf16.mxu0 0
    %2378 = vmatpush1.bf16.msra.mxu0 %v2044
    %2379 = vmatprep.subr.bf16.mxu0 0
    %2380 = vmatpush1.bf16.msra.mxu0 %v2043
    %2381 = vmatprep.subr.bf16.mxu0 0
    %2382 = vmatpush1.bf16.msra.mxu0 %v2042
    %2383 = vmatprep.subr.bf16.mxu0 0
    %2384 = vmatpush1.bf16.msra.mxu0 %v2041
    %2385 = vmatprep.subr.bf16.mxu0 0
    %2386 = vmatpush2.bf16.msra.mxu0 0
    %2387 = vmatprep.subr.bf16.mxu0 0
    %2388 = vmatpush2.bf16.msra.mxu0 0
    %2389 = vmatprep.subr.bf16.mxu0 0
    %2390 = vmatpush2.bf16.msra.mxu0 0
    %2391 = vmatprep.subr.bf16.mxu0 0
    %2392 = vmatpush2.bf16.msra.mxu0 0
    %2393 = vmatprep.subr.bf16.mxu0 0
    %2394 = vmatpush2.bf16.msra.mxu0 0
    %2395 = vmatprep.subr.bf16.mxu0 0
    %2396 = vmatpush2.bf16.msra.mxu0 0
    %2397 = vmatprep.subr.bf16.mxu0 0
    %2398 = vmatpush2.bf16.msra.mxu0 0
    %2399 = vmatprep.subr.bf16.mxu0 0
    %2400 = vmatpush2.bf16.msra.mxu0 0
    %2401 = vmatprep.mubr.bf16.mxu0 0
    %2402 = vmatmul.mubr.bf16.gmra.mxu0 %v2337
    %v2403 = vpop.f32.mrf.mxu0
    %v2404 = vadd.f32 %v2116, %v2403
    %v2405 = vpop.f32.mrf.mxu0
    %v2406 = vpop.f32.mrf.mxu0
    %v2407 = vadd.f32 %v2121, %v2406
    %v2408 = vpop.f32.mrf.mxu0
    %2409 = vmatprep.mubr.bf16.mxu0 0
    %2410 = vmatmul.mubr.bf16.gmra.mxu0 %v2338
    %v2411 = vpop.f32.mrf.mxu0
    %v2412 = vadd.f32 %v2126, %v2411
    %v2413 = vpop.f32.mrf.mxu0
    %v2414 = vpop.f32.mrf.mxu0
    %v2415 = vadd.f32 %v2131, %v2414
    %v2416 = vpop.f32.mrf.mxu0
    %2417 = vmatprep.mubr.bf16.mxu0 0
    %2418 = vmatmul.mubr.bf16.gmra.mxu0 %v2339
    %v2419 = vpop.f32.mrf.mxu0
    %v2420 = vadd.f32 %v2136, %v2419
    %v2421 = vpop.f32.mrf.mxu0
    %v2422 = vpop.f32.mrf.mxu0
    %v2423 = vadd.f32 %v2141, %v2422
    %v2424 = vpop.f32.mrf.mxu0
    %2425 = vmatprep.mubr.bf16.mxu0 0
    %2426 = vmatmul.mubr.bf16.gmra.mxu0 %v2340
    %v2427 = vpop.f32.mrf.mxu0
    %v2428 = vadd.f32 %v2146, %v2427
    %v2429 = vpop.f32.mrf.mxu0
    %v2430 = vpop.f32.mrf.mxu0
    %v2431 = vadd.f32 %v2151, %v2430
    %v2432 = vpop.f32.mrf.mxu0
    %2433 = vmatprep.mubr.bf16.mxu0 0
    %2434 = vmatmul.mubr.bf16.gmra.mxu0 %v2341
    %v2435 = vpop.f32.mrf.mxu0
    %v2436 = vadd.f32 %v2156, %v2435
    %v2437 = vpop.f32.mrf.mxu0
    %v2438 = vpop.f32.mrf.mxu0
    %v2439 = vadd.f32 %v2161, %v2438
    %v2440 = vpop.f32.mrf.mxu0
    %2441 = vmatprep.mubr.bf16.mxu0 0
    %2442 = vmatmul.mubr.bf16.gmra.mxu0 %v2342
    %v2443 = vpop.f32.mrf.mxu0
    %v2444 = vadd.f32 %v2166, %v2443
    %v2445 = vpop.f32.mrf.mxu0
    %v2446 = vpop.f32.mrf.mxu0
    %v2447 = vadd.f32 %v2171, %v2446
    %v2448 = vpop.f32.mrf.mxu0
    %2449 = vmatprep.mubr.bf16.mxu0 0
    %2450 = vmatmul.mubr.bf16.gmra.mxu0 %v2343
    %v2451 = vpop.f32.mrf.mxu0
    %v2452 = vadd.f32 %v2176, %v2451
    %v2453 = vpop.f32.mrf.mxu0
    %v2454 = vpop.f32.mrf.mxu0
    %v2455 = vadd.f32 %v2181, %v2454
    %v2456 = vpop.f32.mrf.mxu0
    %2457 = vmatprep.mubr.bf16.mxu0 0
    %2458 = vmatmul.mubr.bf16.gmra.mxu0 %v2344
    %v2459 = vpop.f32.mrf.mxu0
    %v2460 = vadd.f32 %v2186, %v2459
    %v2461 = vpop.f32.mrf.mxu0
    %v2462 = vpop.f32.mrf.mxu0
    %v2463 = vadd.f32 %v2191, %v2462
    %v2464 = vpop.f32.mrf.mxu0
    %2465 = vmatprep.mubr.bf16.mxu0 0
    %2466 = vmatmul.mubr.bf16.gmra.mxu0 %v2345
    %v2467 = vpop.f32.mrf.mxu0
    %v2468 = vadd.f32 %v2196, %v2467
    %v2469 = vpop.f32.mrf.mxu0
    %v2470 = vpop.f32.mrf.mxu0
    %v2471 = vadd.f32 %v2201, %v2470
    %v2472 = vpop.f32.mrf.mxu0
    %2473 = vmatprep.mubr.bf16.mxu0 0
    %2474 = vmatmul.mubr.bf16.gmra.mxu0 %v2346
    %v2475 = vpop.f32.mrf.mxu0
    %v2476 = vadd.f32 %v2206, %v2475
    %v2477 = vpop.f32.mrf.mxu0
    %v2478 = vpop.f32.mrf.mxu0
    %v2479 = vadd.f32 %v2211, %v2478
    %v2480 = vpop.f32.mrf.mxu0
    %2481 = vmatprep.mubr.bf16.mxu0 0
    %2482 = vmatmul.mubr.bf16.gmra.mxu0 %v2347
    %v2483 = vpop.f32.mrf.mxu0
    %v2484 = vadd.f32 %v2216, %v2483
    %v2485 = vpop.f32.mrf.mxu0
    %v2486 = vpop.f32.mrf.mxu0
    %v2487 = vadd.f32 %v2221, %v2486
    %v2488 = vpop.f32.mrf.mxu0
    %2489 = vmatprep.mubr.bf16.mxu0 0
    %2490 = vmatmul.mubr.bf16.gmra.mxu0 %v2348
    %v2491 = vpop.f32.mrf.mxu0
    %v2492 = vadd.f32 %v2226, %v2491
    %v2493 = vpop.f32.mrf.mxu0
    %v2494 = vpop.f32.mrf.mxu0
    %v2495 = vadd.f32 %v2231, %v2494
    %v2496 = vpop.f32.mrf.mxu0
    %2497 = vmatprep.mubr.bf16.mxu0 0
    %2498 = vmatmul.mubr.bf16.gmra.mxu0 %v2349
    %v2499 = vpop.f32.mrf.mxu0
    %v2500 = vadd.f32 %v2236, %v2499
    %v2501 = vpop.f32.mrf.mxu0
    %v2502 = vpop.f32.mrf.mxu0
    %v2503 = vadd.f32 %v2241, %v2502
    %v2504 = vpop.f32.mrf.mxu0
    %2505 = vmatprep.mubr.bf16.mxu0 0
    %2506 = vmatmul.mubr.bf16.gmra.mxu0 %v2350
    %v2507 = vpop.f32.mrf.mxu0
    %v2508 = vadd.f32 %v2246, %v2507
    %v2509 = vpop.f32.mrf.mxu0
    %v2510 = vpop.f32.mrf.mxu0
    %v2511 = vadd.f32 %v2251, %v2510
    %v2512 = vpop.f32.mrf.mxu0
    %2513 = vmatprep.mubr.bf16.mxu0 0
    %2514 = vmatmul.mubr.bf16.gmra.mxu0 %v2351
    %v2515 = vpop.f32.mrf.mxu0
    %v2516 = vadd.f32 %v2256, %v2515
    %v2517 = vpop.f32.mrf.mxu0
    %v2518 = vpop.f32.mrf.mxu0
    %v2519 = vadd.f32 %v2261, %v2518
    %v2520 = vpop.f32.mrf.mxu0
    %2521 = vmatprep.mubr.bf16.mxu0 0
    %2522 = vmatmul.mubr.bf16.gmra.mxu0 %v2352
    %v2523 = vpop.f32.mrf.mxu0
    %v2524 = vadd.f32 %v2266, %v2523
    %v2525 = vpop.f32.mrf.mxu0
    %v2526 = vpop.f32.mrf.mxu0
    %v2527 = vadd.f32 %v2271, %v2526
    %v2528 = vpop.f32.mrf.mxu0
    %2529 = vdwg.mxu0
    %v2530 = vmax.f32 %v2404, 0.0
    %v2531 = vmax.f32 %v2407, 0.0
    %v2532 = vmax.f32 %v2412, 0.0
    %v2533 = vmax.f32 %v2415, 0.0
    %v2534 = vmax.f32 %v2420, 0.0
    %v2535 = vmax.f32 %v2423, 0.0
    %v2536 = vmax.f32 %v2428, 0.0
    %v2537 = vmax.f32 %v2431, 0.0
    %v2538 = vmax.f32 %v2436, 0.0
    %v2539 = vmax.f32 %v2439, 0.0
    %v2540 = vmax.f32 %v2444, 0.0
    %v2541 = vmax.f32 %v2447, 0.0
    %v2542 = vmax.f32 %v2452, 0.0
    %v2543 = vmax.f32 %v2455, 0.0
    %v2544 = vmax.f32 %v2460, 0.0
    %v2545 = vmax.f32 %v2463, 0.0
    %v2546 = vmax.f32 %v2468, 0.0
    %v2547 = vmax.f32 %v2471, 0.0
    %v2548 = vmax.f32 %v2476, 0.0
    %v2549 = vmax.f32 %v2479, 0.0
    %v2550 = vmax.f32 %v2484, 0.0
    %v2551 = vmax.f32 %v2487, 0.0
    %v2552 = vmax.f32 %v2492, 0.0
    %v2553 = vmax.f32 %v2495, 0.0
    %v2554 = vmax.f32 %v2500, 0.0
    %v2555 = vmax.f32 %v2503, 0.0
    %v2556 = vmax.f32 %v2508, 0.0
    %v2557 = vmax.f32 %v2511, 0.0
    %v2558 = vmax.f32 %v2516, 0.0
    %v2559 = vmax.f32 %v2519, 0.0
    %v2560 = vmax.f32 %v2524, 0.0
    %v2561 = vmax.f32 %v2527, 0.0
    %v2562 = vpack.c.bf16 %v2531, %v2530
    %v2563 = vpack.c.bf16 %v2533, %v2532
    %v2564 = vpack.c.bf16 %v2535, %v2534
    %v2565 = vpack.c.bf16 %v2537, %v2536
    %v2566 = vpack.c.bf16 %v2539, %v2538
    %v2567 = vpack.c.bf16 %v2541, %v2540
    %v2568 = vpack.c.bf16 %v2543, %v2542
    %v2569 = vpack.c.bf16 %v2545, %v2544
    %v2570 = vpack.c.bf16 %v2547, %v2546
    %v2571 = vpack.c.bf16 %v2549, %v2548
    %v2572 = vpack.c.bf16 %v2551, %v2550
    %v2573 = vpack.c.bf16 %v2553, %v2552
    %v2574 = vpack.c.bf16 %v2555, %v2554
    %v2575 = vpack.c.bf16 %v2557, %v2556
    %v2576 = vpack.c.bf16 %v2559, %v2558
    %v2577 = vpack.c.bf16 %v2561, %v2560
    %v2578 = vld [vmem:[%s7] sm:$0xff]
    %v2579 = vld [vmem:[%s7 + $0x8] sm:$0xff]
    %v2580 = vld [vmem:[%s7 + $0x10] sm:$0xff]
    %v2581 = vld [vmem:[%s7 + $0x18] sm:$0xff]
    %v2582 = vld [vmem:[%s7 + $0x20] sm:$0xff]
    %v2583 = vld [vmem:[%s7 + $0x28] sm:$0xff]
    %v2584 = vld [vmem:[%s7 + $0x30] sm:$0xff]
    %v2585 = vld [vmem:[%s7 + $0x38] sm:$0xff]
    %v2586 = vld [vmem:[%s7 + $0x40] sm:$0xff]
    %v2587 = vld [vmem:[%s7 + $0x48] sm:$0xff]
    %v2588 = vld [vmem:[%s7 + $0x50] sm:$0xff]
    %v2589 = vld [vmem:[%s7 + $0x58] sm:$0xff]
    %v2590 = vld [vmem:[%s7 + $0x60] sm:$0xff]
    %v2591 = vld [vmem:[%s7 + $0x68] sm:$0xff]
    %v2592 = vld [vmem:[%s7 + $0x70] sm:$0xff]
    %v2593 = vld [vmem:[%s7 + $0x78] sm:$0xff]
    %v2594 = vld [vmem:[%s7 + $0x80] sm:$0xff]
    %v2595 = vld [vmem:[%s7 + $0x88] sm:$0xff]
    %v2596 = vld [vmem:[%s7 + $0x90] sm:$0xff]
    %v2597 = vld [vmem:[%s7 + $0x98] sm:$0xff]
    %v2598 = vld [vmem:[%s7 + $0xa0] sm:$0xff]
    %v2599 = vld [vmem:[%s7 + $0xa8] sm:$0xff]
    %v2600 = vld [vmem:[%s7 + $0xb0] sm:$0xff]
    %v2601 = vld [vmem:[%s7 + $0xb8] sm:$0xff]
    %v2602 = vld [vmem:[%s7 + $0xc0] sm:$0xff]
    %v2603 = vld [vmem:[%s7 + $0xc8] sm:$0xff]
    %v2604 = vld [vmem:[%s7 + $0xd0] sm:$0xff]
    %v2605 = vld [vmem:[%s7 + $0xd8] sm:$0xff]
    %v2606 = vld [vmem:[%s7 + $0xe0] sm:$0xff]
    %v2607 = vld [vmem:[%s7 + $0xe8] sm:$0xff]
    %v2608 = vld [vmem:[%s7 + $0xf0] sm:$0xff]
    %v2609 = vld [vmem:[%s7 + $0xf8] sm:$0xff]
    %v2610 = vld [vmem:[%s8] sm:$0xff]
    %v2611 = vld [vmem:[%s8 + $0x8] sm:$0xff]
    %v2612 = vld [vmem:[%s8 + $0x10] sm:$0xff]
    %v2613 = vld [vmem:[%s8 + $0x18] sm:$0xff]
    %v2614 = vld [vmem:[%s8 + $0x20] sm:$0xff]
    %v2615 = vld [vmem:[%s8 + $0x28] sm:$0xff]
    %v2616 = vld [vmem:[%s8 + $0x30] sm:$0xff]
    %v2617 = vld [vmem:[%s8 + $0x38] sm:$0xff]
    %v2618 = vld [vmem:[%s8 + $0x40] sm:$0xff]
    %v2619 = vld [vmem:[%s8 + $0x48] sm:$0xff]
    %v2620 = vld [vmem:[%s8 + $0x50] sm:$0xff]
    %v2621 = vld [vmem:[%s8 + $0x58] sm:$0xff]
    %v2622 = vld [vmem:[%s8 + $0x60] sm:$0xff]
    %v2623 = vld [vmem:[%s8 + $0x68] sm:$0xff]
    %v2624 = vld [vmem:[%s8 + $0x70] sm:$0xff]
    %v2625 = vld [vmem:[%s8 + $0x78] sm:$0xff]
    %v2626 = vld [vmem:[%s8 + $0x80] sm:$0xff]
    %v2627 = vld [vmem:[%s8 + $0x88] sm:$0xff]
    %v2628 = vld [vmem:[%s8 + $0x90] sm:$0xff]
    %v2629 = vld [vmem:[%s8 + $0x98] sm:$0xff]
    %v2630 = vld [vmem:[%s8 + $0xa0] sm:$0xff]
    %v2631 = vld [vmem:[%s8 + $0xa8] sm:$0xff]
    %v2632 = vld [vmem:[%s8 + $0xb0] sm:$0xff]
    %v2633 = vld [vmem:[%s8 + $0xb8] sm:$0xff]
    %v2634 = vld [vmem:[%s8 + $0xc0] sm:$0xff]
    %v2635 = vld [vmem:[%s8 + $0xc8] sm:$0xff]
    %v2636 = vld [vmem:[%s8 + $0xd0] sm:$0xff]
    %v2637 = vld [vmem:[%s8 + $0xd8] sm:$0xff]
    %v2638 = vld [vmem:[%s8 + $0xe0] sm:$0xff]
    %v2639 = vld [vmem:[%s8 + $0xe8] sm:$0xff]
    %v2640 = vld [vmem:[%s8 + $0xf0] sm:$0xff]
    %v2641 = vld [vmem:[%s8 + $0xf8] sm:$0xff]
    %2643 = vset.pattern.permute.xlu0 0
    %2644 = vperm.xlu0 %2643, %v2610
    %v2645 = vpop.permute.xlu0 %2644
    %2648 = vset.pattern.permute.xlu0 0
    %2649 = vperm.xlu0 %2648, %v2611
    %v2650 = vpop.permute.xlu0 %2649
    %2653 = vset.pattern.permute.xlu0 0
    %2654 = vperm.xlu0 %2653, %v2612
    %v2655 = vpop.permute.xlu0 %2654
    %2658 = vset.pattern.permute.xlu0 0
    %2659 = vperm.xlu0 %2658, %v2613
    %v2660 = vpop.permute.xlu0 %2659
    %2663 = vset.pattern.permute.xlu0 0
    %2664 = vperm.xlu0 %2663, %v2614
    %v2665 = vpop.permute.xlu0 %2664
    %2668 = vset.pattern.permute.xlu0 0
    %2669 = vperm.xlu0 %2668, %v2615
    %v2670 = vpop.permute.xlu0 %2669
    %2673 = vset.pattern.permute.xlu0 0
    %2674 = vperm.xlu0 %2673, %v2616
    %v2675 = vpop.permute.xlu0 %2674
    %2678 = vset.pattern.permute.xlu0 0
    %2679 = vperm.xlu0 %2678, %v2617
    %v2680 = vpop.permute.xlu0 %2679
    %2683 = vset.pattern.permute.xlu0 0
    %2684 = vperm.xlu0 %2683, %v2618
    %v2685 = vpop.permute.xlu0 %2684
    %2688 = vset.pattern.permute.xlu0 0
    %2689 = vperm.xlu0 %2688, %v2619
    %v2690 = vpop.permute.xlu0 %2689
    %2693 = vset.pattern.permute.xlu0 0
    %2694 = vperm.xlu0 %2693, %v2620
    %v2695 = vpop.permute.xlu0 %2694
    %2698 = vset.pattern.permute.xlu0 0
    %2699 = vperm.xlu0 %2698, %v2621
    %v2700 = vpop.permute.xlu0 %2699
    %2703 = vset.pattern.permute.xlu0 0
    %2704 = vperm.xlu0 %2703, %v2622
    %v2705 = vpop.permute.xlu0 %2704
    %2708 = vset.pattern.permute.xlu0 0
    %2709 = vperm.xlu0 %2708, %v2623
    %v2710 = vpop.permute.xlu0 %2709
    %2713 = vset.pattern.permute.xlu0 0
    %2714 = vperm.xlu0 %2713, %v2624
    %v2715 = vpop.permute.xlu0 %2714
    %2718 = vset.pattern.permute.xlu0 0
    %2719 = vperm.xlu0 %2718, %v2625
    %v2720 = vpop.permute.xlu0 %2719
    %2723 = vset.pattern.permute.xlu0 0
    %2724 = vperm.xlu0 %2723, %v2626
    %v2725 = vpop.permute.xlu0 %2724
    %2728 = vset.pattern.permute.xlu0 0
    %2729 = vperm.xlu0 %2728, %v2627
    %v2730 = vpop.permute.xlu0 %2729
    %2733 = vset.pattern.permute.xlu0 0
    %2734 = vperm.xlu0 %2733, %v2628
    %v2735 = vpop.permute.xlu0 %2734
    %2738 = vset.pattern.permute.xlu0 0
    %2739 = vperm.xlu0 %2738, %v2629
    %v2740 = vpop.permute.xlu0 %2739
    %2743 = vset.pattern.permute.xlu0 0
    %2744 = vperm.xlu0 %2743, %v2630
    %v2745 = vpop.permute.xlu0 %2744
    %2748 = vset.pattern.permute.xlu0 0
    %2749 = vperm.xlu0 %2748, %v2631
    %v2750 = vpop.permute.xlu0 %2749
    %2753 = vset.pattern.permute.xlu0 0
    %2754 = vperm.xlu0 %2753, %v2632
    %v2755 = vpop.permute.xlu0 %2754
    %2758 = vset.pattern.permute.xlu0 0
    %2759 = vperm.xlu0 %2758, %v2633
    %v2760 = vpop.permute.xlu0 %2759
    %2763 = vset.pattern.permute.xlu0 0
    %2764 = vperm.xlu0 %2763, %v2634
    %v2765 = vpop.permute.xlu0 %2764
    %2768 = vset.pattern.permute.xlu0 0
    %2769 = vperm.xlu0 %2768, %v2635
    %v2770 = vpop.permute.xlu0 %2769
    %2773 = vset.pattern.permute.xlu0 0
    %2774 = vperm.xlu0 %2773, %v2636
    %v2775 = vpop.permute.xlu0 %2774
    %2778 = vset.pattern.permute.xlu0 0
    %2779 = vperm.xlu0 %2778, %v2637
    %v2780 = vpop.permute.xlu0 %2779
    %2783 = vset.pattern.permute.xlu0 0
    %2784 = vperm.xlu0 %2783, %v2638
    %v2785 = vpop.permute.xlu0 %2784
    %2788 = vset.pattern.permute.xlu0 0
    %2789 = vperm.xlu0 %2788, %v2639
    %v2790 = vpop.permute.xlu0 %2789
    %2793 = vset.pattern.permute.xlu0 0
    %2794 = vperm.xlu0 %2793, %v2640
    %v2795 = vpop.permute.xlu0 %2794
    %2798 = vset.pattern.permute.xlu0 0
    %2799 = vperm.xlu0 %2798, %v2641
    %v2800 = vpop.permute.xlu0 %2799
    %v2834 = vunpack.c.l.b16 %v2578
    %v2835 = vunpack.c.h.b16 %v2578
    %v2836 = vunpack.c.l.b16 %v2579
    %v2837 = vunpack.c.h.b16 %v2579
    %v2838 = vunpack.c.l.b16 %v2580
    %v2839 = vunpack.c.h.b16 %v2580
    %v2840 = vunpack.c.l.b16 %v2581
    %v2841 = vunpack.c.h.b16 %v2581
    %v2842 = vunpack.c.l.b16 %v2582
    %v2843 = vunpack.c.h.b16 %v2582
    %v2844 = vunpack.c.l.b16 %v2583
    %v2845 = vunpack.c.h.b16 %v2583
    %v2846 = vunpack.c.l.b16 %v2584
    %v2847 = vunpack.c.h.b16 %v2584
    %v2848 = vunpack.c.l.b16 %v2585
    %v2849 = vunpack.c.h.b16 %v2585
    %v2850 = vunpack.c.l.b16 %v2586
    %v2851 = vunpack.c.h.b16 %v2586
    %v2852 = vunpack.c.l.b16 %v2587
    %v2853 = vunpack.c.h.b16 %v2587
    %v2854 = vunpack.c.l.b16 %v2588
    %v2855 = vunpack.c.h.b16 %v2588
    %v2856 = vunpack.c.l.b16 %v2589
    %v2857 = vunpack.c.h.b16 %v2589
    %v2858 = vunpack.c.l.b16 %v2590
    %v2859 = vunpack.c.h.b16 %v2590
    %v2860 = vunpack.c.l.b16 %v2591
    %v2861 = vunpack.c.h.b16 %v2591
    %v2862 = vunpack.c.l.b16 %v2592
    %v2863 = vunpack.c.h.b16 %v2592
    %v2864 = vunpack.c.l.b16 %v2593
    %v2865 = vunpack.c.h.b16 %v2593
    %v2866 = vunpack.c.l.b16 %v2594
    %v2867 = vunpack.c.h.b16 %v2594
    %v2868 = vunpack.c.l.b16 %v2595
    %v2869 = vunpack.c.h.b16 %v2595
    %v2870 = vunpack.c.l.b16 %v2596
    %v2871 = vunpack.c.h.b16 %v2596
    %v2872 = vunpack.c.l.b16 %v2597
    %v2873 = vunpack.c.h.b16 %v2597
    %v2874 = vunpack.c.l.b16 %v2598
    %v2875 = vunpack.c.h.b16 %v2598
    %v2876 = vunpack.c.l.b16 %v2599
    %v2877 = vunpack.c.h.b16 %v2599
    %v2878 = vunpack.c.l.b16 %v2600
    %v2879 = vunpack.c.h.b16 %v2600
    %v2880 = vunpack.c.l.b16 %v2601
    %v2881 = vunpack.c.h.b16 %v2601
    %v2882 = vunpack.c.l.b16 %v2602
    %v2883 = vunpack.c.h.b16 %v2602
    %v2884 = vunpack.c.l.b16 %v2603
    %v2885 = vunpack.c.h.b16 %v2603
    %v2886 = vunpack.c.l.b16 %v2604
    %v2887 = vunpack.c.h.b16 %v2604
    %v2888 = vunpack.c.l.b16 %v2605
    %v2889 = vunpack.c.h.b16 %v2605
    %v2890 = vunpack.c.l.b16 %v2606
    %v2891 = vunpack.c.h.b16 %v2606
    %v2892 = vunpack.c.l.b16 %v2607
    %v2893 = vunpack.c.h.b16 %v2607
    %v2894 = vunpack.c.l.b16 %v2608
    %v2895 = vunpack.c.h.b16 %v2608
    %v2896 = vunpack.c.l.b16 %v2609
    %v2897 = vunpack.c.h.b16 %v2609
    %v2898 = vpack.c.b16 %v2836, %v2834
    %v2899 = vpack.c.b16 %v2837, %v2835
    %v2900 = vpack.c.b16 %v2840, %v2838
    %v2901 = vpack.c.b16 %v2841, %v2839
    %v2902 = vpack.c.b16 %v2844, %v2842
    %v2903 = vpack.c.b16 %v2845, %v2843
    %v2904 = vpack.c.b16 %v2848, %v2846
    %v2905 = vpack.c.b16 %v2849, %v2847
    %v2906 = vpack.c.b16 %v2852, %v2850
    %v2907 = vpack.c.b16 %v2853, %v2851
    %v2908 = vpack.c.b16 %v2856, %v2854
    %v2909 = vpack.c.b16 %v2857, %v2855
    %v2910 = vpack.c.b16 %v2860, %v2858
    %v2911 = vpack.c.b16 %v2861, %v2859
    %v2912 = vpack.c.b16 %v2864, %v2862
    %v2913 = vpack.c.b16 %v2865, %v2863
    %v2914 = vpack.c.b16 %v2868, %v2866
    %v2915 = vpack.c.b16 %v2869, %v2867
    %v2916 = vpack.c.b16 %v2872, %v2870
    %v2917 = vpack.c.b16 %v2873, %v2871
    %v2918 = vpack.c.b16 %v2876, %v2874
    %v2919 = vpack.c.b16 %v2877, %v2875
    %v2920 = vpack.c.b16 %v2880, %v2878
    %v2921 = vpack.c.b16 %v2881, %v2879
    %v2922 = vpack.c.b16 %v2884, %v2882
    %v2923 = vpack.c.b16 %v2885, %v2883
    %v2924 = vpack.c.b16 %v2888, %v2886
    %v2925 = vpack.c.b16 %v2889, %v2887
    %v2926 = vpack.c.b16 %v2892, %v2890
    %v2927 = vpack.c.b16 %v2893, %v2891
    %v2928 = vpack.c.b16 %v2896, %v2894
    %v2929 = vpack.c.b16 %v2897, %v2895
    %2962 = vmatprep.subr.bf16.mxu0 0
    %2963 = vmatpush1.bf16.msra.mxu0 %v2569
    %2964 = vmatprep.subr.bf16.mxu0 0
    %2965 = vmatpush1.bf16.msra.mxu0 %v2568
    %2966 = vmatprep.subr.bf16.mxu0 0
    %2967 = vmatpush1.bf16.msra.mxu0 %v2567
    %2968 = vmatprep.subr.bf16.mxu0 0
    %2969 = vmatpush1.bf16.msra.mxu0 %v2566
    %2970 = vmatprep.subr.bf16.mxu0 0
    %2971 = vmatpush1.bf16.msra.mxu0 %v2565
    %2972 = vmatprep.subr.bf16.mxu0 0
    %2973 = vmatpush1.bf16.msra.mxu0 %v2564
    %2974 = vmatprep.subr.bf16.mxu0 0
    %2975 = vmatpush1.bf16.msra.mxu0 %v2563
    %2976 = vmatprep.subr.bf16.mxu0 0
    %2977 = vmatpush1.bf16.msra.mxu0 %v2562
    %2978 = vmatprep.subr.bf16.mxu0 0
    %2979 = vmatpush2.bf16.msra.mxu0 %v2577
    %2980 = vmatprep.subr.bf16.mxu0 0
    %2981 = vmatpush2.bf16.msra.mxu0 %v2576
    %2982 = vmatprep.subr.bf16.mxu0 0
    %2983 = vmatpush2.bf16.msra.mxu0 %v2575
    %2984 = vmatprep.subr.bf16.mxu0 0
    %2985 = vmatpush2.bf16.msra.mxu0 %v2574
    %2986 = vmatprep.subr.bf16.mxu0 0
    %2987 = vmatpush2.bf16.msra.mxu0 %v2573
    %2988 = vmatprep.subr.bf16.mxu0 0
    %2989 = vmatpush2.bf16.msra.mxu0 %v2572
    %2990 = vmatprep.subr.bf16.mxu0 0
    %2991 = vmatpush2.bf16.msra.mxu0 %v2571
    %2992 = vmatprep.subr.bf16.mxu0 0
    %2993 = vmatpush2.bf16.msra.mxu0 %v2570
    %2994 = vmatprep.mubr.bf16.mxu0 %v2899
    %2995 = vmatmul.mubr.bf16.gmra.mxu0 %v2898
    %v2996 = vpop.f32.mrf.mxu0
    %v2997 = vadd.f32 %v2645, %v2996
    %v2998 = vpop.f32.mrf.mxu0
    %v2999 = vpop.f32.mrf.mxu0
    %v3000 = vadd.f32 %v2650, %v2999
    %v3001 = vpop.f32.mrf.mxu0
    %3002 = vmatprep.mubr.bf16.mxu0 %v2901
    %3003 = vmatmul.mubr.bf16.gmra.mxu0 %v2900
    %v3004 = vpop.f32.mrf.mxu0
    %v3005 = vadd.f32 %v2655, %v3004
    %v3006 = vpop.f32.mrf.mxu0
    %v3007 = vpop.f32.mrf.mxu0
    %v3008 = vadd.f32 %v2660, %v3007
    %v3009 = vpop.f32.mrf.mxu0
    %3010 = vmatprep.mubr.bf16.mxu0 %v2903
    %3011 = vmatmul.mubr.bf16.gmra.mxu0 %v2902
    %v3012 = vpop.f32.mrf.mxu0
    %v3013 = vadd.f32 %v2665, %v3012
    %v3014 = vpop.f32.mrf.mxu0
    %v3015 = vpop.f32.mrf.mxu0
    %v3016 = vadd.f32 %v2670, %v3015
    %v3017 = vpop.f32.mrf.mxu0
    %3018 = vmatprep.mubr.bf16.mxu0 %v2905
    %3019 = vmatmul.mubr.bf16.gmra.mxu0 %v2904
    %v3020 = vpop.f32.mrf.mxu0
    %v3021 = vadd.f32 %v2675, %v3020
    %v3022 = vpop.f32.mrf.mxu0
    %v3023 = vpop.f32.mrf.mxu0
    %v3024 = vadd.f32 %v2680, %v3023
    %v3025 = vpop.f32.mrf.mxu0
    %3026 = vmatprep.mubr.bf16.mxu0 %v2907
    %3027 = vmatmul.mubr.bf16.gmra.mxu0 %v2906
    %v3028 = vpop.f32.mrf.mxu0
    %v3029 = vadd.f32 %v2685, %v3028
    %v3030 = vpop.f32.mrf.mxu0
    %v3031 = vpop.f32.mrf.mxu0
    %v3032 = vadd.f32 %v2690, %v3031
    %v3033 = vpop.f32.mrf.mxu0
    %3034 = vmatprep.mubr.bf16.mxu0 %v2909
    %3035 = vmatmul.mubr.bf16.gmra.mxu0 %v2908
    %v3036 = vpop.f32.mrf.mxu0
    %v3037 = vadd.f32 %v2695, %v3036
    %v3038 = vpop.f32.mrf.mxu0
    %v3039 = vpop.f32.mrf.mxu0
    %v3040 = vadd.f32 %v2700, %v3039
    %v3041 = vpop.f32.mrf.mxu0
    %3042 = vmatprep.mubr.bf16.mxu0 %v2911
    %3043 = vmatmul.mubr.bf16.gmra.mxu0 %v2910
    %v3044 = vpop.f32.mrf.mxu0
    %v3045 = vadd.f32 %v2705, %v3044
    %v3046 = vpop.f32.mrf.mxu0
    %v3047 = vpop.f32.mrf.mxu0
    %v3048 = vadd.f32 %v2710, %v3047
    %v3049 = vpop.f32.mrf.mxu0
    %3050 = vmatprep.mubr.bf16.mxu0 %v2913
    %3051 = vmatmul.mubr.bf16.gmra.mxu0 %v2912
    %v3052 = vpop.f32.mrf.mxu0
    %v3053 = vadd.f32 %v2715, %v3052
    %v3054 = vpop.f32.mrf.mxu0
    %v3055 = vpop.f32.mrf.mxu0
    %v3056 = vadd.f32 %v2720, %v3055
    %v3057 = vpop.f32.mrf.mxu0
    %3058 = vmatprep.mubr.bf16.mxu0 %v2915
    %3059 = vmatmul.mubr.bf16.gmra.mxu0 %v2914
    %v3060 = vpop.f32.mrf.mxu0
    %v3061 = vadd.f32 %v2725, %v3060
    %v3062 = vpop.f32.mrf.mxu0
    %v3063 = vpop.f32.mrf.mxu0
    %v3064 = vadd.f32 %v2730, %v3063
    %v3065 = vpop.f32.mrf.mxu0
    %3066 = vmatprep.mubr.bf16.mxu0 %v2917
    %3067 = vmatmul.mubr.bf16.gmra.mxu0 %v2916
    %v3068 = vpop.f32.mrf.mxu0
    %v3069 = vadd.f32 %v2735, %v3068
    %v3070 = vpop.f32.mrf.mxu0
    %v3071 = vpop.f32.mrf.mxu0
    %v3072 = vadd.f32 %v2740, %v3071
    %v3073 = vpop.f32.mrf.mxu0
    %3074 = vmatprep.mubr.bf16.mxu0 %v2919
    %3075 = vmatmul.mubr.bf16.gmra.mxu0 %v2918
    %v3076 = vpop.f32.mrf.mxu0
    %v3077 = vadd.f32 %v2745, %v3076
    %v3078 = vpop.f32.mrf.mxu0
    %v3079 = vpop.f32.mrf.mxu0
    %v3080 = vadd.f32 %v2750, %v3079
    %v3081 = vpop.f32.mrf.mxu0
    %3082 = vmatprep.mubr.bf16.mxu0 %v2921
    %3083 = vmatmul.mubr.bf16.gmra.mxu0 %v2920
    %v3084 = vpop.f32.mrf.mxu0
    %v3085 = vadd.f32 %v2755, %v3084
    %v3086 = vpop.f32.mrf.mxu0
    %v3087 = vpop.f32.mrf.mxu0
    %v3088 = vadd.f32 %v2760, %v3087
    %v3089 = vpop.f32.mrf.mxu0
    %3090 = vmatprep.mubr.bf16.mxu0 %v2923
    %3091 = vmatmul.mubr.bf16.gmra.mxu0 %v2922
    %v3092 = vpop.f32.mrf.mxu0
    %v3093 = vadd.f32 %v2765, %v3092
    %v3094 = vpop.f32.mrf.mxu0
    %v3095 = vpop.f32.mrf.mxu0
    %v3096 = vadd.f32 %v2770, %v3095
    %v3097 = vpop.f32.mrf.mxu0
    %3098 = vmatprep.mubr.bf16.mxu0 %v2925
    %3099 = vmatmul.mubr.bf16.gmra.mxu0 %v2924
    %v3100 = vpop.f32.mrf.mxu0
    %v3101 = vadd.f32 %v2775, %v3100
    %v3102 = vpop.f32.mrf.mxu0
    %v3103 = vpop.f32.mrf.mxu0
    %v3104 = vadd.f32 %v2780, %v3103
    %v3105 = vpop.f32.mrf.mxu0
    %3106 = vmatprep.mubr.bf16.mxu0 %v2927
    %3107 = vmatmul.mubr.bf16.gmra.mxu0 %v2926
    %v3108 = vpop.f32.mrf.mxu0
    %v3109 = vadd.f32 %v2785, %v3108
    %v3110 = vpop.f32.mrf.mxu0
    %v3111 = vpop.f32.mrf.mxu0
    %v3112 = vadd.f32 %v2790, %v3111
    %v3113 = vpop.f32.mrf.mxu0
    %3114 = vmatprep.mubr.bf16.mxu0 %v2929
    %3115 = vmatmul.mubr.bf16.gmra.mxu0 %v2928
    %v3116 = vpop.f32.mrf.mxu0
    %v3117 = vadd.f32 %v2795, %v3116
    %v3118 = vpop.f32.mrf.mxu0
    %v3119 = vpop.f32.mrf.mxu0
    %v3120 = vadd.f32 %v2800, %v3119
    %v3121 = vpop.f32.mrf.mxu0
    %3122 = vdwg.mxu0
    %v3123 = vmax.f32 %v2997, 0.0
    %v3124 = vmax.f32 %v3000, 0.0
    %v3125 = vmax.f32 %v3005, 0.0
    %v3126 = vmax.f32 %v3008, 0.0
    %v3127 = vmax.f32 %v3013, 0.0
    %v3128 = vmax.f32 %v3016, 0.0
    %v3129 = vmax.f32 %v3021, 0.0
    %v3130 = vmax.f32 %v3024, 0.0
    %v3131 = vmax.f32 %v3029, 0.0
    %v3132 = vmax.f32 %v3032, 0.0
    %v3133 = vmax.f32 %v3037, 0.0
    %v3134 = vmax.f32 %v3040, 0.0
    %v3135 = vmax.f32 %v3045, 0.0
    %v3136 = vmax.f32 %v3048, 0.0
    %v3137 = vmax.f32 %v3053, 0.0
    %v3138 = vmax.f32 %v3056, 0.0
    %v3139 = vmax.f32 %v3061, 0.0
    %v3140 = vmax.f32 %v3064, 0.0
    %v3141 = vmax.f32 %v3069, 0.0
    %v3142 = vmax.f32 %v3072, 0.0
    %v3143 = vmax.f32 %v3077, 0.0
    %v3144 = vmax.f32 %v3080, 0.0
    %v3145 = vmax.f32 %v3085, 0.0
    %v3146 = vmax.f32 %v3088, 0.0
    %v3147 = vmax.f32 %v3093, 0.0
    %v3148 = vmax.f32 %v3096, 0.0
    %v3149 = vmax.f32 %v3101, 0.0
    %v3150 = vmax.f32 %v3104, 0.0
    %v3151 = vmax.f32 %v3109, 0.0
    %v3152 = vmax.f32 %v3112, 0.0
    %v3153 = vmax.f32 %v3117, 0.0
    %v3154 = vmax.f32 %v3120, 0.0
    %v3155 = vpack.c.bf16 %v3124, %v3123
    %v3156 = vpack.c.bf16 %v3126, %v3125
    %v3157 = vpack.c.bf16 %v3128, %v3127
    %v3158 = vpack.c.bf16 %v3130, %v3129
    %v3159 = vpack.c.bf16 %v3132, %v3131
    %v3160 = vpack.c.bf16 %v3134, %v3133
    %v3161 = vpack.c.bf16 %v3136, %v3135
    %v3162 = vpack.c.bf16 %v3138, %v3137
    %v3163 = vpack.c.bf16 %v3140, %v3139
    %v3164 = vpack.c.bf16 %v3142, %v3141
    %v3165 = vpack.c.bf16 %v3144, %v3143
    %v3166 = vpack.c.bf16 %v3146, %v3145
    %v3167 = vpack.c.bf16 %v3148, %v3147
    %v3168 = vpack.c.bf16 %v3150, %v3149
    %v3169 = vpack.c.bf16 %v3152, %v3151
    %v3170 = vpack.c.bf16 %v3154, %v3153
    %v3171 = vld [vmem:[%s9] sm:$0xff]
    %v3172 = vld [vmem:[%s9 + $0x8] sm:$0xff]
    %v3173 = vld [vmem:[%s9 + $0x10] sm:$0xff]
    %v3174 = vld [vmem:[%s9 + $0x18] sm:$0xff]
    %v3175 = vld [vmem:[%s9 + $0x20] sm:$0xff]
    %v3176 = vld [vmem:[%s9 + $0x28] sm:$0xff]
    %v3177 = vld [vmem:[%s9 + $0x30] sm:$0xff]
    %v3178 = vld [vmem:[%s9 + $0x38] sm:$0xff]
    %v3179 = vld [vmem:[%s9 + $0x40] sm:$0xff]
    %v3180 = vld [vmem:[%s9 + $0x48] sm:$0xff]
    %v3181 = vld [vmem:[%s9 + $0x50] sm:$0xff]
    %v3182 = vld [vmem:[%s9 + $0x58] sm:$0xff]
    %v3183 = vld [vmem:[%s9 + $0x60] sm:$0xff]
    %v3184 = vld [vmem:[%s9 + $0x68] sm:$0xff]
    %v3185 = vld [vmem:[%s9 + $0x70] sm:$0xff]
    %v3186 = vld [vmem:[%s9 + $0x78] sm:$0xff]
    %v3187 = vld [vmem:[%s10] sm:$0xff]
    %v3188 = vld [vmem:[%s10 + $0x8] sm:$0xff]
    %v3189 = vld [vmem:[%s10 + $0x10] sm:$0xff]
    %v3190 = vld [vmem:[%s10 + $0x18] sm:$0xff]
    %v3191 = vld [vmem:[%s10 + $0x20] sm:$0xff]
    %v3192 = vld [vmem:[%s10 + $0x28] sm:$0xff]
    %v3193 = vld [vmem:[%s10 + $0x30] sm:$0xff]
    %v3194 = vld [vmem:[%s10 + $0x38] sm:$0xff]
    %v3195 = vld [vmem:[%s10 + $0x40] sm:$0xff]
    %v3196 = vld [vmem:[%s10 + $0x48] sm:$0xff]
    %v3197 = vld [vmem:[%s10 + $0x50] sm:$0xff]
    %v3198 = vld [vmem:[%s10 + $0x58] sm:$0xff]
    %v3199 = vld [vmem:[%s10 + $0x60] sm:$0xff]
    %v3200 = vld [vmem:[%s10 + $0x68] sm:$0xff]
    %v3201 = vld [vmem:[%s10 + $0x70] sm:$0xff]
    %v3202 = vld [vmem:[%s10 + $0x78] sm:$0xff]
    %3204 = vset.pattern.permute.xlu0 0
    %3205 = vperm.xlu0 %3204, %v3187
    %v3206 = vpop.permute.xlu0 %3205
    %3209 = vset.pattern.permute.xlu0 0
    %3210 = vperm.xlu0 %3209, %v3188
    %v3211 = vpop.permute.xlu0 %3210
    %3214 = vset.pattern.permute.xlu0 0
    %3215 = vperm.xlu0 %3214, %v3189
    %v3216 = vpop.permute.xlu0 %3215
    %3219 = vset.pattern.permute.xlu0 0
    %3220 = vperm.xlu0 %3219, %v3190
    %v3221 = vpop.permute.xlu0 %3220
    %3224 = vset.pattern.permute.xlu0 0
    %3225 = vperm.xlu0 %3224, %v3191
    %v3226 = vpop.permute.xlu0 %3225
    %3229 = vset.pattern.permute.xlu0 0
    %3230 = vperm.xlu0 %3229, %v3192
    %v3231 = vpop.permute.xlu0 %3230
    %3234 = vset.pattern.permute.xlu0 0
    %3235 = vperm.xlu0 %3234, %v3193
    %v3236 = vpop.permute.xlu0 %3235
    %3239 = vset.pattern.permute.xlu0 0
    %3240 = vperm.xlu0 %3239, %v3194
    %v3241 = vpop.permute.xlu0 %3240
    %3244 = vset.pattern.permute.xlu0 0
    %3245 = vperm.xlu0 %3244, %v3195
    %v3246 = vpop.permute.xlu0 %3245
    %3249 = vset.pattern.permute.xlu0 0
    %3250 = vperm.xlu0 %3249, %v3196
    %v3251 = vpop.permute.xlu0 %3250
    %3254 = vset.pattern.permute.xlu0 0
    %3255 = vperm.xlu0 %3254, %v3197
    %v3256 = vpop.permute.xlu0 %3255
    %3259 = vset.pattern.permute.xlu0 0
    %3260 = vperm.xlu0 %3259, %v3198
    %v3261 = vpop.permute.xlu0 %3260
    %3264 = vset.pattern.permute.xlu0 0
    %3265 = vperm.xlu0 %3264, %v3199
    %v3266 = vpop.permute.xlu0 %3265
    %3269 = vset.pattern.permute.xlu0 0
    %3270 = vperm.xlu0 %3269, %v3200
    %v3271 = vpop.permute.xlu0 %3270
    %3274 = vset.pattern.permute.xlu0 0
    %3275 = vperm.xlu0 %3274, %v3201
    %v3276 = vpop.permute.xlu0 %3275
    %3279 = vset.pattern.permute.xlu0 0
    %3280 = vperm.xlu0 %3279, %v3202
    %v3281 = vpop.permute.xlu0 %3280
    %v3299 = vunpack.c.l.b16 %v3171
    %v3300 = vunpack.c.h.b16 %v3171
    %v3301 = vunpack.c.l.b16 %v3172
    %v3302 = vunpack.c.h.b16 %v3172
    %v3303 = vunpack.c.l.b16 %v3173
    %v3304 = vunpack.c.h.b16 %v3173
    %v3305 = vunpack.c.l.b16 %v3174
    %v3306 = vunpack.c.h.b16 %v3174
    %v3307 = vunpack.c.l.b16 %v3175
    %v3308 = vunpack.c.h.b16 %v3175
    %v3309 = vunpack.c.l.b16 %v3176
    %v3310 = vunpack.c.h.b16 %v3176
    %v3311 = vunpack.c.l.b16 %v3177
    %v3312 = vunpack.c.h.b16 %v3177
    %v3313 = vunpack.c.l.b16 %v3178
    %v3314 = vunpack.c.h.b16 %v3178
    %v3315 = vunpack.c.l.b16 %v3179
    %v3316 = vunpack.c.h.b16 %v3179
    %v3317 = vunpack.c.l.b16 %v3180
    %v3318 = vunpack.c.h.b16 %v3180
    %v3319 = vunpack.c.l.b16 %v3181
    %v3320 = vunpack.c.h.b16 %v3181
    %v3321 = vunpack.c.l.b16 %v3182
    %v3322 = vunpack.c.h.b16 %v3182
    %v3323 = vunpack.c.l.b16 %v3183
    %v3324 = vunpack.c.h.b16 %v3183
    %v3325 = vunpack.c.l.b16 %v3184
    %v3326 = vunpack.c.h.b16 %v3184
    %v3327 = vunpack.c.l.b16 %v3185
    %v3328 = vunpack.c.h.b16 %v3185
    %v3329 = vunpack.c.l.b16 %v3186
    %v3330 = vunpack.c.h.b16 %v3186
    %v3331 = vpack.c.b16 %v3301, %v3299
    %v3332 = vpack.c.b16 %v3302, %v3300
    %v3333 = vpack.c.b16 %v3305, %v3303
    %v3334 = vpack.c.b16 %v3306, %v3304
    %v3335 = vpack.c.b16 %v3309, %v3307
    %v3336 = vpack.c.b16 %v3310, %v3308
    %v3337 = vpack.c.b16 %v3313, %v3311
    %v3338 = vpack.c.b16 %v3314, %v3312
    %v3339 = vpack.c.b16 %v3317, %v3315
    %v3340 = vpack.c.b16 %v3318, %v3316
    %v3341 = vpack.c.b16 %v3321, %v3319
    %v3342 = vpack.c.b16 %v3322, %v3320
    %v3343 = vpack.c.b16 %v3325, %v3323
    %v3344 = vpack.c.b16 %v3326, %v3324
    %v3345 = vpack.c.b16 %v3329, %v3327
    %v3346 = vpack.c.b16 %v3330, %v3328
    %3363 = vmatprep.subr.bf16.mxu0 0
    %3364 = vmatpush1.bf16.msra.mxu0 %v3162
    %3365 = vmatprep.subr.bf16.mxu0 0
    %3366 = vmatpush1.bf16.msra.mxu0 %v3161
    %3367 = vmatprep.subr.bf16.mxu0 0
    %3368 = vmatpush1.bf16.msra.mxu0 %v3160
    %3369 = vmatprep.subr.bf16.mxu0 0
    %3370 = vmatpush1.bf16.msra.mxu0 %v3159
    %3371 = vmatprep.subr.bf16.mxu0 0
    %3372 = vmatpush1.bf16.msra.mxu0 %v3158
    %3373 = vmatprep.subr.bf16.mxu0 0
    %3374 = vmatpush1.bf16.msra.mxu0 %v3157
    %3375 = vmatprep.subr.bf16.mxu0 0
    %3376 = vmatpush1.bf16.msra.mxu0 %v3156
    %3377 = vmatprep.subr.bf16.mxu0 0
    %3378 = vmatpush1.bf16.msra.mxu0 %v3155
    %3379 = vmatprep.subr.bf16.mxu0 0
    %3380 = vmatpush2.bf16.msra.mxu0 %v3170
    %3381 = vmatprep.subr.bf16.mxu0 0
    %3382 = vmatpush2.bf16.msra.mxu0 %v3169
    %3383 = vmatprep.subr.bf16.mxu0 0
    %3384 = vmatpush2.bf16.msra.mxu0 %v3168
    %3385 = vmatprep.subr.bf16.mxu0 0
    %3386 = vmatpush2.bf16.msra.mxu0 %v3167
    %3387 = vmatprep.subr.bf16.mxu0 0
    %3388 = vmatpush2.bf16.msra.mxu0 %v3166
    %3389 = vmatprep.subr.bf16.mxu0 0
    %3390 = vmatpush2.bf16.msra.mxu0 %v3165
    %3391 = vmatprep.subr.bf16.mxu0 0
    %3392 = vmatpush2.bf16.msra.mxu0 %v3164
    %3393 = vmatprep.subr.bf16.mxu0 0
    %3394 = vmatpush2.bf16.msra.mxu0 %v3163
    %3395 = vmatprep.mubr.bf16.mxu0 %v3332
    %3396 = vmatmul.mubr.bf16.gmra.mxu0 %v3331
    %v3397 = vpop.f32.mrf.mxu0
    %v3398 = vadd.f32 %v3206, %v3397
    %v3399 = vpop.f32.mrf.mxu0
    %v3400 = vpop.f32.mrf.mxu0
    %v3401 = vadd.f32 %v3211, %v3400
    %v3402 = vpop.f32.mrf.mxu0
    %3403 = vmatprep.mubr.bf16.mxu0 %v3334
    %3404 = vmatmul.mubr.bf16.gmra.mxu0 %v3333
    %v3405 = vpop.f32.mrf.mxu0
    %v3406 = vadd.f32 %v3216, %v3405
    %v3407 = vpop.f32.mrf.mxu0
    %v3408 = vpop.f32.mrf.mxu0
    %v3409 = vadd.f32 %v3221, %v3408
    %v3410 = vpop.f32.mrf.mxu0
    %3411 = vmatprep.mubr.bf16.mxu0 %v3336
    %3412 = vmatmul.mubr.bf16.gmra.mxu0 %v3335
    %v3413 = vpop.f32.mrf.mxu0
    %v3414 = vadd.f32 %v3226, %v3413
    %v3415 = vpop.f32.mrf.mxu0
    %v3416 = vpop.f32.mrf.mxu0
    %v3417 = vadd.f32 %v3231, %v3416
    %v3418 = vpop.f32.mrf.mxu0
    %3419 = vmatprep.mubr.bf16.mxu0 %v3338
    %3420 = vmatmul.mubr.bf16.gmra.mxu0 %v3337
    %v3421 = vpop.f32.mrf.mxu0
    %v3422 = vadd.f32 %v3236, %v3421
    %v3423 = vpop.f32.mrf.mxu0
    %v3424 = vpop.f32.mrf.mxu0
    %v3425 = vadd.f32 %v3241, %v3424
    %v3426 = vpop.f32.mrf.mxu0
    %3427 = vmatprep.mubr.bf16.mxu0 %v3340
    %3428 = vmatmul.mubr.bf16.gmra.mxu0 %v3339
    %v3429 = vpop.f32.mrf.mxu0
    %v3430 = vadd.f32 %v3246, %v3429
    %v3431 = vpop.f32.mrf.mxu0
    %v3432 = vpop.f32.mrf.mxu0
    %v3433 = vadd.f32 %v3251, %v3432
    %v3434 = vpop.f32.mrf.mxu0
    %3435 = vmatprep.mubr.bf16.mxu0 %v3342
    %3436 = vmatmul.mubr.bf16.gmra.mxu0 %v3341
    %v3437 = vpop.f32.mrf.mxu0
    %v3438 = vadd.f32 %v3256, %v3437
    %v3439 = vpop.f32.mrf.mxu0
    %v3440 = vpop.f32.mrf.mxu0
    %v3441 = vadd.f32 %v3261, %v3440
    %v3442 = vpop.f32.mrf.mxu0
    %3443 = vmatprep.mubr.bf16.mxu0 %v3344
    %3444 = vmatmul.mubr.bf16.gmra.mxu0 %v3343
    %v3445 = vpop.f32.mrf.mxu0
    %v3446 = vadd.f32 %v3266, %v3445
    %v3447 = vpop.f32.mrf.mxu0
    %v3448 = vpop.f32.mrf.mxu0
    %v3449 = vadd.f32 %v3271, %v3448
    %v3450 = vpop.f32.mrf.mxu0
    %3451 = vmatprep.mubr.bf16.mxu0 %v3346
    %3452 = vmatmul.mubr.bf16.gmra.mxu0 %v3345
    %v3453 = vpop.f32.mrf.mxu0
    %v3454 = vadd.f32 %v3276, %v3453
    %v3455 = vpop.f32.mrf.mxu0
    %v3456 = vpop.f32.mrf.mxu0
    %v3457 = vadd.f32 %v3281, %v3456
    %v3458 = vpop.f32.mrf.mxu0
    %3459 = vdwg.mxu0
    %v3460 = vmax.f32 %v3398, 0.0
    %v3461 = vmax.f32 %v3401, 0.0
    %v3462 = vmax.f32 %v3406, 0.0
    %v3463 = vmax.f32 %v3409, 0.0
    %v3464 = vmax.f32 %v3414, 0.0
    %v3465 = vmax.f32 %v3417, 0.0
    %v3466 = vmax.f32 %v3422, 0.0
    %v3467 = vmax.f32 %v3425, 0.0
    %v3468 = vmax.f32 %v3430, 0.0
    %v3469 = vmax.f32 %v3433, 0.0
    %v3470 = vmax.f32 %v3438, 0.0
    %v3471 = vmax.f32 %v3441, 0.0
    %v3472 = vmax.f32 %v3446, 0.0
    %v3473 = vmax.f32 %v3449, 0.0
    %v3474 = vmax.f32 %v3454, 0.0
    %v3475 = vmax.f32 %v3457, 0.0
    %v3476 = vpack.c.bf16 %v3461, %v3460
    %v3477 = vpack.c.bf16 %v3463, %v3462
    %v3478 = vpack.c.bf16 %v3465, %v3464
    %v3479 = vpack.c.bf16 %v3467, %v3466
    %v3480 = vpack.c.bf16 %v3469, %v3468
    %v3481 = vpack.c.bf16 %v3471, %v3470
    %v3482 = vpack.c.bf16 %v3473, %v3472
    %v3483 = vpack.c.bf16 %v3475, %v3474
    %v3484 = vld [vmem:[%s11] sm:$0x1]
    %v3485 = vld [vmem:[%s12] sm:$0x3]
    %3487 = vset.pattern.permute.xlu0 0
    %3488 = vperm.xlu0 %3487, %v3485
    %v3489 = vpop.permute.xlu0 %3488
    %3491 = vmatprep.subr.bf16.mxu0 0
    %3492 = vmatpush1.bf16.msra.mxu0 %v3483
    %3493 = vmatprep.subr.bf16.mxu0 0
    %3494 = vmatpush1.bf16.msra.mxu0 %v3482
    %3495 = vmatprep.subr.bf16.mxu0 0
    %3496 = vmatpush1.bf16.msra.mxu0 %v3481
    %3497 = vmatprep.subr.bf16.mxu0 0
    %3498 = vmatpush1.bf16.msra.mxu0 %v3480
    %3499 = vmatprep.subr.bf16.mxu0 0
    %3500 = vmatpush1.bf16.msra.mxu0 %v3479
    %3501 = vmatprep.subr.bf16.mxu0 0
    %3502 = vmatpush1.bf16.msra.mxu0 %v3478
    %3503 = vmatprep.subr.bf16.mxu0 0
    %3504 = vmatpush1.bf16.msra.mxu0 %v3477
    %3505 = vmatprep.subr.bf16.mxu0 0
    %3506 = vmatpush1.bf16.msra.mxu0 %v3476
    %3507 = vmatprep.subr.bf16.mxu0 0
    %3508 = vmatpush2.bf16.msra.mxu0 0
    %3509 = vmatprep.subr.bf16.mxu0 0
    %3510 = vmatpush2.bf16.msra.mxu0 0
    %3511 = vmatprep.subr.bf16.mxu0 0
    %3512 = vmatpush2.bf16.msra.mxu0 0
    %3513 = vmatprep.subr.bf16.mxu0 0
    %3514 = vmatpush2.bf16.msra.mxu0 0
    %3515 = vmatprep.subr.bf16.mxu0 0
    %3516 = vmatpush2.bf16.msra.mxu0 0
    %3517 = vmatprep.subr.bf16.mxu0 0
    %3518 = vmatpush2.bf16.msra.mxu0 0
    %3519 = vmatprep.subr.bf16.mxu0 0
    %3520 = vmatpush2.bf16.msra.mxu0 0
    %3521 = vmatprep.subr.bf16.mxu0 0
    %3522 = vmatpush2.bf16.msra.mxu0 0
    %3523 = vmatprep.mubr.bf16.mxu0 0
    %3524 = vmatmul.mubr.bf16.gmra.mxu0 %v3484
    %v3525 = vpop.f32.mrf.mxu0
    %v3526 = vadd.f32 %v3489, %v3525
    %v3527 = vpop.f32.mrf.mxu0
    %v3528 = vpop.f32.mrf.mxu0
    %v3529 = vpop.f32.mrf.mxu0
    %3530 = vdwg.mxu0
    %vm3531 = vcmask 9216
    %3532 = vst.msk [vmem:[#allocation2] sm:$0x3] %vm3531, %v3526
    // Predicated region
    $region54: #{tpu_custom_call.1} parent=1 // pred_check
      _
    $region55: #{tpu_custom_call.1} parent=1 // pred_check_branch
      %3534 = sbr.rel (0) target = $region57
    $region56: #{tpu_custom_call.1} parent=1 // pred_region
      %s3536 = ssub.s32 32, 32
      %3537 = vsyncadd [#allocation3], %s3536
      %s3539 = sshll.u32 [#allocation2], 4
      %s3540 = int_to_ptr.vmem [resolvable:$true] %s3539
      %3542 = dma.vmem_to_hbm [thread:$0]  %s3540, 32, %s13, [#allocation3]
    $region57: #{tpu_custom_call.1} parent=1 // pred_fallthru
      _
    // Predicated region
    $region58: #{tpu_custom_call.1} parent=1 // pred_check
      _
    $region59: #{tpu_custom_call.1} parent=1 // pred_check_branch
      %3544 = sbr.rel (0) target = $region61
    $region60: #{tpu_custom_call.1} parent=1 // pred_region
      %3545 = dma.done [#allocation3], 32
    $region61: #{tpu_custom_call.1} parent=1 // pred_fallthru
      _
    %3546 = vsyncpa [#allocation3], 1

</llo_original>
